<compile_context>
chip_gen: v6e
topology: v6e:2x2x1
jax: 0.10.0
libtpu: 0.0.40
codegen_flags: <defaults>
</compile_context>

<pallas_src>
import functools

import jax
import jax.numpy as jnp
import numpy as np
from jax import lax
from jax.experimental import pallas as pl
from jax.experimental.pallas import tpu as pltpu


def _round_up(x, m):
    return (x + m - 1) // m * m


# ---------------------------------------------------------------------------
# Fused kernel: per-chunk input projection + serial recurrence + final readout
#   x_ref    : (Tc, Bt, Hin_p) bf16  embedded inputs for this time chunk
#   wih_ref  : (Hin_p, H_p)    bf16  input->hidden weight (resident)
#   b_ref    : (1, H_p)        f32   recurrent bias (b_ih + b_hh)
#   whh_ref  : (H_p, H_p)      bf16  hidden->hidden weight (resident)
#   wout_ref : (H_p, O_p)      bf16  output weight (resident)
#   bout_ref : (1, O_p)        f32   output bias
#   out_ref  : (Bt, O_p)       f32   logits (written on the last time chunk)
#   h_ref    : (Bt, H_p)       f32   VMEM scratch carrying h across chunks
#   xp_ref   : (Tc, Bt, H_p)   f32   VMEM scratch: pre-projected chunk inputs
# ---------------------------------------------------------------------------
def rnn_fused_kernel(x_ref, wih_ref, b_ref, whh_ref, wout_ref, bout_ref,
                     out_ref, h_ref, xp_ref, *, seq_len, time_chunk, unroll):
    tc = pl.program_id(1)

    @pl.when(tc == 0)
    def _():
        h_ref[...] = jnp.zeros_like(h_ref)

    Tc, Bt, Hin = x_ref.shape
    H = whh_ref.shape[1]

    # Time-parallel projection of the whole chunk: one large MXU matmul,
    # off the serial critical path, stored to VMEM scratch.
    x2 = x_ref[...].reshape(Tc * Bt, Hin)
    xp = jnp.dot(x2, wih_ref[...],
                 preferred_element_type=jnp.float32) + b_ref[...]
    xp_ref[...] = xp.reshape(Tc, Bt, H)

    # Serial recurrence over the chunk.  Only h @ W_hh stays on the serial
    # MXU path.  The last chunk may be partially valid when seq_len is not a
    # multiple of the chunk size: masked steps keep h unchanged.
    needs_mask = (seq_len % time_chunk) != 0
    valid = jnp.minimum(time_chunk, seq_len - tc * time_chunk)

    def step(t, h):
        pre = xp_ref[t] + jnp.dot(h.astype(whh_ref.dtype), whh_ref[...],
                                  preferred_element_type=jnp.float32)
        h_new = jnp.tanh(pre)
        if needs_mask:
            h_new = jnp.where(t < valid, h_new, h)
        return h_new

    h = lax.fori_loop(0, Tc, step, h_ref[...], unroll=unroll)
    h_ref[...] = h

    @pl.when(tc == pl.num_programs(1) - 1)
    def _():
        logits = jnp.dot(h.astype(wout_ref.dtype), wout_ref[...],
                         preferred_element_type=jnp.float32) + bout_ref[...]
        out_ref[...] = logits.astype(out_ref.dtype)


def model_forward(tokens, emb_table, w_ih, w_hh, b, w_out, b_out,
                  compute_dtype=jnp.bfloat16):
    """Full Model.forward.

    tokens : (batch, seq) int32
    returns: (batch, output_size) float32
    """
    B, S = tokens.shape
    assert S >= 1, "sequence length must be >= 1"
    Hin = emb_table.shape[1]
    H = w_hh.shape[0]
    O = w_out.shape[1]

    # Lane-dense padding: feature dims -> 128 lanes.
    Hin_p = _round_up(Hin, 128)
    H_p = _round_up(H, 128)
    O_p = _round_up(O, 128)

    # Batch tile >= 128 rows so the serial (Bt,H)x(H,H) matmul fills MXU rows;
    # 256 once batch is large enough that we still get >=2 blocks (keeps both
    # v7x TensorCores busy via the "parallel" batch axis).
    Bt = 256 if B >= 512 else 128
    B_p = _round_up(B, Bt)

    # Time chunk bounded by an explicit VMEM budget (remainder-safe: no
    # whole-array fallback).  Budget items:
    #   x chunk, double-buffered bf16 : 2 * Tc*Bt*Hin_p*2
    #   xp scratch (f32, 1 buffer)    : Tc*Bt*H_p*4
    #   resident weights (x2 buffers) + biases + h scratch + out (x2)
    bytes_weights = (2 * (Hin_p * H_p + H_p * H_p + H_p * O_p) * 2
                     + 2 * (H_p + O_p) * 4)
    bytes_fixed = bytes_weights + Bt * H_p * 4 + 2 * Bt * O_p * 4
    per_tc = 2 * Bt * Hin_p * 2 + Bt * H_p * 4
    VMEM_BUDGET = 28 * 1024 * 1024
    Tc = int(max(1, min(S, 128, (VMEM_BUDGET - bytes_fixed) // per_tc)))
    S_p = _round_up(S, Tc)

    # input.t() + embedding lookup (gather) in XLA, cast to bf16 before pad.
    # TODO(synk): fuse the gather into the kernel via scalar-prefetched token
    # ids + a pl.Element row BlockSpec to avoid materializing (S,B,Hin) in HBM.
    x = emb_table[tokens.T].astype(compute_dtype)            # (S, B, Hin)
    if (S_p, B_p, Hin_p) != (S, B, Hin):
        x = jnp.pad(x, ((0, S_p - S), (0, B_p - B), (0, Hin_p - Hin)))

    w_ih_p = jnp.pad(w_ih, ((0, Hin_p - Hin), (0, H_p - H))).astype(compute_dtype)
    w_hh_p = jnp.pad(w_hh, ((0, H_p - H), (0, H_p - H))).astype(compute_dtype)
    w_out_p = jnp.pad(w_out, ((0, H_p - H), (0, O_p - O))).astype(compute_dtype)
    b_p = jnp.pad(b, ((0, 0), (0, H_p - H))).astype(jnp.float32)
    b_out_p = jnp.pad(b_out, ((0, 0), (0, O_p - O))).astype(jnp.float32)

    kernel = functools.partial(rnn_fused_kernel, seq_len=S, time_chunk=Tc,
                               unroll=int(min(Tc, 8)))

    vmem_bytes = bytes_fixed + Tc * per_tc
    vmem_limit = int(min(48 * 1024 * 1024,
                         max(16 * 1024 * 1024, 2 * vmem_bytes)))

    out_p = pl.pallas_call(
        kernel,
        out_shape=jax.ShapeDtypeStruct((B_p, O_p), jnp.float32),
        grid_spec=pltpu.PrefetchScalarGridSpec(
            num_scalar_prefetch=0,
            grid=(B_p // Bt, S_p // Tc),
            in_specs=[
                pl.BlockSpec((Tc, Bt, Hin_p), lambda bi, tc: (tc, bi, 0)),
                pl.BlockSpec((Hin_p, H_p), lambda bi, tc: (0, 0)),
                pl.BlockSpec((1, H_p), lambda bi, tc: (0, 0)),
                pl.BlockSpec((H_p, H_p), lambda bi, tc: (0, 0)),
                pl.BlockSpec((H_p, O_p), lambda bi, tc: (0, 0)),
                pl.BlockSpec((1, O_p), lambda bi, tc: (0, 0)),
            ],
            out_specs=pl.BlockSpec((Bt, O_p), lambda bi, tc: (bi, 0)),
            scratch_shapes=[
                pltpu.VMEM((Bt, H_p), jnp.float32),        # h carry
                pltpu.VMEM((Tc, Bt, H_p), jnp.float32),    # per-chunk xp
            ],
        ),
        compiler_params=pltpu.CompilerParams(
            dimension_semantics=("parallel", "arbitrary"),
            vmem_limit_bytes=vmem_limit),
    )(x, w_ih_p, b_p, w_hh_p, w_out_p, b_out_p)

    return out_p[:B, :O]


def reference_forward(tokens, emb_table, w_ih, w_hh, b, w_out, b_out,
                      compute_dtype=jnp.bfloat16):
    """Pure-JAX reference mirroring the kernel math (bf16 matmuls, f32 accum)."""
    x = emb_table[tokens.T].astype(compute_dtype)            # (S, B, Hin)
    wih = w_ih.astype(compute_dtype)
    whh = w_hh.astype(compute_dtype)
    wout = w_out.astype(compute_dtype)

    xp = jnp.einsum("sbi,ih->sbh", x, wih,
                    preferred_element_type=jnp.float32) + b  # (S, B, H)

    def step(h, xpt):
        h = jnp.tanh(xpt + jnp.dot(h.astype(compute_dtype), whh,
                                   preferred_element_type=jnp.float32))
        return h, None

    h0 = jnp.zeros((tokens.shape[0], w_hh.shape[0]), jnp.float32)
    hT, _ = lax.scan(step, h0, xp)
    return jnp.dot(hT.astype(compute_dtype), wout,
                   preferred_element_type=jnp.float32) + b_out


if __name__ == "__main__":
    # Small, deterministic configuration.
    vocab_size = 64          # input_size (num_embeddings)
    seq_len = 8
    batch = 4
    first_layer_size = 32    # embedding dim / RNN input size
    last_layer_size = 32     # RNN hidden size
    output_size = 16

    key = jax.random.PRNGKey(0)
    k_tok, k_emb, k_ih, k_hh, k_b, k_out, k_bout = jax.random.split(key, 7)

    tokens = jax.random.randint(k_tok, (batch, seq_len), 0, vocab_size,
                                dtype=jnp.int32)

    emb_table = jax.random.normal(k_emb, (vocab_size, first_layer_size),
                                  jnp.float32) * 0.1
    w_ih = jax.random.normal(k_ih, (first_layer_size, last_layer_size),
                             jnp.float32) * 0.1
    w_hh = jax.random.normal(k_hh, (last_layer_size, last_layer_size),
                             jnp.float32) * 0.1
    b = jax.random.normal(k_b, (1, last_layer_size), jnp.float32) * 0.1
    w_out = jax.random.normal(k_out, (last_layer_size, output_size),
                              jnp.float32) * 0.1
    b_out = jax.random.normal(k_bout, (1, output_size), jnp.float32) * 0.1

    out = model_forward(tokens, emb_table, w_ih, w_hh, b, w_out, b_out)
    out = jax.block_until_ready(out)

    ref = reference_forward(tokens, emb_table, w_ih, w_hh, b, w_out, b_out)
    np.testing.assert_allclose(np.asarray(out), np.asarray(ref),
                               rtol=1e-3, atol=1e-3)
    print("KERNEL_OK")
</pallas_src>

<mosaic_0001>
module attributes {stable_mosaic.version = 11 : i64} {
  func.func @rnn_fused_kernel(%arg0: i32, %arg1: i32, %arg2: memref<8x128x128xbf16, #tpu.memory_space<vmem>>, %arg3: memref<128x128xbf16, #tpu.memory_space<vmem>>, %arg4: memref<1x128xf32, #tpu.memory_space<vmem>>, %arg5: memref<128x128xbf16, #tpu.memory_space<vmem>>, %arg6: memref<128x128xbf16, #tpu.memory_space<vmem>>, %arg7: memref<1x128xf32, #tpu.memory_space<vmem>>, %arg8: memref<128x128xf32, #tpu.memory_space<vmem>>, %arg9: memref<128x128xf32, #tpu.memory_space<vmem>>, %arg10: memref<8x128x128xf32, #tpu.memory_space<vmem>>) attributes {dimension_semantics = [#tpu.dimension_semantics<parallel>, #tpu.dimension_semantics<arbitrary>], iteration_bounds = array<i64: 1, 1>, scalar_prefetch = 0 : i64, scratch_operands = 2 : i64, tpu.core_type = #tpu.core_type<tc>, window_params = [{transform_indices = @transform_0, window_bounds = array<i64: 8, 128, 128>}, {pipeline_mode = #tpu.pipeline_mode<synchronous>, transform_indices = @transform_1, window_bounds = array<i64: 128, 128>}, {pipeline_mode = #tpu.pipeline_mode<synchronous>, transform_indices = @transform_2, window_bounds = array<i64: 1, 128>}, {pipeline_mode = #tpu.pipeline_mode<synchronous>, transform_indices = @transform_3, window_bounds = array<i64: 128, 128>}, {pipeline_mode = #tpu.pipeline_mode<synchronous>, transform_indices = @transform_4, window_bounds = array<i64: 128, 128>}, {pipeline_mode = #tpu.pipeline_mode<synchronous>, transform_indices = @transform_5, window_bounds = array<i64: 1, 128>}, {transform_indices = @transform_6, window_bounds = array<i64: 128, 128>}]} {
    %c0_i32 = arith.constant 0 : i32
    %0 = arith.cmpi eq, %arg1, %c0_i32 : i32
    %1 = arith.extui %0 : i1 to i32
    %c0_i32_0 = arith.constant 0 : i32
    %2 = arith.cmpi ne, %1, %c0_i32_0 : i32
    scf.if %2 {
      %cst_57 = arith.constant 0.000000e+00 : f32
      %81 = vector.broadcast %cst_57 : f32 to vector<128x128xf32>
      %c0_58 = arith.constant 0 : index
      %c0_59 = arith.constant 0 : index
      %82 = vector.load %arg9[%c0_58, %c0_59] : memref<128x128xf32, #tpu.memory_space<vmem>>, vector<128x128xf32>
      tpu.vector_store %arg9[%c0_58, %c0_59], %81 {strides = array<i32>} : memref<128x128xf32, #tpu.memory_space<vmem>>, vector<128x128xf32>,
    } else {
    }
    %c0 = arith.constant 0 : index
    %c0_1 = arith.constant 0 : index
    %c0_2 = arith.constant 0 : index
    %3 = vector.load %arg2[%c0, %c0_1, %c0_2] : memref<8x128x128xbf16, #tpu.memory_space<vmem>>, vector<8x128x128xbf16>
    %4 = vector.shape_cast %3 : vector<8x128x128xbf16> to vector<1024x128xbf16>
    %c0_3 = arith.constant 0 : index
    %c0_4 = arith.constant 0 : index
    %5 = vector.load %arg3[%c0_3, %c0_4] : memref<128x128xbf16, #tpu.memory_space<vmem>>, vector<128x128xbf16>
    %cst = arith.constant dense<0.000000e+00> : vector<1024x128xf32>
    %6 = tpu.matmul %4, %5, %cst {dimension_numbers = #tpu.dot_dimension_numbers<[1], [0], [0], [1], [0, 0, 1, 1], [], []>} : vector<1024x128xbf16>, vector<128x128xbf16>, vector<1024x128xf32> -> vector<1024x128xf32>
    %c0_5 = arith.constant 0 : index
    %c0_6 = arith.constant 0 : index
    %7 = vector.load %arg4[%c0_5, %c0_6] : memref<1x128xf32, #tpu.memory_space<vmem>>, vector<1x128xf32>
    %8 = vector.broadcast %7 : vector<1x128xf32> to vector<1024x128xf32>
    %9 = arith.addf %6, %8 : vector<1024x128xf32>
    %10 = vector.shape_cast %9 : vector<1024x128xf32> to vector<8x128x128xf32>
    %c0_7 = arith.constant 0 : index
    %c0_8 = arith.constant 0 : index
    %c0_9 = arith.constant 0 : index
    %11 = vector.load %arg10[%c0_7, %c0_8, %c0_9] : memref<8x128x128xf32, #tpu.memory_space<vmem>>, vector<8x128x128xf32>
    tpu.vector_store %arg10[%c0_7, %c0_8, %c0_9], %10 {strides = array<i32>} : memref<8x128x128xf32, #tpu.memory_space<vmem>>, vector<8x128x128xf32>,
    %c0_10 = arith.constant 0 : index
    %c0_11 = arith.constant 0 : index
    %12 = vector.load %arg9[%c0_10, %c0_11] : memref<128x128xf32, #tpu.memory_space<vmem>>, vector<128x128xf32>
    %c0_i32_12 = arith.constant 0 : i32
    %13 = arith.index_cast %c0_i32_12 : i32 to index
    %c0_13 = arith.constant 0 : index
    %c0_14 = arith.constant 0 : index
    %14 = vector.load %arg10[%13, %c0_13, %c0_14] : memref<8x128x128xf32, #tpu.memory_space<vmem>>, vector<1x128x128xf32>
    %15 = vector.shape_cast %14 : vector<1x128x128xf32> to vector<128x128xf32>
    %16 = arith.truncf %12 : vector<128x128xf32> to vector<128x128xbf16>
    %c0_15 = arith.constant 0 : index
    %c0_16 = arith.constant 0 : index
    %17 = vector.load %arg5[%c0_15, %c0_16] : memref<128x128xbf16, #tpu.memory_space<vmem>>, vector<128x128xbf16>
    %cst_17 = arith.constant dense<0.000000e+00> : vector<128x128xf32>
    %18 = tpu.matmul %16, %17, %cst_17 {dimension_numbers = #tpu.dot_dimension_numbers<[1], [0], [0], [1], [0, 0, 1, 1], [], []>} : vector<128x128xbf16>, vector<128x128xbf16>, vector<128x128xf32> -> vector<128x128xf32>
    %19 = arith.addf %15, %18 : vector<128x128xf32>
    %20 = math.tanh %19 : vector<128x128xf32>
    %c1_i32 = arith.constant 1 : i32
    %21 = arith.index_cast %c1_i32 : i32 to index
    %c0_18 = arith.constant 0 : index
    %c0_19 = arith.constant 0 : index
    %22 = vector.load %arg10[%21, %c0_18, %c0_19] : memref<8x128x128xf32, #tpu.memory_space<vmem>>, vector<1x128x128xf32>
    %23 = vector.shape_cast %22 : vector<1x128x128xf32> to vector<128x128xf32>
    %24 = arith.truncf %20 : vector<128x128xf32> to vector<128x128xbf16>
    %c0_20 = arith.constant 0 : index
    %c0_21 = arith.constant 0 : index
    %25 = vector.load %arg5[%c0_20, %c0_21] : memref<128x128xbf16, #tpu.memory_space<vmem>>, vector<128x128xbf16>
    %cst_22 = arith.constant dense<0.000000e+00> : vector<128x128xf32>
    %26 = tpu.matmul %24, %25, %cst_22 {dimension_numbers = #tpu.dot_dimension_numbers<[1], [0], [0], [1], [0, 0, 1, 1], [], []>} : vector<128x128xbf16>, vector<128x128xbf16>, vector<128x128xf32> -> vector<128x128xf32>
    %27 = arith.addf %23, %26 : vector<128x128xf32>
    %28 = math.tanh %27 : vector<128x128xf32>
    %c2_i32 = arith.constant 2 : i32
    %29 = arith.index_cast %c2_i32 : i32 to index
    %c0_23 = arith.constant 0 : index
    %c0_24 = arith.constant 0 : index
    %30 = vector.load %arg10[%29, %c0_23, %c0_24] : memref<8x128x128xf32, #tpu.memory_space<vmem>>, vector<1x128x128xf32>
    %31 = vector.shape_cast %30 : vector<1x128x128xf32> to vector<128x128xf32>
    %32 = arith.truncf %28 : vector<128x128xf32> to vector<128x128xbf16>
    %c0_25 = arith.constant 0 : index
    %c0_26 = arith.constant 0 : index
    %33 = vector.load %arg5[%c0_25, %c0_26] : memref<128x128xbf16, #tpu.memory_space<vmem>>, vector<128x128xbf16>
    %cst_27 = arith.constant dense<0.000000e+00> : vector<128x128xf32>
    %34 = tpu.matmul %32, %33, %cst_27 {dimension_numbers = #tpu.dot_dimension_numbers<[1], [0], [0], [1], [0, 0, 1, 1], [], []>} : vector<128x128xbf16>, vector<128x128xbf16>, vector<128x128xf32> -> vector<128x128xf32>
    %35 = arith.addf %31, %34 : vector<128x128xf32>
    %36 = math.tanh %35 : vector<128x128xf32>
    %c3_i32 = arith.constant 3 : i32
    %37 = arith.index_cast %c3_i32 : i32 to index
    %c0_28 = arith.constant 0 : index
    %c0_29 = arith.constant 0 : index
    %38 = vector.load %arg10[%37, %c0_28, %c0_29] : memref<8x128x128xf32, #tpu.memory_space<vmem>>, vector<1x128x128xf32>
    %39 = vector.shape_cast %38 : vector<1x128x128xf32> to vector<128x128xf32>
    %40 = arith.truncf %36 : vector<128x128xf32> to vector<128x128xbf16>
    %c0_30 = arith.constant 0 : index
    %c0_31 = arith.constant 0 : index
    %41 = vector.load %arg5[%c0_30, %c0_31] : memref<128x128xbf16, #tpu.memory_space<vmem>>, vector<128x128xbf16>
    %cst_32 = arith.constant dense<0.000000e+00> : vector<128x128xf32>
    %42 = tpu.matmul %40, %41, %cst_32 {dimension_numbers = #tpu.dot_dimension_numbers<[1], [0], [0], [1], [0, 0, 1, 1], [], []>} : vector<128x128xbf16>, vector<128x128xbf16>, vector<128x128xf32> -> vector<128x128xf32>
    %43 = arith.addf %39, %42 : vector<128x128xf32>
    %44 = math.tanh %43 : vector<128x128xf32>
    %c4_i32 = arith.constant 4 : i32
    %45 = arith.index_cast %c4_i32 : i32 to index
    %c0_33 = arith.constant 0 : index
    %c0_34 = arith.constant 0 : index
    %46 = vector.load %arg10[%45, %c0_33, %c0_34] : memref<8x128x128xf32, #tpu.memory_space<vmem>>, vector<1x128x128xf32>
    %47 = vector.shape_cast %46 : vector<1x128x128xf32> to vector<128x128xf32>
    %48 = arith.truncf %44 : vector<128x128xf32> to vector<128x128xbf16>
    %c0_35 = arith.constant 0 : index
    %c0_36 = arith.constant 0 : index
    %49 = vector.load %arg5[%c0_35, %c0_36] : memref<128x128xbf16, #tpu.memory_space<vmem>>, vector<128x128xbf16>
    %cst_37 = arith.constant dense<0.000000e+00> : vector<128x128xf32>
    %50 = tpu.matmul %48, %49, %cst_37 {dimension_numbers = #tpu.dot_dimension_numbers<[1], [0], [0], [1], [0, 0, 1, 1], [], []>} : vector<128x128xbf16>, vector<128x128xbf16>, vector<128x128xf32> -> vector<128x128xf32>
    %51 = arith.addf %47, %50 : vector<128x128xf32>
    %52 = math.tanh %51 : vector<128x128xf32>
    %c5_i32 = arith.constant 5 : i32
    %53 = arith.index_cast %c5_i32 : i32 to index
    %c0_38 = arith.constant 0 : index
    %c0_39 = arith.constant 0 : index
    %54 = vector.load %arg10[%53, %c0_38, %c0_39] : memref<8x128x128xf32, #tpu.memory_space<vmem>>, vector<1x128x128xf32>
    %55 = vector.shape_cast %54 : vector<1x128x128xf32> to vector<128x128xf32>
    %56 = arith.truncf %52 : vector<128x128xf32> to vector<128x128xbf16>
    %c0_40 = arith.constant 0 : index
    %c0_41 = arith.constant 0 : index
    %57 = vector.load %arg5[%c0_40, %c0_41] : memref<128x128xbf16, #tpu.memory_space<vmem>>, vector<128x128xbf16>
    %cst_42 = arith.constant dense<0.000000e+00> : vector<128x128xf32>
    %58 = tpu.matmul %56, %57, %cst_42 {dimension_numbers = #tpu.dot_dimension_numbers<[1], [0], [0], [1], [0, 0, 1, 1], [], []>} : vector<128x128xbf16>, vector<128x128xbf16>, vector<128x128xf32> -> vector<128x128xf32>
    %59 = arith.addf %55, %58 : vector<128x128xf32>
    %60 = math.tanh %59 : vector<128x128xf32>
    %c6_i32 = arith.constant 6 : i32
    %61 = arith.index_cast %c6_i32 : i32 to index
    %c0_43 = arith.constant 0 : index
    %c0_44 = arith.constant 0 : index
    %62 = vector.load %arg10[%61, %c0_43, %c0_44] : memref<8x128x128xf32, #tpu.memory_space<vmem>>, vector<1x128x128xf32>
    %63 = vector.shape_cast %62 : vector<1x128x128xf32> to vector<128x128xf32>
    %64 = arith.truncf %60 : vector<128x128xf32> to vector<128x128xbf16>
    %c0_45 = arith.constant 0 : index
    %c0_46 = arith.constant 0 : index
    %65 = vector.load %arg5[%c0_45, %c0_46] : memref<128x128xbf16, #tpu.memory_space<vmem>>, vector<128x128xbf16>
    %cst_47 = arith.constant dense<0.000000e+00> : vector<128x128xf32>
    %66 = tpu.matmul %64, %65, %cst_47 {dimension_numbers = #tpu.dot_dimension_numbers<[1], [0], [0], [1], [0, 0, 1, 1], [], []>} : vector<128x128xbf16>, vector<128x128xbf16>, vector<128x128xf32> -> vector<128x128xf32>
    %67 = arith.addf %63, %66 : vector<128x128xf32>
    %68 = math.tanh %67 : vector<128x128xf32>
    %c7_i32 = arith.constant 7 : i32
    %69 = arith.index_cast %c7_i32 : i32 to index
    %c0_48 = arith.constant 0 : index
    %c0_49 = arith.constant 0 : index
    %70 = vector.load %arg10[%69, %c0_48, %c0_49] : memref<8x128x128xf32, #tpu.memory_space<vmem>>, vector<1x128x128xf32>
    %71 = vector.shape_cast %70 : vector<1x128x128xf32> to vector<128x128xf32>
    %72 = arith.truncf %68 : vector<128x128xf32> to vector<128x128xbf16>
    %c0_50 = arith.constant 0 : index
    %c0_51 = arith.constant 0 : index
    %73 = vector.load %arg5[%c0_50, %c0_51] : memref<128x128xbf16, #tpu.memory_space<vmem>>, vector<128x128xbf16>
    %cst_52 = arith.constant dense<0.000000e+00> : vector<128x128xf32>
    %74 = tpu.matmul %72, %73, %cst_52 {dimension_numbers = #tpu.dot_dimension_numbers<[1], [0], [0], [1], [0, 0, 1, 1], [], []>} : vector<128x128xbf16>, vector<128x128xbf16>, vector<128x128xf32> -> vector<128x128xf32>
    %75 = arith.addf %71, %74 : vector<128x128xf32>
    %76 = math.tanh %75 : vector<128x128xf32>
    %c8_i32 = arith.constant 8 : i32
    %c0_53 = arith.constant 0 : index
    %c0_54 = arith.constant 0 : index
    %77 = vector.load %arg9[%c0_53, %c0_54] : memref<128x128xf32, #tpu.memory_space<vmem>>, vector<128x128xf32>
    tpu.vector_store %arg9[%c0_53, %c0_54], %76 {strides = array<i32>} : memref<128x128xf32, #tpu.memory_space<vmem>>, vector<128x128xf32>,
    %c0_i32_55 = arith.constant 0 : i32
    %78 = arith.cmpi eq, %arg1, %c0_i32_55 : i32
    %79 = arith.extui %78 : i1 to i32
    %c0_i32_56 = arith.constant 0 : i32
    %80 = arith.cmpi ne, %79, %c0_i32_56 : i32
    scf.if %80 {
      %81 = arith.truncf %76 : vector<128x128xf32> to vector<128x128xbf16>
      %c0_57 = arith.constant 0 : index
      %c0_58 = arith.constant 0 : index
      %82 = vector.load %arg6[%c0_57, %c0_58] : memref<128x128xbf16, #tpu.memory_space<vmem>>, vector<128x128xbf16>
      %cst_59 = arith.constant dense<0.000000e+00> : vector<128x128xf32>
      %83 = tpu.matmul %81, %82, %cst_59 {dimension_numbers = #tpu.dot_dimension_numbers<[1], [0], [0], [1], [0, 0, 1, 1], [], []>} : vector<128x128xbf16>, vector<128x128xbf16>, vector<128x128xf32> -> vector<128x128xf32>
      %c0_60 = arith.constant 0 : index
      %c0_61 = arith.constant 0 : index
      %84 = vector.load %arg7[%c0_60, %c0_61] : memref<1x128xf32, #tpu.memory_space<vmem>>, vector<1x128xf32>
      %85 = vector.broadcast %84 : vector<1x128xf32> to vector<128x128xf32>
      %86 = arith.addf %83, %85 : vector<128x128xf32>
      %c0_62 = arith.constant 0 : index
      %c0_63 = arith.constant 0 : index
      %87 = vector.load %arg8[%c0_62, %c0_63] : memref<128x128xf32, #tpu.memory_space<vmem>>, vector<128x128xf32>
      tpu.vector_store %arg8[%c0_62, %c0_63], %86 {strides = array<i32>} : memref<128x128xf32, #tpu.memory_space<vmem>>, vector<128x128xf32>,
    } else {
    }
    return
  }
  func.func @transform_0(%arg0: i32, %arg1: i32) -> (i32, i32, i32) {
    %c0_i32 = arith.constant 0 : i32
    %c0_i32_0 = arith.constant 0 : i32
    return %arg1, %arg0, %c0_i32 : i32, i32, i32
  }
  func.func @transform_1(%arg0: i32, %arg1: i32) -> (i32, i32) {
    %c0_i32 = arith.constant 0 : i32
    %c0_i32_0 = arith.constant 0 : i32
    %c0_i32_1 = arith.constant 0 : i32
    return %c0_i32, %c0_i32_0 : i32, i32
  }
  func.func @transform_2(%arg0: i32, %arg1: i32) -> (i32, i32) {
    %c0_i32 = arith.constant 0 : i32
    %c0_i32_0 = arith.constant 0 : i32
    %c0_i32_1 = arith.constant 0 : i32
    return %c0_i32, %c0_i32_0 : i32, i32
  }
  func.func @transform_3(%arg0: i32, %arg1: i32) -> (i32, i32) {
    %c0_i32 = arith.constant 0 : i32
    %c0_i32_0 = arith.constant 0 : i32
    %c0_i32_1 = arith.constant 0 : i32
    return %c0_i32, %c0_i32_0 : i32, i32
  }
  func.func @transform_4(%arg0: i32, %arg1: i32) -> (i32, i32) {
    %c0_i32 = arith.constant 0 : i32
    %c0_i32_0 = arith.constant 0 : i32
    %c0_i32_1 = arith.constant 0 : i32
    return %c0_i32, %c0_i32_0 : i32, i32
  }
  func.func @transform_5(%arg0: i32, %arg1: i32) -> (i32, i32) {
    %c0_i32 = arith.constant 0 : i32
    %c0_i32_0 = arith.constant 0 : i32
    %c0_i32_1 = arith.constant 0 : i32
    return %c0_i32, %c0_i32_0 : i32, i32
  }
  func.func @transform_6(%arg0: i32, %arg1: i32) -> (i32, i32) {
    %c0_i32 = arith.constant 0 : i32
    %c0_i32_0 = arith.constant 0 : i32
    return %arg0, %c0_i32 : i32, i32
  }
}

</mosaic_0001>

<llo_original>
// kernel: tpu_custom_call.1
$region0: #{tpu_custom_call.1}
  #allocation0 [shape = 'u32[]', space=smem, size = 0x4, offset = 0x4, fixed_abs, tag = 'smem constant byte address 0x4 - core index']
  #allocation1 [shape = 'u32[144,128]{1,0:T(1,128)}', space=vmem, size = 0x12000, scoped, tag = 'internal scratch']
  #allocation2 [shape = 'f32[128,128]{1,0:T(8,128)}', space=vmem, size = 0x10000, scoped, tag = 'scratch operand']
  #allocation3 [shape = 'f32[8,128,128]{2,1,0:T(8,128)}', space=vmem, size = 0x80000, scoped, tag = 'scratch operand']
  %s0 = inlined_call_operand.hbm [shape: bf16[8,128,128], index: 0, kind: input, shape index: {}]
  %s1 = inlined_call_operand.hbm [shape: bf16[128,128], index: 1, kind: input, shape index: {}]
  %s2 = inlined_call_operand.vmem [shape: f32[1,128], index: 2, kind: input, shape index: {}]
  %s3 = inlined_call_operand.hbm [shape: bf16[128,128], index: 3, kind: input, shape index: {}]
  %s4 = inlined_call_operand.hbm [shape: bf16[128,128], index: 4, kind: input, shape index: {}]
  %s5 = inlined_call_operand.vmem [shape: f32[1,128], index: 5, kind: input, shape index: {}]
  %s6 = inlined_call_operand.hbm [shape: f32[128,128], index: 6, kind: output, shape index: {}]
  %s7 = sld [smem:[#allocation0]]
  $region58: #{tpu_custom_call.1} parent=0
    _
  %s9 = ssub.s32 1, %s7
  %s10 = scalar_select 0, %s9, %s7
  $region1: #{tpu_custom_call.1} parent=0
    #allocation4 [shape = 'u8[262144]{0}', space=vmem, size = 0x40000, scoped, tag = 'input window, operand 0, single buffered']
    #allocation5 [shape = 's32[1]{0}', space=sflag, size = 0x4, scoped, tag = 'scoped memory for tpu_custom_call.1']
    #allocation6 [shape = 's32[1]{0}', space=sflag, size = 0x4, scoped, tag = 'scoped memory for tpu_custom_call.1']
    #allocation7 [shape = 'u8[32768]{0}', space=vmem, size = 0x8000, scoped, tag = 'input window, operand 1, single buffered']
    #allocation8 [shape = 's32[1]{0}', space=sflag, size = 0x4, scoped, tag = 'scoped memory for tpu_custom_call.1']
    #allocation9 [shape = 'u8[32768]{0}', space=vmem, size = 0x8000, scoped, tag = 'input window, operand 3, single buffered']
    #allocation10 [shape = 'u8[32768]{0}', space=vmem, size = 0x8000, scoped, tag = 'input window, operand 4, single buffered']
    #allocation11 [shape = 's32[1]{0}', space=sflag, size = 0x4, scoped, tag = 'scoped memory for tpu_custom_call.1']
    #allocation12 [shape = 'u8[65536]{0}', space=vmem, size = 0x10000, scoped, tag = 'output window, operand 0, single buffered']
    %11 = vsyncpa [#allocation5], 0
    %12 = vsyncpa [#allocation8], 0
    %13 = vsyncpa [#allocation11], 0
    %14 = vsyncpa [#allocation6], 0
    // Predicated region
    $region2: #{tpu_custom_call.1} parent=1 // pred_check
      _
    $region3: #{tpu_custom_call.1} parent=1 // pred_check_branch
      %16 = sbr.rel (0) target = $region5
    $region4: #{tpu_custom_call.1} parent=1 // pred_region
      %s18 = ssub.s32 8192, 8192
      %19 = vsyncadd [#allocation5], %s18
      %s20 = sshll.u32 [#allocation4], 4
      %s21 = int_to_ptr.vmem [resolvable:$true] %s20
      %26 = dma.hbm_to_vmem [thread:$0]  %s0, 8192, %s21, [#allocation5], 64, 64, 4
    $region5: #{tpu_custom_call.1} parent=1 // pred_fallthru
      _
    // Predicated region
    $region6: #{tpu_custom_call.1} parent=1 // pred_check
      _
    $region7: #{tpu_custom_call.1} parent=1 // pred_check_branch
      %28 = sbr.rel (0) target = $region9
    $region8: #{tpu_custom_call.1} parent=1 // pred_region
      %s30 = ssub.s32 1024, 1024
      %31 = vsyncadd [#allocation8], %s30
      %s32 = sshll.u32 [#allocation7], 4
      %s33 = int_to_ptr.vmem [resolvable:$true] %s32
      %38 = dma.hbm_to_vmem [thread:$0]  %s1, 1024, %s33, [#allocation8], 64, 64, 4
    $region9: #{tpu_custom_call.1} parent=1 // pred_fallthru
      _
    // Predicated region
    $region10: #{tpu_custom_call.1} parent=1 // pred_check
      _
    $region11: #{tpu_custom_call.1} parent=1 // pred_check_branch
      %40 = sbr.rel (0) target = $region13
    $region12: #{tpu_custom_call.1} parent=1 // pred_region
      _
    $region13: #{tpu_custom_call.1} parent=1 // pred_fallthru
      _
    // Predicated region
    $region14: #{tpu_custom_call.1} parent=1 // pred_check
      _
    $region15: #{tpu_custom_call.1} parent=1 // pred_check_branch
      %42 = sbr.rel (0) target = $region17
    $region16: #{tpu_custom_call.1} parent=1 // pred_region
      %s44 = ssub.s32 1024, 1024
      %45 = vsyncadd [#allocation8], %s44
      %s46 = sshll.u32 [#allocation9], 4
      %s47 = int_to_ptr.vmem [resolvable:$true] %s46
      %52 = dma.hbm_to_vmem [thread:$0]  %s3, 1024, %s47, [#allocation8], 64, 64, 4
    $region17: #{tpu_custom_call.1} parent=1 // pred_fallthru
      _
    // Predicated region
    $region18: #{tpu_custom_call.1} parent=1 // pred_check
      _
    $region19: #{tpu_custom_call.1} parent=1 // pred_check_branch
      %54 = sbr.rel (0) target = $region21
    $region20: #{tpu_custom_call.1} parent=1 // pred_region
      %s56 = ssub.s32 1024, 1024
      %57 = vsyncadd [#allocation11], %s56
      %s58 = sshll.u32 [#allocation10], 4
      %s59 = int_to_ptr.vmem [resolvable:$true] %s58
      %64 = dma.hbm_to_vmem [thread:$0]  %s4, 1024, %s59, [#allocation11], 64, 64, 4
    $region21: #{tpu_custom_call.1} parent=1 // pred_fallthru
      _
    // Predicated region
    $region22: #{tpu_custom_call.1} parent=1 // pred_check
      _
    $region23: #{tpu_custom_call.1} parent=1 // pred_check_branch
      %66 = sbr.rel (0) target = $region25
    $region24: #{tpu_custom_call.1} parent=1 // pred_region
      _
    $region25: #{tpu_custom_call.1} parent=1 // pred_fallthru
      _
    // Predicated region
    $region26: #{tpu_custom_call.1} parent=1 // pred_check
      _
    $region27: #{tpu_custom_call.1} parent=1 // pred_check_branch
      %68 = sbr.rel (0) target = $region29
    $region28: #{tpu_custom_call.1} parent=1 // pred_region
      %69 = dma.done [#allocation5], 8192
    $region29: #{tpu_custom_call.1} parent=1 // pred_fallthru
      _
    // Predicated region
    $region30: #{tpu_custom_call.1} parent=1 // pred_check
      _
    $region31: #{tpu_custom_call.1} parent=1 // pred_check_branch
      %71 = sbr.rel (0) target = $region33
    $region32: #{tpu_custom_call.1} parent=1 // pred_region
      %72 = dma.done [#allocation8], 1024
    $region33: #{tpu_custom_call.1} parent=1 // pred_fallthru
      _
    // Predicated region
    $region34: #{tpu_custom_call.1} parent=1 // pred_check
      _
    $region35: #{tpu_custom_call.1} parent=1 // pred_check_branch
      %74 = sbr.rel (0) target = $region37
    $region36: #{tpu_custom_call.1} parent=1 // pred_region
      %75 = dma.done [#allocation8], 1024
    $region37: #{tpu_custom_call.1} parent=1 // pred_fallthru
      _
    // Predicated region
    $region38: #{tpu_custom_call.1} parent=1 // pred_check
      _
    $region39: #{tpu_custom_call.1} parent=1 // pred_check_branch
      %77 = sbr.rel (0) target = $region41
    $region40: #{tpu_custom_call.1} parent=1 // pred_region
      %78 = dma.done [#allocation11], 1024
    $region41: #{tpu_custom_call.1} parent=1 // pred_fallthru
      _
    %p80 = scmp.eq.s32.totalorder 0, 0
    // Predicated region
    $region42: #{tpu_custom_call.1} parent=1 // pred_check
      %p81 = pneg %p80
    $region43: #{tpu_custom_call.1} parent=1 // pred_check_branch
      %83 = sbr.rel (%p81) target = $region45
    $region44: #{tpu_custom_call.1} parent=1 // pred_region
      %84 = vst [vmem:[#allocation2] sm:$0xff] 0.0
      %85 = vst [vmem:[#allocation2 + $0x8] sm:$0xff] 0.0
      %86 = vst [vmem:[#allocation2 + $0x10] sm:$0xff] 0.0
      %87 = vst [vmem:[#allocation2 + $0x18] sm:$0xff] 0.0
      %88 = vst [vmem:[#allocation2 + $0x20] sm:$0xff] 0.0
      %89 = vst [vmem:[#allocation2 + $0x28] sm:$0xff] 0.0
      %90 = vst [vmem:[#allocation2 + $0x30] sm:$0xff] 0.0
      %91 = vst [vmem:[#allocation2 + $0x38] sm:$0xff] 0.0
      %92 = vst [vmem:[#allocation2 + $0x40] sm:$0xff] 0.0
      %93 = vst [vmem:[#allocation2 + $0x48] sm:$0xff] 0.0
      %94 = vst [vmem:[#allocation2 + $0x50] sm:$0xff] 0.0
      %95 = vst [vmem:[#allocation2 + $0x58] sm:$0xff] 0.0
      %96 = vst [vmem:[#allocation2 + $0x60] sm:$0xff] 0.0
      %97 = vst [vmem:[#allocation2 + $0x68] sm:$0xff] 0.0
      %98 = vst [vmem:[#allocation2 + $0x70] sm:$0xff] 0.0
      %99 = vst [vmem:[#allocation2 + $0x78] sm:$0xff] 0.0
    $region45: #{tpu_custom_call.1} parent=1 // pred_fallthru
      _
    %v100 = vld [vmem:[#allocation4] sm:$0xf]
    %v101 = vld [vmem:[#allocation4 + $0x4] sm:$0xf]
    %v102 = vld [vmem:[#allocation4 + $0x8] sm:$0xf]
    %v103 = vld [vmem:[#allocation4 + $0xc] sm:$0xf]
    %v104 = vld [vmem:[#allocation4 + $0x10] sm:$0xf]
    %v105 = vld [vmem:[#allocation4 + $0x14] sm:$0xf]
    %v106 = vld [vmem:[#allocation4 + $0x18] sm:$0xf]
    %v107 = vld [vmem:[#allocation4 + $0x1c] sm:$0xf]
    %v108 = vld [vmem:[#allocation4 + $0x20] sm:$0xf]
    %v109 = vld [vmem:[#allocation4 + $0x24] sm:$0xf]
    %v110 = vld [vmem:[#allocation4 + $0x28] sm:$0xf]
    %v111 = vld [vmem:[#allocation4 + $0x2c] sm:$0xf]
    %v112 = vld [vmem:[#allocation4 + $0x30] sm:$0xf]
    %v113 = vld [vmem:[#allocation4 + $0x34] sm:$0xf]
    %v114 = vld [vmem:[#allocation4 + $0x38] sm:$0xf]
    %v115 = vld [vmem:[#allocation4 + $0x3c] sm:$0xf]
    %v116 = vld [vmem:[#allocation4 + $0x40] sm:$0xf]
    %v117 = vld [vmem:[#allocation4 + $0x44] sm:$0xf]
    %v118 = vld [vmem:[#allocation4 + $0x48] sm:$0xf]
    %v119 = vld [vmem:[#allocation4 + $0x4c] sm:$0xf]
    %v120 = vld [vmem:[#allocation4 + $0x50] sm:$0xf]
    %v121 = vld [vmem:[#allocation4 + $0x54] sm:$0xf]
    %v122 = vld [vmem:[#allocation4 + $0x58] sm:$0xf]
    %v123 = vld [vmem:[#allocation4 + $0x5c] sm:$0xf]
    %v124 = vld [vmem:[#allocation4 + $0x60] sm:$0xf]
    %v125 = vld [vmem:[#allocation4 + $0x64] sm:$0xf]
    %v126 = vld [vmem:[#allocation4 + $0x68] sm:$0xf]
    %v127 = vld [vmem:[#allocation4 + $0x6c] sm:$0xf]
    %v128 = vld [vmem:[#allocation4 + $0x70] sm:$0xf]
    %v129 = vld [vmem:[#allocation4 + $0x74] sm:$0xf]
    %v130 = vld [vmem:[#allocation4 + $0x78] sm:$0xf]
    %v131 = vld [vmem:[#allocation4 + $0x7c] sm:$0xf]
    %v132 = vld [vmem:[#allocation4 + $0x80] sm:$0xf]
    %v133 = vld [vmem:[#allocation4 + $0x84] sm:$0xf]
    %v134 = vld [vmem:[#allocation4 + $0x88] sm:$0xf]
    %v135 = vld [vmem:[#allocation4 + $0x8c] sm:$0xf]
    %v136 = vld [vmem:[#allocation4 + $0x90] sm:$0xf]
    %v137 = vld [vmem:[#allocation4 + $0x94] sm:$0xf]
    %v138 = vld [vmem:[#allocation4 + $0x98] sm:$0xf]
    %v139 = vld [vmem:[#allocation4 + $0x9c] sm:$0xf]
    %v140 = vld [vmem:[#allocation4 + $0xa0] sm:$0xf]
    %v141 = vld [vmem:[#allocation4 + $0xa4] sm:$0xf]
    %v142 = vld [vmem:[#allocation4 + $0xa8] sm:$0xf]
    %v143 = vld [vmem:[#allocation4 + $0xac] sm:$0xf]
    %v144 = vld [vmem:[#allocation4 + $0xb0] sm:$0xf]
    %v145 = vld [vmem:[#allocation4 + $0xb4] sm:$0xf]
    %v146 = vld [vmem:[#allocation4 + $0xb8] sm:$0xf]
    %v147 = vld [vmem:[#allocation4 + $0xbc] sm:$0xf]
    %v148 = vld [vmem:[#allocation4 + $0xc0] sm:$0xf]
    %v149 = vld [vmem:[#allocation4 + $0xc4] sm:$0xf]
    %v150 = vld [vmem:[#allocation4 + $0xc8] sm:$0xf]
    %v151 = vld [vmem:[#allocation4 + $0xcc] sm:$0xf]
    %v152 = vld [vmem:[#allocation4 + $0xd0] sm:$0xf]
    %v153 = vld [vmem:[#allocation4 + $0xd4] sm:$0xf]
    %v154 = vld [vmem:[#allocation4 + $0xd8] sm:$0xf]
    %v155 = vld [vmem:[#allocation4 + $0xdc] sm:$0xf]
    %v156 = vld [vmem:[#allocation4 + $0xe0] sm:$0xf]
    %v157 = vld [vmem:[#allocation4 + $0xe4] sm:$0xf]
    %v158 = vld [vmem:[#allocation4 + $0xe8] sm:$0xf]
    %v159 = vld [vmem:[#allocation4 + $0xec] sm:$0xf]
    %v160 = vld [vmem:[#allocation4 + $0xf0] sm:$0xf]
    %v161 = vld [vmem:[#allocation4 + $0xf4] sm:$0xf]
    %v162 = vld [vmem:[#allocation4 + $0xf8] sm:$0xf]
    %v163 = vld [vmem:[#allocation4 + $0xfc] sm:$0xf]
    %v164 = vld [vmem:[#allocation4 + $0x100] sm:$0xf]
    %v165 = vld [vmem:[#allocation4 + $0x104] sm:$0xf]
    %v166 = vld [vmem:[#allocation4 + $0x108] sm:$0xf]
    %v167 = vld [vmem:[#allocation4 + $0x10c] sm:$0xf]
    %v168 = vld [vmem:[#allocation4 + $0x110] sm:$0xf]
    %v169 = vld [vmem:[#allocation4 + $0x114] sm:$0xf]
    %v170 = vld [vmem:[#allocation4 + $0x118] sm:$0xf]
    %v171 = vld [vmem:[#allocation4 + $0x11c] sm:$0xf]
    %v172 = vld [vmem:[#allocation4 + $0x120] sm:$0xf]
    %v173 = vld [vmem:[#allocation4 + $0x124] sm:$0xf]
    %v174 = vld [vmem:[#allocation4 + $0x128] sm:$0xf]
    %v175 = vld [vmem:[#allocation4 + $0x12c] sm:$0xf]
    %v176 = vld [vmem:[#allocation4 + $0x130] sm:$0xf]
    %v177 = vld [vmem:[#allocation4 + $0x134] sm:$0xf]
    %v178 = vld [vmem:[#allocation4 + $0x138] sm:$0xf]
    %v179 = vld [vmem:[#allocation4 + $0x13c] sm:$0xf]
    %v180 = vld [vmem:[#allocation4 + $0x140] sm:$0xf]
    %v181 = vld [vmem:[#allocation4 + $0x144] sm:$0xf]
    %v182 = vld [vmem:[#allocation4 + $0x148] sm:$0xf]
    %v183 = vld [vmem:[#allocation4 + $0x14c] sm:$0xf]
    %v184 = vld [vmem:[#allocation4 + $0x150] sm:$0xf]
    %v185 = vld [vmem:[#allocation4 + $0x154] sm:$0xf]
    %v186 = vld [vmem:[#allocation4 + $0x158] sm:$0xf]
    %v187 = vld [vmem:[#allocation4 + $0x15c] sm:$0xf]
    %v188 = vld [vmem:[#allocation4 + $0x160] sm:$0xf]
    %v189 = vld [vmem:[#allocation4 + $0x164] sm:$0xf]
    %v190 = vld [vmem:[#allocation4 + $0x168] sm:$0xf]
    %v191 = vld [vmem:[#allocation4 + $0x16c] sm:$0xf]
    %v192 = vld [vmem:[#allocation4 + $0x170] sm:$0xf]
    %v193 = vld [vmem:[#allocation4 + $0x174] sm:$0xf]
    %v194 = vld [vmem:[#allocation4 + $0x178] sm:$0xf]
    %v195 = vld [vmem:[#allocation4 + $0x17c] sm:$0xf]
    %v196 = vld [vmem:[#allocation4 + $0x180] sm:$0xf]
    %v197 = vld [vmem:[#allocation4 + $0x184] sm:$0xf]
    %v198 = vld [vmem:[#allocation4 + $0x188] sm:$0xf]
    %v199 = vld [vmem:[#allocation4 + $0x18c] sm:$0xf]
    %v200 = vld [vmem:[#allocation4 + $0x190] sm:$0xf]
    %v201 = vld [vmem:[#allocation4 + $0x194] sm:$0xf]
    %v202 = vld [vmem:[#allocation4 + $0x198] sm:$0xf]
    %v203 = vld [vmem:[#allocation4 + $0x19c] sm:$0xf]
    %v204 = vld [vmem:[#allocation4 + $0x1a0] sm:$0xf]
    %v205 = vld [vmem:[#allocation4 + $0x1a4] sm:$0xf]
    %v206 = vld [vmem:[#allocation4 + $0x1a8] sm:$0xf]
    %v207 = vld [vmem:[#allocation4 + $0x1ac] sm:$0xf]
    %v208 = vld [vmem:[#allocation4 + $0x1b0] sm:$0xf]
    %v209 = vld [vmem:[#allocation4 + $0x1b4] sm:$0xf]
    %v210 = vld [vmem:[#allocation4 + $0x1b8] sm:$0xf]
    %v211 = vld [vmem:[#allocation4 + $0x1bc] sm:$0xf]
    %v212 = vld [vmem:[#allocation4 + $0x1c0] sm:$0xf]
    %v213 = vld [vmem:[#allocation4 + $0x1c4] sm:$0xf]
    %v214 = vld [vmem:[#allocation4 + $0x1c8] sm:$0xf]
    %v215 = vld [vmem:[#allocation4 + $0x1cc] sm:$0xf]
    %v216 = vld [vmem:[#allocation4 + $0x1d0] sm:$0xf]
    %v217 = vld [vmem:[#allocation4 + $0x1d4] sm:$0xf]
    %v218 = vld [vmem:[#allocation4 + $0x1d8] sm:$0xf]
    %v219 = vld [vmem:[#allocation4 + $0x1dc] sm:$0xf]
    %v220 = vld [vmem:[#allocation4 + $0x1e0] sm:$0xf]
    %v221 = vld [vmem:[#allocation4 + $0x1e4] sm:$0xf]
    %v222 = vld [vmem:[#allocation4 + $0x1e8] sm:$0xf]
    %v223 = vld [vmem:[#allocation4 + $0x1ec] sm:$0xf]
    %v224 = vld [vmem:[#allocation4 + $0x1f0] sm:$0xf]
    %v225 = vld [vmem:[#allocation4 + $0x1f4] sm:$0xf]
    %v226 = vld [vmem:[#allocation4 + $0x1f8] sm:$0xf]
    %v227 = vld [vmem:[#allocation4 + $0x1fc] sm:$0xf]
    %v228 = vld [vmem:[#allocation7] sm:$0xf]
    %v229 = vld [vmem:[#allocation7 + $0x4] sm:$0xf]
    %v230 = vld [vmem:[#allocation7 + $0x8] sm:$0xf]
    %v231 = vld [vmem:[#allocation7 + $0xc] sm:$0xf]
    %v232 = vld [vmem:[#allocation7 + $0x10] sm:$0xf]
    %v233 = vld [vmem:[#allocation7 + $0x14] sm:$0xf]
    %v234 = vld [vmem:[#allocation7 + $0x18] sm:$0xf]
    %v235 = vld [vmem:[#allocation7 + $0x1c] sm:$0xf]
    %v236 = vld [vmem:[#allocation7 + $0x20] sm:$0xf]
    %v237 = vld [vmem:[#allocation7 + $0x24] sm:$0xf]
    %v238 = vld [vmem:[#allocation7 + $0x28] sm:$0xf]
    %v239 = vld [vmem:[#allocation7 + $0x2c] sm:$0xf]
    %v240 = vld [vmem:[#allocation7 + $0x30] sm:$0xf]
    %v241 = vld [vmem:[#allocation7 + $0x34] sm:$0xf]
    %v242 = vld [vmem:[#allocation7 + $0x38] sm:$0xf]
    %v243 = vld [vmem:[#allocation7 + $0x3c] sm:$0xf]
    %v244 = vld [vmem:[%s2] sm:$0x1]
    %v246 = vlaneseq
    %v247 = vshrl.u32 %v246, 7
    %v248 = vsub.s32 0, %v247
    %v249 = vrot.slane %v244, %v248
    %v379 = vunpack.c.l.b16 %v100
    %v380 = vunpack.c.l.b16 %v101
    %v381 = vunpack.c.l.b16 %v102
    %v382 = vunpack.c.l.b16 %v103
    %v383 = vunpack.c.l.b16 %v104
    %v384 = vunpack.c.l.b16 %v105
    %v385 = vunpack.c.l.b16 %v106
    %v386 = vunpack.c.l.b16 %v107
    %v387 = vunpack.c.l.b16 %v108
    %v388 = vunpack.c.l.b16 %v109
    %v389 = vunpack.c.l.b16 %v110
    %v390 = vunpack.c.l.b16 %v111
    %v391 = vunpack.c.l.b16 %v112
    %v392 = vunpack.c.l.b16 %v113
    %v393 = vunpack.c.l.b16 %v114
    %v394 = vunpack.c.l.b16 %v115
    %v395 = vunpack.c.l.b16 %v116
    %v396 = vunpack.c.l.b16 %v117
    %v397 = vunpack.c.l.b16 %v118
    %v398 = vunpack.c.l.b16 %v119
    %v399 = vunpack.c.l.b16 %v120
    %v400 = vunpack.c.l.b16 %v121
    %v401 = vunpack.c.l.b16 %v122
    %v402 = vunpack.c.l.b16 %v123
    %v403 = vunpack.c.l.b16 %v124
    %v404 = vunpack.c.l.b16 %v125
    %v405 = vunpack.c.l.b16 %v126
    %v406 = vunpack.c.l.b16 %v127
    %v407 = vunpack.c.l.b16 %v128
    %v408 = vunpack.c.l.b16 %v129
    %v409 = vunpack.c.l.b16 %v130
    %v410 = vunpack.c.l.b16 %v131
    %v411 = vunpack.c.l.b16 %v132
    %v412 = vunpack.c.l.b16 %v133
    %v413 = vunpack.c.l.b16 %v134
    %v414 = vunpack.c.l.b16 %v135
    %v415 = vunpack.c.l.b16 %v136
    %v416 = vunpack.c.l.b16 %v137
    %v417 = vunpack.c.l.b16 %v138
    %v418 = vunpack.c.l.b16 %v139
    %v419 = vunpack.c.l.b16 %v140
    %v420 = vunpack.c.l.b16 %v141
    %v421 = vunpack.c.l.b16 %v142
    %v422 = vunpack.c.l.b16 %v143
    %v423 = vunpack.c.l.b16 %v144
    %v424 = vunpack.c.l.b16 %v145
    %v425 = vunpack.c.l.b16 %v146
    %v426 = vunpack.c.l.b16 %v147
    %v427 = vunpack.c.l.b16 %v148
    %v428 = vunpack.c.l.b16 %v149
    %v429 = vunpack.c.l.b16 %v150
    %v430 = vunpack.c.l.b16 %v151
    %v431 = vunpack.c.l.b16 %v152
    %v432 = vunpack.c.l.b16 %v153
    %v433 = vunpack.c.l.b16 %v154
    %v434 = vunpack.c.l.b16 %v155
    %v435 = vunpack.c.l.b16 %v156
    %v436 = vunpack.c.l.b16 %v157
    %v437 = vunpack.c.l.b16 %v158
    %v438 = vunpack.c.l.b16 %v159
    %v439 = vunpack.c.l.b16 %v160
    %v440 = vunpack.c.l.b16 %v161
    %v441 = vunpack.c.l.b16 %v162
    %v442 = vunpack.c.l.b16 %v163
    %v443 = vunpack.c.l.b16 %v164
    %v444 = vunpack.c.l.b16 %v165
    %v445 = vunpack.c.l.b16 %v166
    %v446 = vunpack.c.l.b16 %v167
    %v447 = vunpack.c.l.b16 %v168
    %v448 = vunpack.c.l.b16 %v169
    %v449 = vunpack.c.l.b16 %v170
    %v450 = vunpack.c.l.b16 %v171
    %v451 = vunpack.c.l.b16 %v172
    %v452 = vunpack.c.l.b16 %v173
    %v453 = vunpack.c.l.b16 %v174
    %v454 = vunpack.c.l.b16 %v175
    %v455 = vunpack.c.l.b16 %v176
    %v456 = vunpack.c.l.b16 %v177
    %v457 = vunpack.c.l.b16 %v178
    %v458 = vunpack.c.l.b16 %v179
    %v459 = vunpack.c.l.b16 %v180
    %v460 = vunpack.c.l.b16 %v181
    %v461 = vunpack.c.l.b16 %v182
    %v462 = vunpack.c.l.b16 %v183
    %v463 = vunpack.c.l.b16 %v184
    %v464 = vunpack.c.l.b16 %v185
    %v465 = vunpack.c.l.b16 %v186
    %v466 = vunpack.c.l.b16 %v187
    %v467 = vunpack.c.l.b16 %v188
    %v468 = vunpack.c.l.b16 %v189
    %v469 = vunpack.c.l.b16 %v190
    %v470 = vunpack.c.l.b16 %v191
    %v471 = vunpack.c.l.b16 %v192
    %v472 = vunpack.c.l.b16 %v193
    %v473 = vunpack.c.l.b16 %v194
    %v474 = vunpack.c.l.b16 %v195
    %v475 = vunpack.c.l.b16 %v196
    %v476 = vunpack.c.l.b16 %v197
    %v477 = vunpack.c.l.b16 %v198
    %v478 = vunpack.c.l.b16 %v199
    %v479 = vunpack.c.l.b16 %v200
    %v480 = vunpack.c.l.b16 %v201
    %v481 = vunpack.c.l.b16 %v202
    %v482 = vunpack.c.l.b16 %v203
    %v483 = vunpack.c.l.b16 %v204
    %v484 = vunpack.c.l.b16 %v205
    %v485 = vunpack.c.l.b16 %v206
    %v486 = vunpack.c.l.b16 %v207
    %v487 = vunpack.c.l.b16 %v208
    %v488 = vunpack.c.l.b16 %v209
    %v489 = vunpack.c.l.b16 %v210
    %v490 = vunpack.c.l.b16 %v211
    %v491 = vunpack.c.l.b16 %v212
    %v492 = vunpack.c.l.b16 %v213
    %v493 = vunpack.c.l.b16 %v214
    %v494 = vunpack.c.l.b16 %v215
    %v495 = vunpack.c.l.b16 %v216
    %v496 = vunpack.c.l.b16 %v217
    %v497 = vunpack.c.l.b16 %v218
    %v498 = vunpack.c.l.b16 %v219
    %v499 = vunpack.c.l.b16 %v220
    %v500 = vunpack.c.l.b16 %v221
    %v501 = vunpack.c.l.b16 %v222
    %v502 = vunpack.c.l.b16 %v223
    %v503 = vunpack.c.l.b16 %v224
    %v504 = vunpack.c.l.b16 %v225
    %v505 = vunpack.c.l.b16 %v226
    %v506 = vunpack.c.l.b16 %v227
    %v507 = vpack.c.b16 %v380, %v379
    %v508 = vpack.c.b16 %v382, %v381
    %v509 = vpack.c.b16 %v384, %v383
    %v510 = vpack.c.b16 %v386, %v385
    %v511 = vpack.c.b16 %v388, %v387
    %v512 = vpack.c.b16 %v390, %v389
    %v513 = vpack.c.b16 %v392, %v391
    %v514 = vpack.c.b16 %v394, %v393
    %v515 = vpack.c.b16 %v396, %v395
    %v516 = vpack.c.b16 %v398, %v397
    %v517 = vpack.c.b16 %v400, %v399
    %v518 = vpack.c.b16 %v402, %v401
    %v519 = vpack.c.b16 %v404, %v403
    %v520 = vpack.c.b16 %v406, %v405
    %v521 = vpack.c.b16 %v408, %v407
    %v522 = vpack.c.b16 %v410, %v409
    %v523 = vpack.c.b16 %v412, %v411
    %v524 = vpack.c.b16 %v414, %v413
    %v525 = vpack.c.b16 %v416, %v415
    %v526 = vpack.c.b16 %v418, %v417
    %v527 = vpack.c.b16 %v420, %v419
    %v528 = vpack.c.b16 %v422, %v421
    %v529 = vpack.c.b16 %v424, %v423
    %v530 = vpack.c.b16 %v426, %v425
    %v531 = vpack.c.b16 %v428, %v427
    %v532 = vpack.c.b16 %v430, %v429
    %v533 = vpack.c.b16 %v432, %v431
    %v534 = vpack.c.b16 %v434, %v433
    %v535 = vpack.c.b16 %v436, %v435
    %v536 = vpack.c.b16 %v438, %v437
    %v537 = vpack.c.b16 %v440, %v439
    %v538 = vpack.c.b16 %v442, %v441
    %v539 = vpack.c.b16 %v444, %v443
    %v540 = vpack.c.b16 %v446, %v445
    %v541 = vpack.c.b16 %v448, %v447
    %v542 = vpack.c.b16 %v450, %v449
    %v543 = vpack.c.b16 %v452, %v451
    %v544 = vpack.c.b16 %v454, %v453
    %v545 = vpack.c.b16 %v456, %v455
    %v546 = vpack.c.b16 %v458, %v457
    %v547 = vpack.c.b16 %v460, %v459
    %v548 = vpack.c.b16 %v462, %v461
    %v549 = vpack.c.b16 %v464, %v463
    %v550 = vpack.c.b16 %v466, %v465
    %v551 = vpack.c.b16 %v468, %v467
    %v552 = vpack.c.b16 %v470, %v469
    %v553 = vpack.c.b16 %v472, %v471
    %v554 = vpack.c.b16 %v474, %v473
    %v555 = vpack.c.b16 %v476, %v475
    %v556 = vpack.c.b16 %v478, %v477
    %v557 = vpack.c.b16 %v480, %v479
    %v558 = vpack.c.b16 %v482, %v481
    %v559 = vpack.c.b16 %v484, %v483
    %v560 = vpack.c.b16 %v486, %v485
    %v561 = vpack.c.b16 %v488, %v487
    %v562 = vpack.c.b16 %v490, %v489
    %v563 = vpack.c.b16 %v492, %v491
    %v564 = vpack.c.b16 %v494, %v493
    %v565 = vpack.c.b16 %v496, %v495
    %v566 = vpack.c.b16 %v498, %v497
    %v567 = vpack.c.b16 %v500, %v499
    %v568 = vpack.c.b16 %v502, %v501
    %v569 = vpack.c.b16 %v504, %v503
    %v570 = vpack.c.b16 %v506, %v505
    %v651 = vunpack.c.l.b16 %v228
    %v652 = vunpack.c.l.b16 %v229
    %v653 = vunpack.c.l.b16 %v230
    %v654 = vunpack.c.l.b16 %v231
    %v655 = vunpack.c.l.b16 %v232
    %v656 = vunpack.c.l.b16 %v233
    %v657 = vunpack.c.l.b16 %v234
    %v658 = vunpack.c.l.b16 %v235
    %v659 = vunpack.c.l.b16 %v236
    %v660 = vunpack.c.l.b16 %v237
    %v661 = vunpack.c.l.b16 %v238
    %v662 = vunpack.c.l.b16 %v239
    %v663 = vunpack.c.l.b16 %v240
    %v664 = vunpack.c.l.b16 %v241
    %v665 = vunpack.c.l.b16 %v242
    %v666 = vunpack.c.l.b16 %v243
    %v667 = vpack.c.b16 %v652, %v651
    %v668 = vpack.c.b16 %v654, %v653
    %v669 = vpack.c.b16 %v656, %v655
    %v670 = vpack.c.b16 %v658, %v657
    %v671 = vpack.c.b16 %v660, %v659
    %v672 = vpack.c.b16 %v662, %v661
    %v673 = vpack.c.b16 %v664, %v663
    %v674 = vpack.c.b16 %v666, %v665
    %683 = vmatprep.subr.bf16.mxu0 0
    %684 = vmatpush1.bf16.msra.mxu0 %v674
    %685 = vmatprep.subr.bf16.mxu0 0
    %686 = vmatpush1.bf16.msra.mxu0 %v673
    %687 = vmatprep.subr.bf16.mxu0 0
    %688 = vmatpush1.bf16.msra.mxu0 %v672
    %689 = vmatprep.subr.bf16.mxu0 0
    %690 = vmatpush1.bf16.msra.mxu0 %v671
    %691 = vmatprep.subr.bf16.mxu0 0
    %692 = vmatpush1.bf16.msra.mxu0 %v670
    %693 = vmatprep.subr.bf16.mxu0 0
    %694 = vmatpush1.bf16.msra.mxu0 %v669
    %695 = vmatprep.subr.bf16.mxu0 0
    %696 = vmatpush1.bf16.msra.mxu0 %v668
    %697 = vmatprep.subr.bf16.mxu0 0
    %698 = vmatpush1.bf16.msra.mxu0 %v667
    %699 = vmatprep.subr.bf16.mxu0 0
    %700 = vmatpush2.bf16.msra.mxu0 0
    %701 = vmatprep.subr.bf16.mxu0 0
    %702 = vmatpush2.bf16.msra.mxu0 0
    %703 = vmatprep.subr.bf16.mxu0 0
    %704 = vmatpush2.bf16.msra.mxu0 0
    %705 = vmatprep.subr.bf16.mxu0 0
    %706 = vmatpush2.bf16.msra.mxu0 0
    %707 = vmatprep.subr.bf16.mxu0 0
    %708 = vmatpush2.bf16.msra.mxu0 0
    %709 = vmatprep.subr.bf16.mxu0 0
    %710 = vmatpush2.bf16.msra.mxu0 0
    %711 = vmatprep.subr.bf16.mxu0 0
    %712 = vmatpush2.bf16.msra.mxu0 0
    %713 = vmatprep.subr.bf16.mxu0 0
    %714 = vmatpush2.bf16.msra.mxu0 0
    %715 = vmatprep.mubr.bf16.mxu0 0
    %716 = vmatmul.mubr.bf16.gmra.mxu0 %v507
    %v717 = vpop.f32.mrf.mxu0
    %v718 = vadd.f32 %v249, %v717
    %v719 = vpop.f32.mrf.mxu0
    %v720 = vpop.f32.mrf.mxu0
    %v721 = vadd.f32 %v249, %v720
    %v722 = vpop.f32.mrf.mxu0
    %723 = vmatprep.mubr.bf16.mxu0 0
    %724 = vmatmul.mubr.bf16.gmra.mxu0 %v508
    %v725 = vpop.f32.mrf.mxu0
    %v726 = vadd.f32 %v249, %v725
    %v727 = vpop.f32.mrf.mxu0
    %v728 = vpop.f32.mrf.mxu0
    %v729 = vadd.f32 %v249, %v728
    %v730 = vpop.f32.mrf.mxu0
    %731 = vmatprep.mubr.bf16.mxu0 0
    %732 = vmatmul.mubr.bf16.gmra.mxu0 %v509
    %v733 = vpop.f32.mrf.mxu0
    %v734 = vadd.f32 %v249, %v733
    %v735 = vpop.f32.mrf.mxu0
    %v736 = vpop.f32.mrf.mxu0
    %v737 = vadd.f32 %v249, %v736
    %v738 = vpop.f32.mrf.mxu0
    %739 = vmatprep.mubr.bf16.mxu0 0
    %740 = vmatmul.mubr.bf16.gmra.mxu0 %v510
    %v741 = vpop.f32.mrf.mxu0
    %v742 = vadd.f32 %v249, %v741
    %v743 = vpop.f32.mrf.mxu0
    %v744 = vpop.f32.mrf.mxu0
    %v745 = vadd.f32 %v249, %v744
    %v746 = vpop.f32.mrf.mxu0
    %747 = vmatprep.mubr.bf16.mxu0 0
    %748 = vmatmul.mubr.bf16.gmra.mxu0 %v511
    %v749 = vpop.f32.mrf.mxu0
    %v750 = vadd.f32 %v249, %v749
    %v751 = vpop.f32.mrf.mxu0
    %v752 = vpop.f32.mrf.mxu0
    %v753 = vadd.f32 %v249, %v752
    %v754 = vpop.f32.mrf.mxu0
    %755 = vmatprep.mubr.bf16.mxu0 0
    %756 = vmatmul.mubr.bf16.gmra.mxu0 %v512
    %v757 = vpop.f32.mrf.mxu0
    %v758 = vadd.f32 %v249, %v757
    %v759 = vpop.f32.mrf.mxu0
    %v760 = vpop.f32.mrf.mxu0
    %v761 = vadd.f32 %v249, %v760
    %v762 = vpop.f32.mrf.mxu0
    %763 = vmatprep.mubr.bf16.mxu0 0
    %764 = vmatmul.mubr.bf16.gmra.mxu0 %v513
    %v765 = vpop.f32.mrf.mxu0
    %v766 = vadd.f32 %v249, %v765
    %v767 = vpop.f32.mrf.mxu0
    %v768 = vpop.f32.mrf.mxu0
    %v769 = vadd.f32 %v249, %v768
    %v770 = vpop.f32.mrf.mxu0
    %771 = vmatprep.mubr.bf16.mxu0 0
    %772 = vmatmul.mubr.bf16.gmra.mxu0 %v514
    %v773 = vpop.f32.mrf.mxu0
    %v774 = vadd.f32 %v249, %v773
    %v775 = vpop.f32.mrf.mxu0
    %v776 = vpop.f32.mrf.mxu0
    %v777 = vadd.f32 %v249, %v776
    %v778 = vpop.f32.mrf.mxu0
    %779 = vmatprep.mubr.bf16.mxu0 0
    %780 = vmatmul.mubr.bf16.gmra.mxu0 %v515
    %v781 = vpop.f32.mrf.mxu0
    %v782 = vadd.f32 %v249, %v781
    %v783 = vpop.f32.mrf.mxu0
    %v784 = vpop.f32.mrf.mxu0
    %v785 = vadd.f32 %v249, %v784
    %v786 = vpop.f32.mrf.mxu0
    %787 = vmatprep.mubr.bf16.mxu0 0
    %788 = vmatmul.mubr.bf16.gmra.mxu0 %v516
    %v789 = vpop.f32.mrf.mxu0
    %v790 = vadd.f32 %v249, %v789
    %v791 = vpop.f32.mrf.mxu0
    %v792 = vpop.f32.mrf.mxu0
    %v793 = vadd.f32 %v249, %v792
    %v794 = vpop.f32.mrf.mxu0
    %795 = vmatprep.mubr.bf16.mxu0 0
    %796 = vmatmul.mubr.bf16.gmra.mxu0 %v517
    %v797 = vpop.f32.mrf.mxu0
    %v798 = vadd.f32 %v249, %v797
    %v799 = vpop.f32.mrf.mxu0
    %v800 = vpop.f32.mrf.mxu0
    %v801 = vadd.f32 %v249, %v800
    %v802 = vpop.f32.mrf.mxu0
    %803 = vmatprep.mubr.bf16.mxu0 0
    %804 = vmatmul.mubr.bf16.gmra.mxu0 %v518
    %v805 = vpop.f32.mrf.mxu0
    %v806 = vadd.f32 %v249, %v805
    %v807 = vpop.f32.mrf.mxu0
    %v808 = vpop.f32.mrf.mxu0
    %v809 = vadd.f32 %v249, %v808
    %v810 = vpop.f32.mrf.mxu0
    %811 = vmatprep.mubr.bf16.mxu0 0
    %812 = vmatmul.mubr.bf16.gmra.mxu0 %v519
    %v813 = vpop.f32.mrf.mxu0
    %v814 = vadd.f32 %v249, %v813
    %v815 = vpop.f32.mrf.mxu0
    %v816 = vpop.f32.mrf.mxu0
    %v817 = vadd.f32 %v249, %v816
    %v818 = vpop.f32.mrf.mxu0
    %819 = vmatprep.mubr.bf16.mxu0 0
    %820 = vmatmul.mubr.bf16.gmra.mxu0 %v520
    %v821 = vpop.f32.mrf.mxu0
    %v822 = vadd.f32 %v249, %v821
    %v823 = vpop.f32.mrf.mxu0
    %v824 = vpop.f32.mrf.mxu0
    %v825 = vadd.f32 %v249, %v824
    %v826 = vpop.f32.mrf.mxu0
    %827 = vmatprep.mubr.bf16.mxu0 0
    %828 = vmatmul.mubr.bf16.gmra.mxu0 %v521
    %v829 = vpop.f32.mrf.mxu0
    %v830 = vadd.f32 %v249, %v829
    %v831 = vpop.f32.mrf.mxu0
    %v832 = vpop.f32.mrf.mxu0
    %v833 = vadd.f32 %v249, %v832
    %v834 = vpop.f32.mrf.mxu0
    %835 = vmatprep.mubr.bf16.mxu0 0
    %836 = vmatmul.mubr.bf16.gmra.mxu0 %v522
    %v837 = vpop.f32.mrf.mxu0
    %v838 = vadd.f32 %v249, %v837
    %v839 = vpop.f32.mrf.mxu0
    %v840 = vpop.f32.mrf.mxu0
    %v841 = vadd.f32 %v249, %v840
    %v842 = vpop.f32.mrf.mxu0
    %843 = vmatprep.mubr.bf16.mxu0 0
    %844 = vmatmul.mubr.bf16.gmra.mxu0 %v523
    %v845 = vpop.f32.mrf.mxu0
    %v846 = vadd.f32 %v249, %v845
    %v847 = vpop.f32.mrf.mxu0
    %v848 = vpop.f32.mrf.mxu0
    %v849 = vadd.f32 %v249, %v848
    %v850 = vpop.f32.mrf.mxu0
    %851 = vmatprep.mubr.bf16.mxu0 0
    %852 = vmatmul.mubr.bf16.gmra.mxu0 %v524
    %v853 = vpop.f32.mrf.mxu0
    %v854 = vadd.f32 %v249, %v853
    %v855 = vpop.f32.mrf.mxu0
    %v856 = vpop.f32.mrf.mxu0
    %v857 = vadd.f32 %v249, %v856
    %v858 = vpop.f32.mrf.mxu0
    %859 = vmatprep.mubr.bf16.mxu0 0
    %860 = vmatmul.mubr.bf16.gmra.mxu0 %v525
    %v861 = vpop.f32.mrf.mxu0
    %v862 = vadd.f32 %v249, %v861
    %v863 = vpop.f32.mrf.mxu0
    %v864 = vpop.f32.mrf.mxu0
    %v865 = vadd.f32 %v249, %v864
    %v866 = vpop.f32.mrf.mxu0
    %867 = vmatprep.mubr.bf16.mxu0 0
    %868 = vmatmul.mubr.bf16.gmra.mxu0 %v526
    %v869 = vpop.f32.mrf.mxu0
    %v870 = vadd.f32 %v249, %v869
    %v871 = vpop.f32.mrf.mxu0
    %v872 = vpop.f32.mrf.mxu0
    %v873 = vadd.f32 %v249, %v872
    %v874 = vpop.f32.mrf.mxu0
    %875 = vmatprep.mubr.bf16.mxu0 0
    %876 = vmatmul.mubr.bf16.gmra.mxu0 %v527
    %v877 = vpop.f32.mrf.mxu0
    %v878 = vadd.f32 %v249, %v877
    %v879 = vpop.f32.mrf.mxu0
    %v880 = vpop.f32.mrf.mxu0
    %v881 = vadd.f32 %v249, %v880
    %v882 = vpop.f32.mrf.mxu0
    %883 = vmatprep.mubr.bf16.mxu0 0
    %884 = vmatmul.mubr.bf16.gmra.mxu0 %v528
    %v885 = vpop.f32.mrf.mxu0
    %v886 = vadd.f32 %v249, %v885
    %v887 = vpop.f32.mrf.mxu0
    %v888 = vpop.f32.mrf.mxu0
    %v889 = vadd.f32 %v249, %v888
    %v890 = vpop.f32.mrf.mxu0
    %891 = vmatprep.mubr.bf16.mxu0 0
    %892 = vmatmul.mubr.bf16.gmra.mxu0 %v529
    %v893 = vpop.f32.mrf.mxu0
    %v894 = vadd.f32 %v249, %v893
    %v895 = vpop.f32.mrf.mxu0
    %v896 = vpop.f32.mrf.mxu0
    %v897 = vadd.f32 %v249, %v896
    %v898 = vpop.f32.mrf.mxu0
    %899 = vmatprep.mubr.bf16.mxu0 0
    %900 = vmatmul.mubr.bf16.gmra.mxu0 %v530
    %v901 = vpop.f32.mrf.mxu0
    %v902 = vadd.f32 %v249, %v901
    %v903 = vpop.f32.mrf.mxu0
    %v904 = vpop.f32.mrf.mxu0
    %v905 = vadd.f32 %v249, %v904
    %v906 = vpop.f32.mrf.mxu0
    %907 = vmatprep.mubr.bf16.mxu0 0
    %908 = vmatmul.mubr.bf16.gmra.mxu0 %v531
    %v909 = vpop.f32.mrf.mxu0
    %v910 = vadd.f32 %v249, %v909
    %v911 = vpop.f32.mrf.mxu0
    %v912 = vpop.f32.mrf.mxu0
    %v913 = vadd.f32 %v249, %v912
    %v914 = vpop.f32.mrf.mxu0
    %915 = vmatprep.mubr.bf16.mxu0 0
    %916 = vmatmul.mubr.bf16.gmra.mxu0 %v532
    %v917 = vpop.f32.mrf.mxu0
    %v918 = vadd.f32 %v249, %v917
    %v919 = vpop.f32.mrf.mxu0
    %v920 = vpop.f32.mrf.mxu0
    %v921 = vadd.f32 %v249, %v920
    %v922 = vpop.f32.mrf.mxu0
    %923 = vmatprep.mubr.bf16.mxu0 0
    %924 = vmatmul.mubr.bf16.gmra.mxu0 %v533
    %v925 = vpop.f32.mrf.mxu0
    %v926 = vadd.f32 %v249, %v925
    %v927 = vpop.f32.mrf.mxu0
    %v928 = vpop.f32.mrf.mxu0
    %v929 = vadd.f32 %v249, %v928
    %v930 = vpop.f32.mrf.mxu0
    %931 = vmatprep.mubr.bf16.mxu0 0
    %932 = vmatmul.mubr.bf16.gmra.mxu0 %v534
    %v933 = vpop.f32.mrf.mxu0
    %v934 = vadd.f32 %v249, %v933
    %v935 = vpop.f32.mrf.mxu0
    %v936 = vpop.f32.mrf.mxu0
    %v937 = vadd.f32 %v249, %v936
    %v938 = vpop.f32.mrf.mxu0
    %939 = vmatprep.mubr.bf16.mxu0 0
    %940 = vmatmul.mubr.bf16.gmra.mxu0 %v535
    %v941 = vpop.f32.mrf.mxu0
    %v942 = vadd.f32 %v249, %v941
    %v943 = vpop.f32.mrf.mxu0
    %v944 = vpop.f32.mrf.mxu0
    %v945 = vadd.f32 %v249, %v944
    %v946 = vpop.f32.mrf.mxu0
    %947 = vmatprep.mubr.bf16.mxu0 0
    %948 = vmatmul.mubr.bf16.gmra.mxu0 %v536
    %v949 = vpop.f32.mrf.mxu0
    %v950 = vadd.f32 %v249, %v949
    %v951 = vpop.f32.mrf.mxu0
    %v952 = vpop.f32.mrf.mxu0
    %v953 = vadd.f32 %v249, %v952
    %v954 = vpop.f32.mrf.mxu0
    %955 = vmatprep.mubr.bf16.mxu0 0
    %956 = vmatmul.mubr.bf16.gmra.mxu0 %v537
    %v957 = vpop.f32.mrf.mxu0
    %v958 = vadd.f32 %v249, %v957
    %v959 = vpop.f32.mrf.mxu0
    %v960 = vpop.f32.mrf.mxu0
    %v961 = vadd.f32 %v249, %v960
    %v962 = vpop.f32.mrf.mxu0
    %963 = vmatprep.mubr.bf16.mxu0 0
    %964 = vmatmul.mubr.bf16.gmra.mxu0 %v538
    %v965 = vpop.f32.mrf.mxu0
    %v966 = vadd.f32 %v249, %v965
    %v967 = vpop.f32.mrf.mxu0
    %v968 = vpop.f32.mrf.mxu0
    %v969 = vadd.f32 %v249, %v968
    %v970 = vpop.f32.mrf.mxu0
    %971 = vmatprep.mubr.bf16.mxu0 0
    %972 = vmatmul.mubr.bf16.gmra.mxu0 %v539
    %v973 = vpop.f32.mrf.mxu0
    %v974 = vadd.f32 %v249, %v973
    %v975 = vpop.f32.mrf.mxu0
    %v976 = vpop.f32.mrf.mxu0
    %v977 = vadd.f32 %v249, %v976
    %v978 = vpop.f32.mrf.mxu0
    %979 = vmatprep.mubr.bf16.mxu0 0
    %980 = vmatmul.mubr.bf16.gmra.mxu0 %v540
    %v981 = vpop.f32.mrf.mxu0
    %v982 = vadd.f32 %v249, %v981
    %v983 = vpop.f32.mrf.mxu0
    %v984 = vpop.f32.mrf.mxu0
    %v985 = vadd.f32 %v249, %v984
    %v986 = vpop.f32.mrf.mxu0
    %987 = vmatprep.mubr.bf16.mxu0 0
    %988 = vmatmul.mubr.bf16.gmra.mxu0 %v541
    %v989 = vpop.f32.mrf.mxu0
    %v990 = vadd.f32 %v249, %v989
    %v991 = vpop.f32.mrf.mxu0
    %v992 = vpop.f32.mrf.mxu0
    %v993 = vadd.f32 %v249, %v992
    %v994 = vpop.f32.mrf.mxu0
    %995 = vmatprep.mubr.bf16.mxu0 0
    %996 = vmatmul.mubr.bf16.gmra.mxu0 %v542
    %v997 = vpop.f32.mrf.mxu0
    %v998 = vadd.f32 %v249, %v997
    %v999 = vpop.f32.mrf.mxu0
    %v1000 = vpop.f32.mrf.mxu0
    %v1001 = vadd.f32 %v249, %v1000
    %v1002 = vpop.f32.mrf.mxu0
    %1003 = vmatprep.mubr.bf16.mxu0 0
    %1004 = vmatmul.mubr.bf16.gmra.mxu0 %v543
    %v1005 = vpop.f32.mrf.mxu0
    %v1006 = vadd.f32 %v249, %v1005
    %v1007 = vpop.f32.mrf.mxu0
    %v1008 = vpop.f32.mrf.mxu0
    %v1009 = vadd.f32 %v249, %v1008
    %v1010 = vpop.f32.mrf.mxu0
    %1011 = vmatprep.mubr.bf16.mxu0 0
    %1012 = vmatmul.mubr.bf16.gmra.mxu0 %v544
    %v1013 = vpop.f32.mrf.mxu0
    %v1014 = vadd.f32 %v249, %v1013
    %v1015 = vpop.f32.mrf.mxu0
    %v1016 = vpop.f32.mrf.mxu0
    %v1017 = vadd.f32 %v249, %v1016
    %v1018 = vpop.f32.mrf.mxu0
    %1019 = vmatprep.mubr.bf16.mxu0 0
    %1020 = vmatmul.mubr.bf16.gmra.mxu0 %v545
    %v1021 = vpop.f32.mrf.mxu0
    %v1022 = vadd.f32 %v249, %v1021
    %v1023 = vpop.f32.mrf.mxu0
    %v1024 = vpop.f32.mrf.mxu0
    %v1025 = vadd.f32 %v249, %v1024
    %v1026 = vpop.f32.mrf.mxu0
    %1027 = vmatprep.mubr.bf16.mxu0 0
    %1028 = vmatmul.mubr.bf16.gmra.mxu0 %v546
    %v1029 = vpop.f32.mrf.mxu0
    %v1030 = vadd.f32 %v249, %v1029
    %v1031 = vpop.f32.mrf.mxu0
    %v1032 = vpop.f32.mrf.mxu0
    %v1033 = vadd.f32 %v249, %v1032
    %v1034 = vpop.f32.mrf.mxu0
    %1035 = vmatprep.mubr.bf16.mxu0 0
    %1036 = vmatmul.mubr.bf16.gmra.mxu0 %v547
    %v1037 = vpop.f32.mrf.mxu0
    %v1038 = vadd.f32 %v249, %v1037
    %v1039 = vpop.f32.mrf.mxu0
    %v1040 = vpop.f32.mrf.mxu0
    %v1041 = vadd.f32 %v249, %v1040
    %v1042 = vpop.f32.mrf.mxu0
    %1043 = vmatprep.mubr.bf16.mxu0 0
    %1044 = vmatmul.mubr.bf16.gmra.mxu0 %v548
    %v1045 = vpop.f32.mrf.mxu0
    %v1046 = vadd.f32 %v249, %v1045
    %v1047 = vpop.f32.mrf.mxu0
    %v1048 = vpop.f32.mrf.mxu0
    %v1049 = vadd.f32 %v249, %v1048
    %v1050 = vpop.f32.mrf.mxu0
    %1051 = vmatprep.mubr.bf16.mxu0 0
    %1052 = vmatmul.mubr.bf16.gmra.mxu0 %v549
    %v1053 = vpop.f32.mrf.mxu0
    %v1054 = vadd.f32 %v249, %v1053
    %v1055 = vpop.f32.mrf.mxu0
    %v1056 = vpop.f32.mrf.mxu0
    %v1057 = vadd.f32 %v249, %v1056
    %v1058 = vpop.f32.mrf.mxu0
    %1059 = vmatprep.mubr.bf16.mxu0 0
    %1060 = vmatmul.mubr.bf16.gmra.mxu0 %v550
    %v1061 = vpop.f32.mrf.mxu0
    %v1062 = vadd.f32 %v249, %v1061
    %v1063 = vpop.f32.mrf.mxu0
    %v1064 = vpop.f32.mrf.mxu0
    %v1065 = vadd.f32 %v249, %v1064
    %v1066 = vpop.f32.mrf.mxu0
    %1067 = vmatprep.mubr.bf16.mxu0 0
    %1068 = vmatmul.mubr.bf16.gmra.mxu0 %v551
    %v1069 = vpop.f32.mrf.mxu0
    %v1070 = vadd.f32 %v249, %v1069
    %v1071 = vpop.f32.mrf.mxu0
    %v1072 = vpop.f32.mrf.mxu0
    %v1073 = vadd.f32 %v249, %v1072
    %v1074 = vpop.f32.mrf.mxu0
    %1075 = vmatprep.mubr.bf16.mxu0 0
    %1076 = vmatmul.mubr.bf16.gmra.mxu0 %v552
    %v1077 = vpop.f32.mrf.mxu0
    %v1078 = vadd.f32 %v249, %v1077
    %v1079 = vpop.f32.mrf.mxu0
    %v1080 = vpop.f32.mrf.mxu0
    %v1081 = vadd.f32 %v249, %v1080
    %v1082 = vpop.f32.mrf.mxu0
    %1083 = vmatprep.mubr.bf16.mxu0 0
    %1084 = vmatmul.mubr.bf16.gmra.mxu0 %v553
    %v1085 = vpop.f32.mrf.mxu0
    %v1086 = vadd.f32 %v249, %v1085
    %v1087 = vpop.f32.mrf.mxu0
    %v1088 = vpop.f32.mrf.mxu0
    %v1089 = vadd.f32 %v249, %v1088
    %v1090 = vpop.f32.mrf.mxu0
    %1091 = vmatprep.mubr.bf16.mxu0 0
    %1092 = vmatmul.mubr.bf16.gmra.mxu0 %v554
    %v1093 = vpop.f32.mrf.mxu0
    %v1094 = vadd.f32 %v249, %v1093
    %v1095 = vpop.f32.mrf.mxu0
    %v1096 = vpop.f32.mrf.mxu0
    %v1097 = vadd.f32 %v249, %v1096
    %v1098 = vpop.f32.mrf.mxu0
    %1099 = vmatprep.mubr.bf16.mxu0 0
    %1100 = vmatmul.mubr.bf16.gmra.mxu0 %v555
    %v1101 = vpop.f32.mrf.mxu0
    %v1102 = vadd.f32 %v249, %v1101
    %v1103 = vpop.f32.mrf.mxu0
    %v1104 = vpop.f32.mrf.mxu0
    %v1105 = vadd.f32 %v249, %v1104
    %v1106 = vpop.f32.mrf.mxu0
    %1107 = vmatprep.mubr.bf16.mxu0 0
    %1108 = vmatmul.mubr.bf16.gmra.mxu0 %v556
    %v1109 = vpop.f32.mrf.mxu0
    %v1110 = vadd.f32 %v249, %v1109
    %v1111 = vpop.f32.mrf.mxu0
    %v1112 = vpop.f32.mrf.mxu0
    %v1113 = vadd.f32 %v249, %v1112
    %v1114 = vpop.f32.mrf.mxu0
    %1115 = vmatprep.mubr.bf16.mxu0 0
    %1116 = vmatmul.mubr.bf16.gmra.mxu0 %v557
    %v1117 = vpop.f32.mrf.mxu0
    %v1118 = vadd.f32 %v249, %v1117
    %v1119 = vpop.f32.mrf.mxu0
    %v1120 = vpop.f32.mrf.mxu0
    %v1121 = vadd.f32 %v249, %v1120
    %v1122 = vpop.f32.mrf.mxu0
    %1123 = vmatprep.mubr.bf16.mxu0 0
    %1124 = vmatmul.mubr.bf16.gmra.mxu0 %v558
    %v1125 = vpop.f32.mrf.mxu0
    %v1126 = vadd.f32 %v249, %v1125
    %v1127 = vpop.f32.mrf.mxu0
    %v1128 = vpop.f32.mrf.mxu0
    %v1129 = vadd.f32 %v249, %v1128
    %v1130 = vpop.f32.mrf.mxu0
    %1131 = vmatprep.mubr.bf16.mxu0 0
    %1132 = vmatmul.mubr.bf16.gmra.mxu0 %v559
    %v1133 = vpop.f32.mrf.mxu0
    %v1134 = vadd.f32 %v249, %v1133
    %v1135 = vpop.f32.mrf.mxu0
    %v1136 = vpop.f32.mrf.mxu0
    %v1137 = vadd.f32 %v249, %v1136
    %v1138 = vpop.f32.mrf.mxu0
    %1139 = vmatprep.mubr.bf16.mxu0 0
    %1140 = vmatmul.mubr.bf16.gmra.mxu0 %v560
    %v1141 = vpop.f32.mrf.mxu0
    %v1142 = vadd.f32 %v249, %v1141
    %v1143 = vpop.f32.mrf.mxu0
    %v1144 = vpop.f32.mrf.mxu0
    %v1145 = vadd.f32 %v249, %v1144
    %v1146 = vpop.f32.mrf.mxu0
    %1147 = vmatprep.mubr.bf16.mxu0 0
    %1148 = vmatmul.mubr.bf16.gmra.mxu0 %v561
    %v1149 = vpop.f32.mrf.mxu0
    %v1150 = vadd.f32 %v249, %v1149
    %v1151 = vpop.f32.mrf.mxu0
    %v1152 = vpop.f32.mrf.mxu0
    %v1153 = vadd.f32 %v249, %v1152
    %v1154 = vpop.f32.mrf.mxu0
    %1155 = vmatprep.mubr.bf16.mxu0 0
    %1156 = vmatmul.mubr.bf16.gmra.mxu0 %v562
    %v1157 = vpop.f32.mrf.mxu0
    %v1158 = vadd.f32 %v249, %v1157
    %v1159 = vpop.f32.mrf.mxu0
    %v1160 = vpop.f32.mrf.mxu0
    %v1161 = vadd.f32 %v249, %v1160
    %v1162 = vpop.f32.mrf.mxu0
    %1163 = vmatprep.mubr.bf16.mxu0 0
    %1164 = vmatmul.mubr.bf16.gmra.mxu0 %v563
    %v1165 = vpop.f32.mrf.mxu0
    %v1166 = vadd.f32 %v249, %v1165
    %v1167 = vpop.f32.mrf.mxu0
    %v1168 = vpop.f32.mrf.mxu0
    %v1169 = vadd.f32 %v249, %v1168
    %v1170 = vpop.f32.mrf.mxu0
    %1171 = vmatprep.mubr.bf16.mxu0 0
    %1172 = vmatmul.mubr.bf16.gmra.mxu0 %v564
    %v1173 = vpop.f32.mrf.mxu0
    %v1174 = vadd.f32 %v249, %v1173
    %v1175 = vpop.f32.mrf.mxu0
    %v1176 = vpop.f32.mrf.mxu0
    %v1177 = vadd.f32 %v249, %v1176
    %v1178 = vpop.f32.mrf.mxu0
    %1179 = vmatprep.mubr.bf16.mxu0 0
    %1180 = vmatmul.mubr.bf16.gmra.mxu0 %v565
    %v1181 = vpop.f32.mrf.mxu0
    %v1182 = vadd.f32 %v249, %v1181
    %v1183 = vpop.f32.mrf.mxu0
    %v1184 = vpop.f32.mrf.mxu0
    %v1185 = vadd.f32 %v249, %v1184
    %v1186 = vpop.f32.mrf.mxu0
    %1187 = vmatprep.mubr.bf16.mxu0 0
    %1188 = vmatmul.mubr.bf16.gmra.mxu0 %v566
    %v1189 = vpop.f32.mrf.mxu0
    %v1190 = vadd.f32 %v249, %v1189
    %v1191 = vpop.f32.mrf.mxu0
    %v1192 = vpop.f32.mrf.mxu0
    %v1193 = vadd.f32 %v249, %v1192
    %v1194 = vpop.f32.mrf.mxu0
    %1195 = vmatprep.mubr.bf16.mxu0 0
    %1196 = vmatmul.mubr.bf16.gmra.mxu0 %v567
    %v1197 = vpop.f32.mrf.mxu0
    %v1198 = vadd.f32 %v249, %v1197
    %v1199 = vpop.f32.mrf.mxu0
    %v1200 = vpop.f32.mrf.mxu0
    %v1201 = vadd.f32 %v249, %v1200
    %v1202 = vpop.f32.mrf.mxu0
    %1203 = vmatprep.mubr.bf16.mxu0 0
    %1204 = vmatmul.mubr.bf16.gmra.mxu0 %v568
    %v1205 = vpop.f32.mrf.mxu0
    %v1206 = vadd.f32 %v249, %v1205
    %v1207 = vpop.f32.mrf.mxu0
    %v1208 = vpop.f32.mrf.mxu0
    %v1209 = vadd.f32 %v249, %v1208
    %v1210 = vpop.f32.mrf.mxu0
    %1211 = vmatprep.mubr.bf16.mxu0 0
    %1212 = vmatmul.mubr.bf16.gmra.mxu0 %v569
    %v1213 = vpop.f32.mrf.mxu0
    %v1214 = vadd.f32 %v249, %v1213
    %v1215 = vpop.f32.mrf.mxu0
    %v1216 = vpop.f32.mrf.mxu0
    %v1217 = vadd.f32 %v249, %v1216
    %v1218 = vpop.f32.mrf.mxu0
    %1219 = vmatprep.mubr.bf16.mxu0 0
    %1220 = vmatmul.mubr.bf16.gmra.mxu0 %v570
    %v1221 = vpop.f32.mrf.mxu0
    %v1222 = vadd.f32 %v249, %v1221
    %v1223 = vpop.f32.mrf.mxu0
    %v1224 = vpop.f32.mrf.mxu0
    %v1225 = vadd.f32 %v249, %v1224
    %v1226 = vpop.f32.mrf.mxu0
    %1227 = vdwg.mxu0
    %1228 = vst [vmem:[#allocation3] sm:$0xff] %v718
    %1229 = vst [vmem:[#allocation3 + $0x8] sm:$0xff] %v721
    %1230 = vst [vmem:[#allocation3 + $0x10] sm:$0xff] %v726
    %1231 = vst [vmem:[#allocation3 + $0x18] sm:$0xff] %v729
    %1232 = vst [vmem:[#allocation3 + $0x20] sm:$0xff] %v734
    %1233 = vst [vmem:[#allocation3 + $0x28] sm:$0xff] %v737
    %1234 = vst [vmem:[#allocation3 + $0x30] sm:$0xff] %v742
    %1235 = vst [vmem:[#allocation3 + $0x38] sm:$0xff] %v745
    %1236 = vst [vmem:[#allocation3 + $0x40] sm:$0xff] %v750
    %1237 = vst [vmem:[#allocation3 + $0x48] sm:$0xff] %v753
    %1238 = vst [vmem:[#allocation3 + $0x50] sm:$0xff] %v758
    %1239 = vst [vmem:[#allocation3 + $0x58] sm:$0xff] %v761
    %1240 = vst [vmem:[#allocation3 + $0x60] sm:$0xff] %v766
    %1241 = vst [vmem:[#allocation3 + $0x68] sm:$0xff] %v769
    %1242 = vst [vmem:[#allocation3 + $0x70] sm:$0xff] %v774
    %1243 = vst [vmem:[#allocation3 + $0x78] sm:$0xff] %v777
    %1244 = vst [vmem:[#allocation3 + $0x80] sm:$0xff] %v782
    %1245 = vst [vmem:[#allocation3 + $0x88] sm:$0xff] %v785
    %1246 = vst [vmem:[#allocation3 + $0x90] sm:$0xff] %v790
    %1247 = vst [vmem:[#allocation3 + $0x98] sm:$0xff] %v793
    %1248 = vst [vmem:[#allocation3 + $0xa0] sm:$0xff] %v798
    %1249 = vst [vmem:[#allocation3 + $0xa8] sm:$0xff] %v801
    %1250 = vst [vmem:[#allocation3 + $0xb0] sm:$0xff] %v806
    %1251 = vst [vmem:[#allocation3 + $0xb8] sm:$0xff] %v809
    %1252 = vst [vmem:[#allocation3 + $0xc0] sm:$0xff] %v814
    %1253 = vst [vmem:[#allocation3 + $0xc8] sm:$0xff] %v817
    %1254 = vst [vmem:[#allocation3 + $0xd0] sm:$0xff] %v822
    %1255 = vst [vmem:[#allocation3 + $0xd8] sm:$0xff] %v825
    %1256 = vst [vmem:[#allocation3 + $0xe0] sm:$0xff] %v830
    %1257 = vst [vmem:[#allocation3 + $0xe8] sm:$0xff] %v833
    %1258 = vst [vmem:[#allocation3 + $0xf0] sm:$0xff] %v838
    %1259 = vst [vmem:[#allocation3 + $0xf8] sm:$0xff] %v841
    %1260 = vst [vmem:[#allocation3 + $0x100] sm:$0xff] %v846
    %1261 = vst [vmem:[#allocation3 + $0x108] sm:$0xff] %v849
    %1262 = vst [vmem:[#allocation3 + $0x110] sm:$0xff] %v854
    %1263 = vst [vmem:[#allocation3 + $0x118] sm:$0xff] %v857
    %1264 = vst [vmem:[#allocation3 + $0x120] sm:$0xff] %v862
    %1265 = vst [vmem:[#allocation3 + $0x128] sm:$0xff] %v865
    %1266 = vst [vmem:[#allocation3 + $0x130] sm:$0xff] %v870
    %1267 = vst [vmem:[#allocation3 + $0x138] sm:$0xff] %v873
    %1268 = vst [vmem:[#allocation3 + $0x140] sm:$0xff] %v878
    %1269 = vst [vmem:[#allocation3 + $0x148] sm:$0xff] %v881
    %1270 = vst [vmem:[#allocation3 + $0x150] sm:$0xff] %v886
    %1271 = vst [vmem:[#allocation3 + $0x158] sm:$0xff] %v889
    %1272 = vst [vmem:[#allocation3 + $0x160] sm:$0xff] %v894
    %1273 = vst [vmem:[#allocation3 + $0x168] sm:$0xff] %v897
    %1274 = vst [vmem:[#allocation3 + $0x170] sm:$0xff] %v902
    %1275 = vst [vmem:[#allocation3 + $0x178] sm:$0xff] %v905
    %1276 = vst [vmem:[#allocation3 + $0x180] sm:$0xff] %v910
    %1277 = vst [vmem:[#allocation3 + $0x188] sm:$0xff] %v913
    %1278 = vst [vmem:[#allocation3 + $0x190] sm:$0xff] %v918
    %1279 = vst [vmem:[#allocation3 + $0x198] sm:$0xff] %v921
    %1280 = vst [vmem:[#allocation3 + $0x1a0] sm:$0xff] %v926
    %1281 = vst [vmem:[#allocation3 + $0x1a8] sm:$0xff] %v929
    %1282 = vst [vmem:[#allocation3 + $0x1b0] sm:$0xff] %v934
    %1283 = vst [vmem:[#allocation3 + $0x1b8] sm:$0xff] %v937
    %1284 = vst [vmem:[#allocation3 + $0x1c0] sm:$0xff] %v942
    %1285 = vst [vmem:[#allocation3 + $0x1c8] sm:$0xff] %v945
    %1286 = vst [vmem:[#allocation3 + $0x1d0] sm:$0xff] %v950
    %1287 = vst [vmem:[#allocation3 + $0x1d8] sm:$0xff] %v953
    %1288 = vst [vmem:[#allocation3 + $0x1e0] sm:$0xff] %v958
    %1289 = vst [vmem:[#allocation3 + $0x1e8] sm:$0xff] %v961
    %1290 = vst [vmem:[#allocation3 + $0x1f0] sm:$0xff] %v966
    %1291 = vst [vmem:[#allocation3 + $0x1f8] sm:$0xff] %v969
    %1292 = vst [vmem:[#allocation3 + $0x200] sm:$0xff] %v974
    %1293 = vst [vmem:[#allocation3 + $0x208] sm:$0xff] %v977
    %1294 = vst [vmem:[#allocation3 + $0x210] sm:$0xff] %v982
    %1295 = vst [vmem:[#allocation3 + $0x218] sm:$0xff] %v985
    %1296 = vst [vmem:[#allocation3 + $0x220] sm:$0xff] %v990
    %1297 = vst [vmem:[#allocation3 + $0x228] sm:$0xff] %v993
    %1298 = vst [vmem:[#allocation3 + $0x230] sm:$0xff] %v998
    %1299 = vst [vmem:[#allocation3 + $0x238] sm:$0xff] %v1001
    %1300 = vst [vmem:[#allocation3 + $0x240] sm:$0xff] %v1006
    %1301 = vst [vmem:[#allocation3 + $0x248] sm:$0xff] %v1009
    %1302 = vst [vmem:[#allocation3 + $0x250] sm:$0xff] %v1014
    %1303 = vst [vmem:[#allocation3 + $0x258] sm:$0xff] %v1017
    %1304 = vst [vmem:[#allocation3 + $0x260] sm:$0xff] %v1022
    %1305 = vst [vmem:[#allocation3 + $0x268] sm:$0xff] %v1025
    %1306 = vst [vmem:[#allocation3 + $0x270] sm:$0xff] %v1030
    %1307 = vst [vmem:[#allocation3 + $0x278] sm:$0xff] %v1033
    %1308 = vst [vmem:[#allocation3 + $0x280] sm:$0xff] %v1038
    %1309 = vst [vmem:[#allocation3 + $0x288] sm:$0xff] %v1041
    %1310 = vst [vmem:[#allocation3 + $0x290] sm:$0xff] %v1046
    %1311 = vst [vmem:[#allocation3 + $0x298] sm:$0xff] %v1049
    %1312 = vst [vmem:[#allocation3 + $0x2a0] sm:$0xff] %v1054
    %1313 = vst [vmem:[#allocation3 + $0x2a8] sm:$0xff] %v1057
    %1314 = vst [vmem:[#allocation3 + $0x2b0] sm:$0xff] %v1062
    %1315 = vst [vmem:[#allocation3 + $0x2b8] sm:$0xff] %v1065
    %1316 = vst [vmem:[#allocation3 + $0x2c0] sm:$0xff] %v1070
    %1317 = vst [vmem:[#allocation3 + $0x2c8] sm:$0xff] %v1073
    %1318 = vst [vmem:[#allocation3 + $0x2d0] sm:$0xff] %v1078
    %1319 = vst [vmem:[#allocation3 + $0x2d8] sm:$0xff] %v1081
    %1320 = vst [vmem:[#allocation3 + $0x2e0] sm:$0xff] %v1086
    %1321 = vst [vmem:[#allocation3 + $0x2e8] sm:$0xff] %v1089
    %1322 = vst [vmem:[#allocation3 + $0x2f0] sm:$0xff] %v1094
    %1323 = vst [vmem:[#allocation3 + $0x2f8] sm:$0xff] %v1097
    %1324 = vst [vmem:[#allocation3 + $0x300] sm:$0xff] %v1102
    %1325 = vst [vmem:[#allocation3 + $0x308] sm:$0xff] %v1105
    %1326 = vst [vmem:[#allocation3 + $0x310] sm:$0xff] %v1110
    %1327 = vst [vmem:[#allocation3 + $0x318] sm:$0xff] %v1113
    %1328 = vst [vmem:[#allocation3 + $0x320] sm:$0xff] %v1118
    %1329 = vst [vmem:[#allocation3 + $0x328] sm:$0xff] %v1121
    %1330 = vst [vmem:[#allocation3 + $0x330] sm:$0xff] %v1126
    %1331 = vst [vmem:[#allocation3 + $0x338] sm:$0xff] %v1129
    %1332 = vst [vmem:[#allocation3 + $0x340] sm:$0xff] %v1134
    %1333 = vst [vmem:[#allocation3 + $0x348] sm:$0xff] %v1137
    %1334 = vst [vmem:[#allocation3 + $0x350] sm:$0xff] %v1142
    %1335 = vst [vmem:[#allocation3 + $0x358] sm:$0xff] %v1145
    %1336 = vst [vmem:[#allocation3 + $0x360] sm:$0xff] %v1150
    %1337 = vst [vmem:[#allocation3 + $0x368] sm:$0xff] %v1153
    %1338 = vst [vmem:[#allocation3 + $0x370] sm:$0xff] %v1158
    %1339 = vst [vmem:[#allocation3 + $0x378] sm:$0xff] %v1161
    %1340 = vst [vmem:[#allocation3 + $0x380] sm:$0xff] %v1166
    %1341 = vst [vmem:[#allocation3 + $0x388] sm:$0xff] %v1169
    %1342 = vst [vmem:[#allocation3 + $0x390] sm:$0xff] %v1174
    %1343 = vst [vmem:[#allocation3 + $0x398] sm:$0xff] %v1177
    %1344 = vst [vmem:[#allocation3 + $0x3a0] sm:$0xff] %v1182
    %1345 = vst [vmem:[#allocation3 + $0x3a8] sm:$0xff] %v1185
    %1346 = vst [vmem:[#allocation3 + $0x3b0] sm:$0xff] %v1190
    %1347 = vst [vmem:[#allocation3 + $0x3b8] sm:$0xff] %v1193
    %1348 = vst [vmem:[#allocation3 + $0x3c0] sm:$0xff] %v1198
    %1349 = vst [vmem:[#allocation3 + $0x3c8] sm:$0xff] %v1201
    %1350 = vst [vmem:[#allocation3 + $0x3d0] sm:$0xff] %v1206
    %1351 = vst [vmem:[#allocation3 + $0x3d8] sm:$0xff] %v1209
    %1352 = vst [vmem:[#allocation3 + $0x3e0] sm:$0xff] %v1214
    %1353 = vst [vmem:[#allocation3 + $0x3e8] sm:$0xff] %v1217
    %1354 = vst [vmem:[#allocation3 + $0x3f0] sm:$0xff] %v1222
    %1355 = vst [vmem:[#allocation3 + $0x3f8] sm:$0xff] %v1225
    %v1356 = vld [vmem:[#allocation2] sm:$0xff]
    %v1357 = vld [vmem:[#allocation2 + $0x8] sm:$0xff]
    %v1358 = vld [vmem:[#allocation2 + $0x10] sm:$0xff]
    %v1359 = vld [vmem:[#allocation2 + $0x18] sm:$0xff]
    %v1360 = vld [vmem:[#allocation2 + $0x20] sm:$0xff]
    %v1361 = vld [vmem:[#allocation2 + $0x28] sm:$0xff]
    %v1362 = vld [vmem:[#allocation2 + $0x30] sm:$0xff]
    %v1363 = vld [vmem:[#allocation2 + $0x38] sm:$0xff]
    %v1364 = vld [vmem:[#allocation2 + $0x40] sm:$0xff]
    %v1365 = vld [vmem:[#allocation2 + $0x48] sm:$0xff]
    %v1366 = vld [vmem:[#allocation2 + $0x50] sm:$0xff]
    %v1367 = vld [vmem:[#allocation2 + $0x58] sm:$0xff]
    %v1368 = vld [vmem:[#allocation2 + $0x60] sm:$0xff]
    %v1369 = vld [vmem:[#allocation2 + $0x68] sm:$0xff]
    %v1370 = vld [vmem:[#allocation2 + $0x70] sm:$0xff]
    %v1371 = vld [vmem:[#allocation2 + $0x78] sm:$0xff]
    %v1372 = vld [vmem:[#allocation3] sm:$0xff]
    %v1373 = vld [vmem:[#allocation3 + $0x8] sm:$0xff]
    %v1374 = vld [vmem:[#allocation3 + $0x10] sm:$0xff]
    %v1375 = vld [vmem:[#allocation3 + $0x18] sm:$0xff]
    %v1376 = vld [vmem:[#allocation3 + $0x20] sm:$0xff]
    %v1377 = vld [vmem:[#allocation3 + $0x28] sm:$0xff]
    %v1378 = vld [vmem:[#allocation3 + $0x30] sm:$0xff]
    %v1379 = vld [vmem:[#allocation3 + $0x38] sm:$0xff]
    %v1380 = vld [vmem:[#allocation3 + $0x40] sm:$0xff]
    %v1381 = vld [vmem:[#allocation3 + $0x48] sm:$0xff]
    %v1382 = vld [vmem:[#allocation3 + $0x50] sm:$0xff]
    %v1383 = vld [vmem:[#allocation3 + $0x58] sm:$0xff]
    %v1384 = vld [vmem:[#allocation3 + $0x60] sm:$0xff]
    %v1385 = vld [vmem:[#allocation3 + $0x68] sm:$0xff]
    %v1386 = vld [vmem:[#allocation3 + $0x70] sm:$0xff]
    %v1387 = vld [vmem:[#allocation3 + $0x78] sm:$0xff]
    %v1388 = vpack.c.bf16 %v1357, %v1356
    %v1389 = vpack.c.bf16 %v1359, %v1358
    %v1390 = vpack.c.bf16 %v1361, %v1360
    %v1391 = vpack.c.bf16 %v1363, %v1362
    %v1392 = vpack.c.bf16 %v1365, %v1364
    %v1393 = vpack.c.bf16 %v1367, %v1366
    %v1394 = vpack.c.bf16 %v1369, %v1368
    %v1395 = vpack.c.bf16 %v1371, %v1370
    %v1396 = vld [vmem:[#allocation9] sm:$0xf]
    %v1397 = vld [vmem:[#allocation9 + $0x4] sm:$0xf]
    %v1398 = vld [vmem:[#allocation9 + $0x8] sm:$0xf]
    %v1399 = vld [vmem:[#allocation9 + $0xc] sm:$0xf]
    %v1400 = vld [vmem:[#allocation9 + $0x10] sm:$0xf]
    %v1401 = vld [vmem:[#allocation9 + $0x14] sm:$0xf]
    %v1402 = vld [vmem:[#allocation9 + $0x18] sm:$0xf]
    %v1403 = vld [vmem:[#allocation9 + $0x1c] sm:$0xf]
    %v1404 = vld [vmem:[#allocation9 + $0x20] sm:$0xf]
    %v1405 = vld [vmem:[#allocation9 + $0x24] sm:$0xf]
    %v1406 = vld [vmem:[#allocation9 + $0x28] sm:$0xf]
    %v1407 = vld [vmem:[#allocation9 + $0x2c] sm:$0xf]
    %v1408 = vld [vmem:[#allocation9 + $0x30] sm:$0xf]
    %v1409 = vld [vmem:[#allocation9 + $0x34] sm:$0xf]
    %v1410 = vld [vmem:[#allocation9 + $0x38] sm:$0xf]
    %v1411 = vld [vmem:[#allocation9 + $0x3c] sm:$0xf]
    %v1428 = vunpack.c.l.b16 %v1396
    %v1429 = vunpack.c.l.b16 %v1397
    %v1430 = vunpack.c.l.b16 %v1398
    %v1431 = vunpack.c.l.b16 %v1399
    %v1432 = vunpack.c.l.b16 %v1400
    %v1433 = vunpack.c.l.b16 %v1401
    %v1434 = vunpack.c.l.b16 %v1402
    %v1435 = vunpack.c.l.b16 %v1403
    %v1436 = vunpack.c.l.b16 %v1404
    %v1437 = vunpack.c.l.b16 %v1405
    %v1438 = vunpack.c.l.b16 %v1406
    %v1439 = vunpack.c.l.b16 %v1407
    %v1440 = vunpack.c.l.b16 %v1408
    %v1441 = vunpack.c.l.b16 %v1409
    %v1442 = vunpack.c.l.b16 %v1410
    %v1443 = vunpack.c.l.b16 %v1411
    %v1444 = vpack.c.b16 %v1429, %v1428
    %v1445 = vpack.c.b16 %v1431, %v1430
    %v1446 = vpack.c.b16 %v1433, %v1432
    %v1447 = vpack.c.b16 %v1435, %v1434
    %v1448 = vpack.c.b16 %v1437, %v1436
    %v1449 = vpack.c.b16 %v1439, %v1438
    %v1450 = vpack.c.b16 %v1441, %v1440
    %v1451 = vpack.c.b16 %v1443, %v1442
    %1460 = vmatprep.subr.bf16.mxu0 0
    %1461 = vmatpush1.bf16.msra.mxu0 %v1451
    %1462 = vmatprep.subr.bf16.mxu0 0
    %1463 = vmatpush1.bf16.msra.mxu0 %v1450
    %1464 = vmatprep.subr.bf16.mxu0 0
    %1465 = vmatpush1.bf16.msra.mxu0 %v1449
    %1466 = vmatprep.subr.bf16.mxu0 0
    %1467 = vmatpush1.bf16.msra.mxu0 %v1448
    %1468 = vmatprep.subr.bf16.mxu0 0
    %1469 = vmatpush1.bf16.msra.mxu0 %v1447
    %1470 = vmatprep.subr.bf16.mxu0 0
    %1471 = vmatpush1.bf16.msra.mxu0 %v1446
    %1472 = vmatprep.subr.bf16.mxu0 0
    %1473 = vmatpush1.bf16.msra.mxu0 %v1445
    %1474 = vmatprep.subr.bf16.mxu0 0
    %1475 = vmatpush1.bf16.msra.mxu0 %v1444
    %1476 = vmatprep.subr.bf16.mxu0 0
    %1477 = vmatpush2.bf16.msra.mxu0 0
    %1478 = vmatprep.subr.bf16.mxu0 0
    %1479 = vmatpush2.bf16.msra.mxu0 0
    %1480 = vmatprep.subr.bf16.mxu0 0
    %1481 = vmatpush2.bf16.msra.mxu0 0
    %1482 = vmatprep.subr.bf16.mxu0 0
    %1483 = vmatpush2.bf16.msra.mxu0 0
    %1484 = vmatprep.subr.bf16.mxu0 0
    %1485 = vmatpush2.bf16.msra.mxu0 0
    %1486 = vmatprep.subr.bf16.mxu0 0
    %1487 = vmatpush2.bf16.msra.mxu0 0
    %1488 = vmatprep.subr.bf16.mxu0 0
    %1489 = vmatpush2.bf16.msra.mxu0 0
    %1490 = vmatprep.subr.bf16.mxu0 0
    %1491 = vmatpush2.bf16.msra.mxu0 0
    %1492 = vmatprep.mubr.bf16.mxu0 0
    %1493 = vmatmul.mubr.bf16.gmra.mxu0 %v1388
    %v1494 = vpop.f32.mrf.mxu0
    %v1495 = vadd.f32 0.0, %v1494
    %v1496 = vpop.f32.mrf.mxu0
    %v1497 = vpop.f32.mrf.mxu0
    %v1498 = vadd.f32 0.0, %v1497
    %v1499 = vpop.f32.mrf.mxu0
    %1500 = vmatprep.mubr.bf16.mxu0 0
    %1501 = vmatmul.mubr.bf16.gmra.mxu0 %v1389
    %v1502 = vpop.f32.mrf.mxu0
    %v1503 = vadd.f32 0.0, %v1502
    %v1504 = vpop.f32.mrf.mxu0
    %v1505 = vpop.f32.mrf.mxu0
    %v1506 = vadd.f32 0.0, %v1505
    %v1507 = vpop.f32.mrf.mxu0
    %1508 = vmatprep.mubr.bf16.mxu0 0
    %1509 = vmatmul.mubr.bf16.gmra.mxu0 %v1390
    %v1510 = vpop.f32.mrf.mxu0
    %v1511 = vadd.f32 0.0, %v1510
    %v1512 = vpop.f32.mrf.mxu0
    %v1513 = vpop.f32.mrf.mxu0
    %v1514 = vadd.f32 0.0, %v1513
    %v1515 = vpop.f32.mrf.mxu0
    %1516 = vmatprep.mubr.bf16.mxu0 0
    %1517 = vmatmul.mubr.bf16.gmra.mxu0 %v1391
    %v1518 = vpop.f32.mrf.mxu0
    %v1519 = vadd.f32 0.0, %v1518
    %v1520 = vpop.f32.mrf.mxu0
    %v1521 = vpop.f32.mrf.mxu0
    %v1522 = vadd.f32 0.0, %v1521
    %v1523 = vpop.f32.mrf.mxu0
    %1524 = vmatprep.mubr.bf16.mxu0 0
    %1525 = vmatmul.mubr.bf16.gmra.mxu0 %v1392
    %v1526 = vpop.f32.mrf.mxu0
    %v1527 = vadd.f32 0.0, %v1526
    %v1528 = vpop.f32.mrf.mxu0
    %v1529 = vpop.f32.mrf.mxu0
    %v1530 = vadd.f32 0.0, %v1529
    %v1531 = vpop.f32.mrf.mxu0
    %1532 = vmatprep.mubr.bf16.mxu0 0
    %1533 = vmatmul.mubr.bf16.gmra.mxu0 %v1393
    %v1534 = vpop.f32.mrf.mxu0
    %v1535 = vadd.f32 0.0, %v1534
    %v1536 = vpop.f32.mrf.mxu0
    %v1537 = vpop.f32.mrf.mxu0
    %v1538 = vadd.f32 0.0, %v1537
    %v1539 = vpop.f32.mrf.mxu0
    %1540 = vmatprep.mubr.bf16.mxu0 0
    %1541 = vmatmul.mubr.bf16.gmra.mxu0 %v1394
    %v1542 = vpop.f32.mrf.mxu0
    %v1543 = vadd.f32 0.0, %v1542
    %v1544 = vpop.f32.mrf.mxu0
    %v1545 = vpop.f32.mrf.mxu0
    %v1546 = vadd.f32 0.0, %v1545
    %v1547 = vpop.f32.mrf.mxu0
    %1548 = vmatprep.mubr.bf16.mxu0 0
    %1549 = vmatmul.mubr.bf16.gmra.mxu0 %v1395
    %v1550 = vpop.f32.mrf.mxu0
    %v1551 = vadd.f32 0.0, %v1550
    %v1552 = vpop.f32.mrf.mxu0
    %v1553 = vpop.f32.mrf.mxu0
    %v1554 = vadd.f32 0.0, %v1553
    %v1555 = vpop.f32.mrf.mxu0
    %1556 = vdwg.mxu0
    %v1557 = vadd.f32 %v1372, %v1495
    %v1558 = vadd.f32 %v1373, %v1498
    %v1559 = vadd.f32 %v1374, %v1503
    %v1560 = vadd.f32 %v1375, %v1506
    %v1561 = vadd.f32 %v1376, %v1511
    %v1562 = vadd.f32 %v1377, %v1514
    %v1563 = vadd.f32 %v1378, %v1519
    %v1564 = vadd.f32 %v1379, %v1522
    %v1565 = vadd.f32 %v1380, %v1527
    %v1566 = vadd.f32 %v1381, %v1530
    %v1567 = vadd.f32 %v1382, %v1535
    %v1568 = vadd.f32 %v1383, %v1538
    %v1569 = vadd.f32 %v1384, %v1543
    %v1570 = vadd.f32 %v1385, %v1546
    %v1571 = vadd.f32 %v1386, %v1551
    %v1572 = vadd.f32 %v1387, %v1554
    %v1573 = vtanh.pop %v1557
    %v1574 = vtanh.pop %v1558
    %v1575 = vtanh.pop %v1559
    %v1576 = vtanh.pop %v1560
    %v1577 = vtanh.pop %v1561
    %v1578 = vtanh.pop %v1562
    %v1579 = vtanh.pop %v1563
    %v1580 = vtanh.pop %v1564
    %v1581 = vtanh.pop %v1565
    %v1582 = vtanh.pop %v1566
    %v1583 = vtanh.pop %v1567
    %v1584 = vtanh.pop %v1568
    %v1585 = vtanh.pop %v1569
    %v1586 = vtanh.pop %v1570
    %v1587 = vtanh.pop %v1571
    %v1588 = vtanh.pop %v1572
    %s1589 = scalar_lea.vmem [#allocation3], 128
    %v1590 = vld [vmem:[%s1589] sm:$0xff]
    %v1591 = vld [vmem:[%s1589 + $0x8] sm:$0xff]
    %v1592 = vld [vmem:[%s1589 + $0x10] sm:$0xff]
    %v1593 = vld [vmem:[%s1589 + $0x18] sm:$0xff]
    %v1594 = vld [vmem:[%s1589 + $0x20] sm:$0xff]
    %v1595 = vld [vmem:[%s1589 + $0x28] sm:$0xff]
    %v1596 = vld [vmem:[%s1589 + $0x30] sm:$0xff]
    %v1597 = vld [vmem:[%s1589 + $0x38] sm:$0xff]
    %v1598 = vld [vmem:[%s1589 + $0x40] sm:$0xff]
    %v1599 = vld [vmem:[%s1589 + $0x48] sm:$0xff]
    %v1600 = vld [vmem:[%s1589 + $0x50] sm:$0xff]
    %v1601 = vld [vmem:[%s1589 + $0x58] sm:$0xff]
    %v1602 = vld [vmem:[%s1589 + $0x60] sm:$0xff]
    %v1603 = vld [vmem:[%s1589 + $0x68] sm:$0xff]
    %v1604 = vld [vmem:[%s1589 + $0x70] sm:$0xff]
    %v1605 = vld [vmem:[%s1589 + $0x78] sm:$0xff]
    %v1606 = vpack.c.bf16 %v1574, %v1573
    %v1607 = vpack.c.bf16 %v1576, %v1575
    %v1608 = vpack.c.bf16 %v1578, %v1577
    %v1609 = vpack.c.bf16 %v1580, %v1579
    %v1610 = vpack.c.bf16 %v1582, %v1581
    %v1611 = vpack.c.bf16 %v1584, %v1583
    %v1612 = vpack.c.bf16 %v1586, %v1585
    %v1613 = vpack.c.bf16 %v1588, %v1587
    %1614 = vmatprep.subr.bf16.mxu0 0
    %1615 = vmatpush1.bf16.msra.mxu0 %v1451
    %1616 = vmatprep.subr.bf16.mxu0 0
    %1617 = vmatpush1.bf16.msra.mxu0 %v1450
    %1618 = vmatprep.subr.bf16.mxu0 0
    %1619 = vmatpush1.bf16.msra.mxu0 %v1449
    %1620 = vmatprep.subr.bf16.mxu0 0
    %1621 = vmatpush1.bf16.msra.mxu0 %v1448
    %1622 = vmatprep.subr.bf16.mxu0 0
    %1623 = vmatpush1.bf16.msra.mxu0 %v1447
    %1624 = vmatprep.subr.bf16.mxu0 0
    %1625 = vmatpush1.bf16.msra.mxu0 %v1446
    %1626 = vmatprep.subr.bf16.mxu0 0
    %1627 = vmatpush1.bf16.msra.mxu0 %v1445
    %1628 = vmatprep.subr.bf16.mxu0 0
    %1629 = vmatpush1.bf16.msra.mxu0 %v1444
    %1630 = vmatprep.subr.bf16.mxu0 0
    %1631 = vmatpush2.bf16.msra.mxu0 0
    %1632 = vmatprep.subr.bf16.mxu0 0
    %1633 = vmatpush2.bf16.msra.mxu0 0
    %1634 = vmatprep.subr.bf16.mxu0 0
    %1635 = vmatpush2.bf16.msra.mxu0 0
    %1636 = vmatprep.subr.bf16.mxu0 0
    %1637 = vmatpush2.bf16.msra.mxu0 0
    %1638 = vmatprep.subr.bf16.mxu0 0
    %1639 = vmatpush2.bf16.msra.mxu0 0
    %1640 = vmatprep.subr.bf16.mxu0 0
    %1641 = vmatpush2.bf16.msra.mxu0 0
    %1642 = vmatprep.subr.bf16.mxu0 0
    %1643 = vmatpush2.bf16.msra.mxu0 0
    %1644 = vmatprep.subr.bf16.mxu0 0
    %1645 = vmatpush2.bf16.msra.mxu0 0
    %1646 = vmatprep.mubr.bf16.mxu0 0
    %1647 = vmatmul.mubr.bf16.gmra.mxu0 %v1606
    %v1648 = vpop.f32.mrf.mxu0
    %v1649 = vadd.f32 0.0, %v1648
    %v1650 = vpop.f32.mrf.mxu0
    %v1651 = vpop.f32.mrf.mxu0
    %v1652 = vadd.f32 0.0, %v1651
    %v1653 = vpop.f32.mrf.mxu0
    %1654 = vmatprep.mubr.bf16.mxu0 0
    %1655 = vmatmul.mubr.bf16.gmra.mxu0 %v1607
    %v1656 = vpop.f32.mrf.mxu0
    %v1657 = vadd.f32 0.0, %v1656
    %v1658 = vpop.f32.mrf.mxu0
    %v1659 = vpop.f32.mrf.mxu0
    %v1660 = vadd.f32 0.0, %v1659
    %v1661 = vpop.f32.mrf.mxu0
    %1662 = vmatprep.mubr.bf16.mxu0 0
    %1663 = vmatmul.mubr.bf16.gmra.mxu0 %v1608
    %v1664 = vpop.f32.mrf.mxu0
    %v1665 = vadd.f32 0.0, %v1664
    %v1666 = vpop.f32.mrf.mxu0
    %v1667 = vpop.f32.mrf.mxu0
    %v1668 = vadd.f32 0.0, %v1667
    %v1669 = vpop.f32.mrf.mxu0
    %1670 = vmatprep.mubr.bf16.mxu0 0
    %1671 = vmatmul.mubr.bf16.gmra.mxu0 %v1609
    %v1672 = vpop.f32.mrf.mxu0
    %v1673 = vadd.f32 0.0, %v1672
    %v1674 = vpop.f32.mrf.mxu0
    %v1675 = vpop.f32.mrf.mxu0
    %v1676 = vadd.f32 0.0, %v1675
    %v1677 = vpop.f32.mrf.mxu0
    %1678 = vmatprep.mubr.bf16.mxu0 0
    %1679 = vmatmul.mubr.bf16.gmra.mxu0 %v1610
    %v1680 = vpop.f32.mrf.mxu0
    %v1681 = vadd.f32 0.0, %v1680
    %v1682 = vpop.f32.mrf.mxu0
    %v1683 = vpop.f32.mrf.mxu0
    %v1684 = vadd.f32 0.0, %v1683
    %v1685 = vpop.f32.mrf.mxu0
    %1686 = vmatprep.mubr.bf16.mxu0 0
    %1687 = vmatmul.mubr.bf16.gmra.mxu0 %v1611
    %v1688 = vpop.f32.mrf.mxu0
    %v1689 = vadd.f32 0.0, %v1688
    %v1690 = vpop.f32.mrf.mxu0
    %v1691 = vpop.f32.mrf.mxu0
    %v1692 = vadd.f32 0.0, %v1691
    %v1693 = vpop.f32.mrf.mxu0
    %1694 = vmatprep.mubr.bf16.mxu0 0
    %1695 = vmatmul.mubr.bf16.gmra.mxu0 %v1612
    %v1696 = vpop.f32.mrf.mxu0
    %v1697 = vadd.f32 0.0, %v1696
    %v1698 = vpop.f32.mrf.mxu0
    %v1699 = vpop.f32.mrf.mxu0
    %v1700 = vadd.f32 0.0, %v1699
    %v1701 = vpop.f32.mrf.mxu0
    %1702 = vmatprep.mubr.bf16.mxu0 0
    %1703 = vmatmul.mubr.bf16.gmra.mxu0 %v1613
    %v1704 = vpop.f32.mrf.mxu0
    %v1705 = vadd.f32 0.0, %v1704
    %v1706 = vpop.f32.mrf.mxu0
    %v1707 = vpop.f32.mrf.mxu0
    %v1708 = vadd.f32 0.0, %v1707
    %v1709 = vpop.f32.mrf.mxu0
    %1710 = vdwg.mxu0
    %v1711 = vadd.f32 %v1590, %v1649
    %v1712 = vadd.f32 %v1591, %v1652
    %v1713 = vadd.f32 %v1592, %v1657
    %v1714 = vadd.f32 %v1593, %v1660
    %v1715 = vadd.f32 %v1594, %v1665
    %v1716 = vadd.f32 %v1595, %v1668
    %v1717 = vadd.f32 %v1596, %v1673
    %v1718 = vadd.f32 %v1597, %v1676
    %v1719 = vadd.f32 %v1598, %v1681
    %v1720 = vadd.f32 %v1599, %v1684
    %v1721 = vadd.f32 %v1600, %v1689
    %v1722 = vadd.f32 %v1601, %v1692
    %v1723 = vadd.f32 %v1602, %v1697
    %v1724 = vadd.f32 %v1603, %v1700
    %v1725 = vadd.f32 %v1604, %v1705
    %v1726 = vadd.f32 %v1605, %v1708
    %v1727 = vtanh.pop %v1711
    %v1728 = vtanh.pop %v1712
    %v1729 = vtanh.pop %v1713
    %v1730 = vtanh.pop %v1714
    %v1731 = vtanh.pop %v1715
    %v1732 = vtanh.pop %v1716
    %v1733 = vtanh.pop %v1717
    %v1734 = vtanh.pop %v1718
    %v1735 = vtanh.pop %v1719
    %v1736 = vtanh.pop %v1720
    %v1737 = vtanh.pop %v1721
    %v1738 = vtanh.pop %v1722
    %v1739 = vtanh.pop %v1723
    %v1740 = vtanh.pop %v1724
    %v1741 = vtanh.pop %v1725
    %v1742 = vtanh.pop %v1726
    %s1743 = scalar_lea.vmem [#allocation3], 256
    %v1744 = vld [vmem:[%s1743] sm:$0xff]
    %v1745 = vld [vmem:[%s1743 + $0x8] sm:$0xff]
    %v1746 = vld [vmem:[%s1743 + $0x10] sm:$0xff]
    %v1747 = vld [vmem:[%s1743 + $0x18] sm:$0xff]
    %v1748 = vld [vmem:[%s1743 + $0x20] sm:$0xff]
    %v1749 = vld [vmem:[%s1743 + $0x28] sm:$0xff]
    %v1750 = vld [vmem:[%s1743 + $0x30] sm:$0xff]
    %v1751 = vld [vmem:[%s1743 + $0x38] sm:$0xff]
    %v1752 = vld [vmem:[%s1743 + $0x40] sm:$0xff]
    %v1753 = vld [vmem:[%s1743 + $0x48] sm:$0xff]
    %v1754 = vld [vmem:[%s1743 + $0x50] sm:$0xff]
    %v1755 = vld [vmem:[%s1743 + $0x58] sm:$0xff]
    %v1756 = vld [vmem:[%s1743 + $0x60] sm:$0xff]
    %v1757 = vld [vmem:[%s1743 + $0x68] sm:$0xff]
    %v1758 = vld [vmem:[%s1743 + $0x70] sm:$0xff]
    %v1759 = vld [vmem:[%s1743 + $0x78] sm:$0xff]
    %v1760 = vpack.c.bf16 %v1728, %v1727
    %v1761 = vpack.c.bf16 %v1730, %v1729
    %v1762 = vpack.c.bf16 %v1732, %v1731
    %v1763 = vpack.c.bf16 %v1734, %v1733
    %v1764 = vpack.c.bf16 %v1736, %v1735
    %v1765 = vpack.c.bf16 %v1738, %v1737
    %v1766 = vpack.c.bf16 %v1740, %v1739
    %v1767 = vpack.c.bf16 %v1742, %v1741
    %1768 = vmatprep.subr.bf16.mxu0 0
    %1769 = vmatpush1.bf16.msra.mxu0 %v1451
    %1770 = vmatprep.subr.bf16.mxu0 0
    %1771 = vmatpush1.bf16.msra.mxu0 %v1450
    %1772 = vmatprep.subr.bf16.mxu0 0
    %1773 = vmatpush1.bf16.msra.mxu0 %v1449
    %1774 = vmatprep.subr.bf16.mxu0 0
    %1775 = vmatpush1.bf16.msra.mxu0 %v1448
    %1776 = vmatprep.subr.bf16.mxu0 0
    %1777 = vmatpush1.bf16.msra.mxu0 %v1447
    %1778 = vmatprep.subr.bf16.mxu0 0
    %1779 = vmatpush1.bf16.msra.mxu0 %v1446
    %1780 = vmatprep.subr.bf16.mxu0 0
    %1781 = vmatpush1.bf16.msra.mxu0 %v1445
    %1782 = vmatprep.subr.bf16.mxu0 0
    %1783 = vmatpush1.bf16.msra.mxu0 %v1444
    %1784 = vmatprep.subr.bf16.mxu0 0
    %1785 = vmatpush2.bf16.msra.mxu0 0
    %1786 = vmatprep.subr.bf16.mxu0 0
    %1787 = vmatpush2.bf16.msra.mxu0 0
    %1788 = vmatprep.subr.bf16.mxu0 0
    %1789 = vmatpush2.bf16.msra.mxu0 0
    %1790 = vmatprep.subr.bf16.mxu0 0
    %1791 = vmatpush2.bf16.msra.mxu0 0
    %1792 = vmatprep.subr.bf16.mxu0 0
    %1793 = vmatpush2.bf16.msra.mxu0 0
    %1794 = vmatprep.subr.bf16.mxu0 0
    %1795 = vmatpush2.bf16.msra.mxu0 0
    %1796 = vmatprep.subr.bf16.mxu0 0
    %1797 = vmatpush2.bf16.msra.mxu0 0
    %1798 = vmatprep.subr.bf16.mxu0 0
    %1799 = vmatpush2.bf16.msra.mxu0 0
    %1800 = vmatprep.mubr.bf16.mxu0 0
    %1801 = vmatmul.mubr.bf16.gmra.mxu0 %v1760
    %v1802 = vpop.f32.mrf.mxu0
    %v1803 = vadd.f32 0.0, %v1802
    %v1804 = vpop.f32.mrf.mxu0
    %v1805 = vpop.f32.mrf.mxu0
    %v1806 = vadd.f32 0.0, %v1805
    %v1807 = vpop.f32.mrf.mxu0
    %1808 = vmatprep.mubr.bf16.mxu0 0
    %1809 = vmatmul.mubr.bf16.gmra.mxu0 %v1761
    %v1810 = vpop.f32.mrf.mxu0
    %v1811 = vadd.f32 0.0, %v1810
    %v1812 = vpop.f32.mrf.mxu0
    %v1813 = vpop.f32.mrf.mxu0
    %v1814 = vadd.f32 0.0, %v1813
    %v1815 = vpop.f32.mrf.mxu0
    %1816 = vmatprep.mubr.bf16.mxu0 0
    %1817 = vmatmul.mubr.bf16.gmra.mxu0 %v1762
    %v1818 = vpop.f32.mrf.mxu0
    %v1819 = vadd.f32 0.0, %v1818
    %v1820 = vpop.f32.mrf.mxu0
    %v1821 = vpop.f32.mrf.mxu0
    %v1822 = vadd.f32 0.0, %v1821
    %v1823 = vpop.f32.mrf.mxu0
    %1824 = vmatprep.mubr.bf16.mxu0 0
    %1825 = vmatmul.mubr.bf16.gmra.mxu0 %v1763
    %v1826 = vpop.f32.mrf.mxu0
    %v1827 = vadd.f32 0.0, %v1826
    %v1828 = vpop.f32.mrf.mxu0
    %v1829 = vpop.f32.mrf.mxu0
    %v1830 = vadd.f32 0.0, %v1829
    %v1831 = vpop.f32.mrf.mxu0
    %1832 = vmatprep.mubr.bf16.mxu0 0
    %1833 = vmatmul.mubr.bf16.gmra.mxu0 %v1764
    %v1834 = vpop.f32.mrf.mxu0
    %v1835 = vadd.f32 0.0, %v1834
    %v1836 = vpop.f32.mrf.mxu0
    %v1837 = vpop.f32.mrf.mxu0
    %v1838 = vadd.f32 0.0, %v1837
    %v1839 = vpop.f32.mrf.mxu0
    %1840 = vmatprep.mubr.bf16.mxu0 0
    %1841 = vmatmul.mubr.bf16.gmra.mxu0 %v1765
    %v1842 = vpop.f32.mrf.mxu0
    %v1843 = vadd.f32 0.0, %v1842
    %v1844 = vpop.f32.mrf.mxu0
    %v1845 = vpop.f32.mrf.mxu0
    %v1846 = vadd.f32 0.0, %v1845
    %v1847 = vpop.f32.mrf.mxu0
    %1848 = vmatprep.mubr.bf16.mxu0 0
    %1849 = vmatmul.mubr.bf16.gmra.mxu0 %v1766
    %v1850 = vpop.f32.mrf.mxu0
    %v1851 = vadd.f32 0.0, %v1850
    %v1852 = vpop.f32.mrf.mxu0
    %v1853 = vpop.f32.mrf.mxu0
    %v1854 = vadd.f32 0.0, %v1853
    %v1855 = vpop.f32.mrf.mxu0
    %1856 = vmatprep.mubr.bf16.mxu0 0
    %1857 = vmatmul.mubr.bf16.gmra.mxu0 %v1767
    %v1858 = vpop.f32.mrf.mxu0
    %v1859 = vadd.f32 0.0, %v1858
    %v1860 = vpop.f32.mrf.mxu0
    %v1861 = vpop.f32.mrf.mxu0
    %v1862 = vadd.f32 0.0, %v1861
    %v1863 = vpop.f32.mrf.mxu0
    %1864 = vdwg.mxu0
    %v1865 = vadd.f32 %v1744, %v1803
    %v1866 = vadd.f32 %v1745, %v1806
    %v1867 = vadd.f32 %v1746, %v1811
    %v1868 = vadd.f32 %v1747, %v1814
    %v1869 = vadd.f32 %v1748, %v1819
    %v1870 = vadd.f32 %v1749, %v1822
    %v1871 = vadd.f32 %v1750, %v1827
    %v1872 = vadd.f32 %v1751, %v1830
    %v1873 = vadd.f32 %v1752, %v1835
    %v1874 = vadd.f32 %v1753, %v1838
    %v1875 = vadd.f32 %v1754, %v1843
    %v1876 = vadd.f32 %v1755, %v1846
    %v1877 = vadd.f32 %v1756, %v1851
    %v1878 = vadd.f32 %v1757, %v1854
    %v1879 = vadd.f32 %v1758, %v1859
    %v1880 = vadd.f32 %v1759, %v1862
    %v1881 = vtanh.pop %v1865
    %v1882 = vtanh.pop %v1866
    %v1883 = vtanh.pop %v1867
    %v1884 = vtanh.pop %v1868
    %v1885 = vtanh.pop %v1869
    %v1886 = vtanh.pop %v1870
    %v1887 = vtanh.pop %v1871
    %v1888 = vtanh.pop %v1872
    %v1889 = vtanh.pop %v1873
    %v1890 = vtanh.pop %v1874
    %v1891 = vtanh.pop %v1875
    %v1892 = vtanh.pop %v1876
    %v1893 = vtanh.pop %v1877
    %v1894 = vtanh.pop %v1878
    %v1895 = vtanh.pop %v1879
    %v1896 = vtanh.pop %v1880
    %s1897 = scalar_lea.vmem [#allocation3], 384
    %v1898 = vld [vmem:[%s1897] sm:$0xff]
    %v1899 = vld [vmem:[%s1897 + $0x8] sm:$0xff]
    %v1900 = vld [vmem:[%s1897 + $0x10] sm:$0xff]
    %v1901 = vld [vmem:[%s1897 + $0x18] sm:$0xff]
    %v1902 = vld [vmem:[%s1897 + $0x20] sm:$0xff]
    %v1903 = vld [vmem:[%s1897 + $0x28] sm:$0xff]
    %v1904 = vld [vmem:[%s1897 + $0x30] sm:$0xff]
    %v1905 = vld [vmem:[%s1897 + $0x38] sm:$0xff]
    %v1906 = vld [vmem:[%s1897 + $0x40] sm:$0xff]
    %v1907 = vld [vmem:[%s1897 + $0x48] sm:$0xff]
    %v1908 = vld [vmem:[%s1897 + $0x50] sm:$0xff]
    %v1909 = vld [vmem:[%s1897 + $0x58] sm:$0xff]
    %v1910 = vld [vmem:[%s1897 + $0x60] sm:$0xff]
    %v1911 = vld [vmem:[%s1897 + $0x68] sm:$0xff]
    %v1912 = vld [vmem:[%s1897 + $0x70] sm:$0xff]
    %v1913 = vld [vmem:[%s1897 + $0x78] sm:$0xff]
    %v1914 = vpack.c.bf16 %v1882, %v1881
    %v1915 = vpack.c.bf16 %v1884, %v1883
    %v1916 = vpack.c.bf16 %v1886, %v1885
    %v1917 = vpack.c.bf16 %v1888, %v1887
    %v1918 = vpack.c.bf16 %v1890, %v1889
    %v1919 = vpack.c.bf16 %v1892, %v1891
    %v1920 = vpack.c.bf16 %v1894, %v1893
    %v1921 = vpack.c.bf16 %v1896, %v1895
    %1922 = vmatprep.subr.bf16.mxu0 0
    %1923 = vmatpush1.bf16.msra.mxu0 %v1451
    %1924 = vmatprep.subr.bf16.mxu0 0
    %1925 = vmatpush1.bf16.msra.mxu0 %v1450
    %1926 = vmatprep.subr.bf16.mxu0 0
    %1927 = vmatpush1.bf16.msra.mxu0 %v1449
    %1928 = vmatprep.subr.bf16.mxu0 0
    %1929 = vmatpush1.bf16.msra.mxu0 %v1448
    %1930 = vmatprep.subr.bf16.mxu0 0
    %1931 = vmatpush1.bf16.msra.mxu0 %v1447
    %1932 = vmatprep.subr.bf16.mxu0 0
    %1933 = vmatpush1.bf16.msra.mxu0 %v1446
    %1934 = vmatprep.subr.bf16.mxu0 0
    %1935 = vmatpush1.bf16.msra.mxu0 %v1445
    %1936 = vmatprep.subr.bf16.mxu0 0
    %1937 = vmatpush1.bf16.msra.mxu0 %v1444
    %1938 = vmatprep.subr.bf16.mxu0 0
    %1939 = vmatpush2.bf16.msra.mxu0 0
    %1940 = vmatprep.subr.bf16.mxu0 0
    %1941 = vmatpush2.bf16.msra.mxu0 0
    %1942 = vmatprep.subr.bf16.mxu0 0
    %1943 = vmatpush2.bf16.msra.mxu0 0
    %1944 = vmatprep.subr.bf16.mxu0 0
    %1945 = vmatpush2.bf16.msra.mxu0 0
    %1946 = vmatprep.subr.bf16.mxu0 0
    %1947 = vmatpush2.bf16.msra.mxu0 0
    %1948 = vmatprep.subr.bf16.mxu0 0
    %1949 = vmatpush2.bf16.msra.mxu0 0
    %1950 = vmatprep.subr.bf16.mxu0 0
    %1951 = vmatpush2.bf16.msra.mxu0 0
    %1952 = vmatprep.subr.bf16.mxu0 0
    %1953 = vmatpush2.bf16.msra.mxu0 0
    %1954 = vmatprep.mubr.bf16.mxu0 0
    %1955 = vmatmul.mubr.bf16.gmra.mxu0 %v1914
    %v1956 = vpop.f32.mrf.mxu0
    %v1957 = vadd.f32 0.0, %v1956
    %v1958 = vpop.f32.mrf.mxu0
    %v1959 = vpop.f32.mrf.mxu0
    %v1960 = vadd.f32 0.0, %v1959
    %v1961 = vpop.f32.mrf.mxu0
    %1962 = vmatprep.mubr.bf16.mxu0 0
    %1963 = vmatmul.mubr.bf16.gmra.mxu0 %v1915
    %v1964 = vpop.f32.mrf.mxu0
    %v1965 = vadd.f32 0.0, %v1964
    %v1966 = vpop.f32.mrf.mxu0
    %v1967 = vpop.f32.mrf.mxu0
    %v1968 = vadd.f32 0.0, %v1967
    %v1969 = vpop.f32.mrf.mxu0
    %1970 = vmatprep.mubr.bf16.mxu0 0
    %1971 = vmatmul.mubr.bf16.gmra.mxu0 %v1916
    %v1972 = vpop.f32.mrf.mxu0
    %v1973 = vadd.f32 0.0, %v1972
    %v1974 = vpop.f32.mrf.mxu0
    %v1975 = vpop.f32.mrf.mxu0
    %v1976 = vadd.f32 0.0, %v1975
    %v1977 = vpop.f32.mrf.mxu0
    %1978 = vmatprep.mubr.bf16.mxu0 0
    %1979 = vmatmul.mubr.bf16.gmra.mxu0 %v1917
    %v1980 = vpop.f32.mrf.mxu0
    %v1981 = vadd.f32 0.0, %v1980
    %v1982 = vpop.f32.mrf.mxu0
    %v1983 = vpop.f32.mrf.mxu0
    %v1984 = vadd.f32 0.0, %v1983
    %v1985 = vpop.f32.mrf.mxu0
    %1986 = vmatprep.mubr.bf16.mxu0 0
    %1987 = vmatmul.mubr.bf16.gmra.mxu0 %v1918
    %v1988 = vpop.f32.mrf.mxu0
    %v1989 = vadd.f32 0.0, %v1988
    %v1990 = vpop.f32.mrf.mxu0
    %v1991 = vpop.f32.mrf.mxu0
    %v1992 = vadd.f32 0.0, %v1991
    %v1993 = vpop.f32.mrf.mxu0
    %1994 = vmatprep.mubr.bf16.mxu0 0
    %1995 = vmatmul.mubr.bf16.gmra.mxu0 %v1919
    %v1996 = vpop.f32.mrf.mxu0
    %v1997 = vadd.f32 0.0, %v1996
    %v1998 = vpop.f32.mrf.mxu0
    %v1999 = vpop.f32.mrf.mxu0
    %v2000 = vadd.f32 0.0, %v1999
    %v2001 = vpop.f32.mrf.mxu0
    %2002 = vmatprep.mubr.bf16.mxu0 0
    %2003 = vmatmul.mubr.bf16.gmra.mxu0 %v1920
    %v2004 = vpop.f32.mrf.mxu0
    %v2005 = vadd.f32 0.0, %v2004
    %v2006 = vpop.f32.mrf.mxu0
    %v2007 = vpop.f32.mrf.mxu0
    %v2008 = vadd.f32 0.0, %v2007
    %v2009 = vpop.f32.mrf.mxu0
    %2010 = vmatprep.mubr.bf16.mxu0 0
    %2011 = vmatmul.mubr.bf16.gmra.mxu0 %v1921
    %v2012 = vpop.f32.mrf.mxu0
    %v2013 = vadd.f32 0.0, %v2012
    %v2014 = vpop.f32.mrf.mxu0
    %v2015 = vpop.f32.mrf.mxu0
    %v2016 = vadd.f32 0.0, %v2015
    %v2017 = vpop.f32.mrf.mxu0
    %2018 = vdwg.mxu0
    %v2019 = vadd.f32 %v1898, %v1957
    %v2020 = vadd.f32 %v1899, %v1960
    %v2021 = vadd.f32 %v1900, %v1965
    %v2022 = vadd.f32 %v1901, %v1968
    %v2023 = vadd.f32 %v1902, %v1973
    %v2024 = vadd.f32 %v1903, %v1976
    %v2025 = vadd.f32 %v1904, %v1981
    %v2026 = vadd.f32 %v1905, %v1984
    %v2027 = vadd.f32 %v1906, %v1989
    %v2028 = vadd.f32 %v1907, %v1992
    %v2029 = vadd.f32 %v1908, %v1997
    %v2030 = vadd.f32 %v1909, %v2000
    %v2031 = vadd.f32 %v1910, %v2005
    %v2032 = vadd.f32 %v1911, %v2008
    %v2033 = vadd.f32 %v1912, %v2013
    %v2034 = vadd.f32 %v1913, %v2016
    %v2035 = vtanh.pop %v2019
    %v2036 = vtanh.pop %v2020
    %v2037 = vtanh.pop %v2021
    %v2038 = vtanh.pop %v2022
    %v2039 = vtanh.pop %v2023
    %v2040 = vtanh.pop %v2024
    %v2041 = vtanh.pop %v2025
    %v2042 = vtanh.pop %v2026
    %v2043 = vtanh.pop %v2027
    %v2044 = vtanh.pop %v2028
    %v2045 = vtanh.pop %v2029
    %v2046 = vtanh.pop %v2030
    %v2047 = vtanh.pop %v2031
    %v2048 = vtanh.pop %v2032
    %v2049 = vtanh.pop %v2033
    %v2050 = vtanh.pop %v2034
    %s2051 = scalar_lea.vmem [#allocation3], 512
    %v2052 = vld [vmem:[%s2051] sm:$0xff]
    %v2053 = vld [vmem:[%s2051 + $0x8] sm:$0xff]
    %v2054 = vld [vmem:[%s2051 + $0x10] sm:$0xff]
    %v2055 = vld [vmem:[%s2051 + $0x18] sm:$0xff]
    %v2056 = vld [vmem:[%s2051 + $0x20] sm:$0xff]
    %v2057 = vld [vmem:[%s2051 + $0x28] sm:$0xff]
    %v2058 = vld [vmem:[%s2051 + $0x30] sm:$0xff]
    %v2059 = vld [vmem:[%s2051 + $0x38] sm:$0xff]
    %v2060 = vld [vmem:[%s2051 + $0x40] sm:$0xff]
    %v2061 = vld [vmem:[%s2051 + $0x48] sm:$0xff]
    %v2062 = vld [vmem:[%s2051 + $0x50] sm:$0xff]
    %v2063 = vld [vmem:[%s2051 + $0x58] sm:$0xff]
    %v2064 = vld [vmem:[%s2051 + $0x60] sm:$0xff]
    %v2065 = vld [vmem:[%s2051 + $0x68] sm:$0xff]
    %v2066 = vld [vmem:[%s2051 + $0x70] sm:$0xff]
    %v2067 = vld [vmem:[%s2051 + $0x78] sm:$0xff]
    %v2068 = vpack.c.bf16 %v2036, %v2035
    %v2069 = vpack.c.bf16 %v2038, %v2037
    %v2070 = vpack.c.bf16 %v2040, %v2039
    %v2071 = vpack.c.bf16 %v2042, %v2041
    %v2072 = vpack.c.bf16 %v2044, %v2043
    %v2073 = vpack.c.bf16 %v2046, %v2045
    %v2074 = vpack.c.bf16 %v2048, %v2047
    %v2075 = vpack.c.bf16 %v2050, %v2049
    %2076 = vmatprep.subr.bf16.mxu0 0
    %2077 = vmatpush1.bf16.msra.mxu0 %v1451
    %2078 = vmatprep.subr.bf16.mxu0 0
    %2079 = vmatpush1.bf16.msra.mxu0 %v1450
    %2080 = vmatprep.subr.bf16.mxu0 0
    %2081 = vmatpush1.bf16.msra.mxu0 %v1449
    %2082 = vmatprep.subr.bf16.mxu0 0
    %2083 = vmatpush1.bf16.msra.mxu0 %v1448
    %2084 = vmatprep.subr.bf16.mxu0 0
    %2085 = vmatpush1.bf16.msra.mxu0 %v1447
    %2086 = vmatprep.subr.bf16.mxu0 0
    %2087 = vmatpush1.bf16.msra.mxu0 %v1446
    %2088 = vmatprep.subr.bf16.mxu0 0
    %2089 = vmatpush1.bf16.msra.mxu0 %v1445
    %2090 = vmatprep.subr.bf16.mxu0 0
    %2091 = vmatpush1.bf16.msra.mxu0 %v1444
    %2092 = vmatprep.subr.bf16.mxu0 0
    %2093 = vmatpush2.bf16.msra.mxu0 0
    %2094 = vmatprep.subr.bf16.mxu0 0
    %2095 = vmatpush2.bf16.msra.mxu0 0
    %2096 = vmatprep.subr.bf16.mxu0 0
    %2097 = vmatpush2.bf16.msra.mxu0 0
    %2098 = vmatprep.subr.bf16.mxu0 0
    %2099 = vmatpush2.bf16.msra.mxu0 0
    %2100 = vmatprep.subr.bf16.mxu0 0
    %2101 = vmatpush2.bf16.msra.mxu0 0
    %2102 = vmatprep.subr.bf16.mxu0 0
    %2103 = vmatpush2.bf16.msra.mxu0 0
    %2104 = vmatprep.subr.bf16.mxu0 0
    %2105 = vmatpush2.bf16.msra.mxu0 0
    %2106 = vmatprep.subr.bf16.mxu0 0
    %2107 = vmatpush2.bf16.msra.mxu0 0
    %2108 = vmatprep.mubr.bf16.mxu0 0
    %2109 = vmatmul.mubr.bf16.gmra.mxu0 %v2068
    %v2110 = vpop.f32.mrf.mxu0
    %v2111 = vadd.f32 0.0, %v2110
    %v2112 = vpop.f32.mrf.mxu0
    %v2113 = vpop.f32.mrf.mxu0
    %v2114 = vadd.f32 0.0, %v2113
    %v2115 = vpop.f32.mrf.mxu0
    %2116 = vmatprep.mubr.bf16.mxu0 0
    %2117 = vmatmul.mubr.bf16.gmra.mxu0 %v2069
    %v2118 = vpop.f32.mrf.mxu0
    %v2119 = vadd.f32 0.0, %v2118
    %v2120 = vpop.f32.mrf.mxu0
    %v2121 = vpop.f32.mrf.mxu0
    %v2122 = vadd.f32 0.0, %v2121
    %v2123 = vpop.f32.mrf.mxu0
    %2124 = vmatprep.mubr.bf16.mxu0 0
    %2125 = vmatmul.mubr.bf16.gmra.mxu0 %v2070
    %v2126 = vpop.f32.mrf.mxu0
    %v2127 = vadd.f32 0.0, %v2126
    %v2128 = vpop.f32.mrf.mxu0
    %v2129 = vpop.f32.mrf.mxu0
    %v2130 = vadd.f32 0.0, %v2129
    %v2131 = vpop.f32.mrf.mxu0
    %2132 = vmatprep.mubr.bf16.mxu0 0
    %2133 = vmatmul.mubr.bf16.gmra.mxu0 %v2071
    %v2134 = vpop.f32.mrf.mxu0
    %v2135 = vadd.f32 0.0, %v2134
    %v2136 = vpop.f32.mrf.mxu0
    %v2137 = vpop.f32.mrf.mxu0
    %v2138 = vadd.f32 0.0, %v2137
    %v2139 = vpop.f32.mrf.mxu0
    %2140 = vmatprep.mubr.bf16.mxu0 0
    %2141 = vmatmul.mubr.bf16.gmra.mxu0 %v2072
    %v2142 = vpop.f32.mrf.mxu0
    %v2143 = vadd.f32 0.0, %v2142
    %v2144 = vpop.f32.mrf.mxu0
    %v2145 = vpop.f32.mrf.mxu0
    %v2146 = vadd.f32 0.0, %v2145
    %v2147 = vpop.f32.mrf.mxu0
    %2148 = vmatprep.mubr.bf16.mxu0 0
    %2149 = vmatmul.mubr.bf16.gmra.mxu0 %v2073
    %v2150 = vpop.f32.mrf.mxu0
    %v2151 = vadd.f32 0.0, %v2150
    %v2152 = vpop.f32.mrf.mxu0
    %v2153 = vpop.f32.mrf.mxu0
    %v2154 = vadd.f32 0.0, %v2153
    %v2155 = vpop.f32.mrf.mxu0
    %2156 = vmatprep.mubr.bf16.mxu0 0
    %2157 = vmatmul.mubr.bf16.gmra.mxu0 %v2074
    %v2158 = vpop.f32.mrf.mxu0
    %v2159 = vadd.f32 0.0, %v2158
    %v2160 = vpop.f32.mrf.mxu0
    %v2161 = vpop.f32.mrf.mxu0
    %v2162 = vadd.f32 0.0, %v2161
    %v2163 = vpop.f32.mrf.mxu0
    %2164 = vmatprep.mubr.bf16.mxu0 0
    %2165 = vmatmul.mubr.bf16.gmra.mxu0 %v2075
    %v2166 = vpop.f32.mrf.mxu0
    %v2167 = vadd.f32 0.0, %v2166
    %v2168 = vpop.f32.mrf.mxu0
    %v2169 = vpop.f32.mrf.mxu0
    %v2170 = vadd.f32 0.0, %v2169
    %v2171 = vpop.f32.mrf.mxu0
    %2172 = vdwg.mxu0
    %v2173 = vadd.f32 %v2052, %v2111
    %v2174 = vadd.f32 %v2053, %v2114
    %v2175 = vadd.f32 %v2054, %v2119
    %v2176 = vadd.f32 %v2055, %v2122
    %v2177 = vadd.f32 %v2056, %v2127
    %v2178 = vadd.f32 %v2057, %v2130
    %v2179 = vadd.f32 %v2058, %v2135
    %v2180 = vadd.f32 %v2059, %v2138
    %v2181 = vadd.f32 %v2060, %v2143
    %v2182 = vadd.f32 %v2061, %v2146
    %v2183 = vadd.f32 %v2062, %v2151
    %v2184 = vadd.f32 %v2063, %v2154
    %v2185 = vadd.f32 %v2064, %v2159
    %v2186 = vadd.f32 %v2065, %v2162
    %v2187 = vadd.f32 %v2066, %v2167
    %v2188 = vadd.f32 %v2067, %v2170
    %v2189 = vtanh.pop %v2173
    %v2190 = vtanh.pop %v2174
    %v2191 = vtanh.pop %v2175
    %v2192 = vtanh.pop %v2176
    %v2193 = vtanh.pop %v2177
    %v2194 = vtanh.pop %v2178
    %v2195 = vtanh.pop %v2179
    %v2196 = vtanh.pop %v2180
    %v2197 = vtanh.pop %v2181
    %v2198 = vtanh.pop %v2182
    %v2199 = vtanh.pop %v2183
    %v2200 = vtanh.pop %v2184
    %v2201 = vtanh.pop %v2185
    %v2202 = vtanh.pop %v2186
    %v2203 = vtanh.pop %v2187
    %v2204 = vtanh.pop %v2188
    %s2205 = scalar_lea.vmem [#allocation3], 640
    %v2206 = vld [vmem:[%s2205] sm:$0xff]
    %v2207 = vld [vmem:[%s2205 + $0x8] sm:$0xff]
    %v2208 = vld [vmem:[%s2205 + $0x10] sm:$0xff]
    %v2209 = vld [vmem:[%s2205 + $0x18] sm:$0xff]
    %v2210 = vld [vmem:[%s2205 + $0x20] sm:$0xff]
    %v2211 = vld [vmem:[%s2205 + $0x28] sm:$0xff]
    %v2212 = vld [vmem:[%s2205 + $0x30] sm:$0xff]
    %v2213 = vld [vmem:[%s2205 + $0x38] sm:$0xff]
    %v2214 = vld [vmem:[%s2205 + $0x40] sm:$0xff]
    %v2215 = vld [vmem:[%s2205 + $0x48] sm:$0xff]
    %v2216 = vld [vmem:[%s2205 + $0x50] sm:$0xff]
    %v2217 = vld [vmem:[%s2205 + $0x58] sm:$0xff]
    %v2218 = vld [vmem:[%s2205 + $0x60] sm:$0xff]
    %v2219 = vld [vmem:[%s2205 + $0x68] sm:$0xff]
    %v2220 = vld [vmem:[%s2205 + $0x70] sm:$0xff]
    %v2221 = vld [vmem:[%s2205 + $0x78] sm:$0xff]
    %v2222 = vpack.c.bf16 %v2190, %v2189
    %v2223 = vpack.c.bf16 %v2192, %v2191
    %v2224 = vpack.c.bf16 %v2194, %v2193
    %v2225 = vpack.c.bf16 %v2196, %v2195
    %v2226 = vpack.c.bf16 %v2198, %v2197
    %v2227 = vpack.c.bf16 %v2200, %v2199
    %v2228 = vpack.c.bf16 %v2202, %v2201
    %v2229 = vpack.c.bf16 %v2204, %v2203
    %2230 = vmatprep.subr.bf16.mxu0 0
    %2231 = vmatpush1.bf16.msra.mxu0 %v1451
    %2232 = vmatprep.subr.bf16.mxu0 0
    %2233 = vmatpush1.bf16.msra.mxu0 %v1450
    %2234 = vmatprep.subr.bf16.mxu0 0
    %2235 = vmatpush1.bf16.msra.mxu0 %v1449
    %2236 = vmatprep.subr.bf16.mxu0 0
    %2237 = vmatpush1.bf16.msra.mxu0 %v1448
    %2238 = vmatprep.subr.bf16.mxu0 0
    %2239 = vmatpush1.bf16.msra.mxu0 %v1447
    %2240 = vmatprep.subr.bf16.mxu0 0
    %2241 = vmatpush1.bf16.msra.mxu0 %v1446
    %2242 = vmatprep.subr.bf16.mxu0 0
    %2243 = vmatpush1.bf16.msra.mxu0 %v1445
    %2244 = vmatprep.subr.bf16.mxu0 0
    %2245 = vmatpush1.bf16.msra.mxu0 %v1444
    %2246 = vmatprep.subr.bf16.mxu0 0
    %2247 = vmatpush2.bf16.msra.mxu0 0
    %2248 = vmatprep.subr.bf16.mxu0 0
    %2249 = vmatpush2.bf16.msra.mxu0 0
    %2250 = vmatprep.subr.bf16.mxu0 0
    %2251 = vmatpush2.bf16.msra.mxu0 0
    %2252 = vmatprep.subr.bf16.mxu0 0
    %2253 = vmatpush2.bf16.msra.mxu0 0
    %2254 = vmatprep.subr.bf16.mxu0 0
    %2255 = vmatpush2.bf16.msra.mxu0 0
    %2256 = vmatprep.subr.bf16.mxu0 0
    %2257 = vmatpush2.bf16.msra.mxu0 0
    %2258 = vmatprep.subr.bf16.mxu0 0
    %2259 = vmatpush2.bf16.msra.mxu0 0
    %2260 = vmatprep.subr.bf16.mxu0 0
    %2261 = vmatpush2.bf16.msra.mxu0 0
    %2262 = vmatprep.mubr.bf16.mxu0 0
    %2263 = vmatmul.mubr.bf16.gmra.mxu0 %v2222
    %v2264 = vpop.f32.mrf.mxu0
    %v2265 = vadd.f32 0.0, %v2264
    %v2266 = vpop.f32.mrf.mxu0
    %v2267 = vpop.f32.mrf.mxu0
    %v2268 = vadd.f32 0.0, %v2267
    %v2269 = vpop.f32.mrf.mxu0
    %2270 = vmatprep.mubr.bf16.mxu0 0
    %2271 = vmatmul.mubr.bf16.gmra.mxu0 %v2223
    %v2272 = vpop.f32.mrf.mxu0
    %v2273 = vadd.f32 0.0, %v2272
    %v2274 = vpop.f32.mrf.mxu0
    %v2275 = vpop.f32.mrf.mxu0
    %v2276 = vadd.f32 0.0, %v2275
    %v2277 = vpop.f32.mrf.mxu0
    %2278 = vmatprep.mubr.bf16.mxu0 0
    %2279 = vmatmul.mubr.bf16.gmra.mxu0 %v2224
    %v2280 = vpop.f32.mrf.mxu0
    %v2281 = vadd.f32 0.0, %v2280
    %v2282 = vpop.f32.mrf.mxu0
    %v2283 = vpop.f32.mrf.mxu0
    %v2284 = vadd.f32 0.0, %v2283
    %v2285 = vpop.f32.mrf.mxu0
    %2286 = vmatprep.mubr.bf16.mxu0 0
    %2287 = vmatmul.mubr.bf16.gmra.mxu0 %v2225
    %v2288 = vpop.f32.mrf.mxu0
    %v2289 = vadd.f32 0.0, %v2288
    %v2290 = vpop.f32.mrf.mxu0
    %v2291 = vpop.f32.mrf.mxu0
    %v2292 = vadd.f32 0.0, %v2291
    %v2293 = vpop.f32.mrf.mxu0
    %2294 = vmatprep.mubr.bf16.mxu0 0
    %2295 = vmatmul.mubr.bf16.gmra.mxu0 %v2226
    %v2296 = vpop.f32.mrf.mxu0
    %v2297 = vadd.f32 0.0, %v2296
    %v2298 = vpop.f32.mrf.mxu0
    %v2299 = vpop.f32.mrf.mxu0
    %v2300 = vadd.f32 0.0, %v2299
    %v2301 = vpop.f32.mrf.mxu0
    %2302 = vmatprep.mubr.bf16.mxu0 0
    %2303 = vmatmul.mubr.bf16.gmra.mxu0 %v2227
    %v2304 = vpop.f32.mrf.mxu0
    %v2305 = vadd.f32 0.0, %v2304
    %v2306 = vpop.f32.mrf.mxu0
    %v2307 = vpop.f32.mrf.mxu0
    %v2308 = vadd.f32 0.0, %v2307
    %v2309 = vpop.f32.mrf.mxu0
    %2310 = vmatprep.mubr.bf16.mxu0 0
    %2311 = vmatmul.mubr.bf16.gmra.mxu0 %v2228
    %v2312 = vpop.f32.mrf.mxu0
    %v2313 = vadd.f32 0.0, %v2312
    %v2314 = vpop.f32.mrf.mxu0
    %v2315 = vpop.f32.mrf.mxu0
    %v2316 = vadd.f32 0.0, %v2315
    %v2317 = vpop.f32.mrf.mxu0
    %2318 = vmatprep.mubr.bf16.mxu0 0
    %2319 = vmatmul.mubr.bf16.gmra.mxu0 %v2229
    %v2320 = vpop.f32.mrf.mxu0
    %v2321 = vadd.f32 0.0, %v2320
    %v2322 = vpop.f32.mrf.mxu0
    %v2323 = vpop.f32.mrf.mxu0
    %v2324 = vadd.f32 0.0, %v2323
    %v2325 = vpop.f32.mrf.mxu0
    %2326 = vdwg.mxu0
    %v2327 = vadd.f32 %v2206, %v2265
    %v2328 = vadd.f32 %v2207, %v2268
    %v2329 = vadd.f32 %v2208, %v2273
    %v2330 = vadd.f32 %v2209, %v2276
    %v2331 = vadd.f32 %v2210, %v2281
    %v2332 = vadd.f32 %v2211, %v2284
    %v2333 = vadd.f32 %v2212, %v2289
    %v2334 = vadd.f32 %v2213, %v2292
    %v2335 = vadd.f32 %v2214, %v2297
    %v2336 = vadd.f32 %v2215, %v2300
    %v2337 = vadd.f32 %v2216, %v2305
    %v2338 = vadd.f32 %v2217, %v2308
    %v2339 = vadd.f32 %v2218, %v2313
    %v2340 = vadd.f32 %v2219, %v2316
    %v2341 = vadd.f32 %v2220, %v2321
    %v2342 = vadd.f32 %v2221, %v2324
    %v2343 = vtanh.pop %v2327
    %v2344 = vtanh.pop %v2328
    %v2345 = vtanh.pop %v2329
    %v2346 = vtanh.pop %v2330
    %v2347 = vtanh.pop %v2331
    %v2348 = vtanh.pop %v2332
    %v2349 = vtanh.pop %v2333
    %v2350 = vtanh.pop %v2334
    %v2351 = vtanh.pop %v2335
    %v2352 = vtanh.pop %v2336
    %v2353 = vtanh.pop %v2337
    %v2354 = vtanh.pop %v2338
    %v2355 = vtanh.pop %v2339
    %v2356 = vtanh.pop %v2340
    %v2357 = vtanh.pop %v2341
    %v2358 = vtanh.pop %v2342
    %s2359 = scalar_lea.vmem [#allocation3], 768
    %v2360 = vld [vmem:[%s2359] sm:$0xff]
    %v2361 = vld [vmem:[%s2359 + $0x8] sm:$0xff]
    %v2362 = vld [vmem:[%s2359 + $0x10] sm:$0xff]
    %v2363 = vld [vmem:[%s2359 + $0x18] sm:$0xff]
    %v2364 = vld [vmem:[%s2359 + $0x20] sm:$0xff]
    %v2365 = vld [vmem:[%s2359 + $0x28] sm:$0xff]
    %v2366 = vld [vmem:[%s2359 + $0x30] sm:$0xff]
    %v2367 = vld [vmem:[%s2359 + $0x38] sm:$0xff]
    %v2368 = vld [vmem:[%s2359 + $0x40] sm:$0xff]
    %v2369 = vld [vmem:[%s2359 + $0x48] sm:$0xff]
    %v2370 = vld [vmem:[%s2359 + $0x50] sm:$0xff]
    %v2371 = vld [vmem:[%s2359 + $0x58] sm:$0xff]
    %v2372 = vld [vmem:[%s2359 + $0x60] sm:$0xff]
    %v2373 = vld [vmem:[%s2359 + $0x68] sm:$0xff]
    %v2374 = vld [vmem:[%s2359 + $0x70] sm:$0xff]
    %v2375 = vld [vmem:[%s2359 + $0x78] sm:$0xff]
    %v2376 = vpack.c.bf16 %v2344, %v2343
    %v2377 = vpack.c.bf16 %v2346, %v2345
    %v2378 = vpack.c.bf16 %v2348, %v2347
    %v2379 = vpack.c.bf16 %v2350, %v2349
    %v2380 = vpack.c.bf16 %v2352, %v2351
    %v2381 = vpack.c.bf16 %v2354, %v2353
    %v2382 = vpack.c.bf16 %v2356, %v2355
    %v2383 = vpack.c.bf16 %v2358, %v2357
    %2384 = vmatprep.subr.bf16.mxu0 0
    %2385 = vmatpush1.bf16.msra.mxu0 %v1451
    %2386 = vmatprep.subr.bf16.mxu0 0
    %2387 = vmatpush1.bf16.msra.mxu0 %v1450
    %2388 = vmatprep.subr.bf16.mxu0 0
    %2389 = vmatpush1.bf16.msra.mxu0 %v1449
    %2390 = vmatprep.subr.bf16.mxu0 0
    %2391 = vmatpush1.bf16.msra.mxu0 %v1448
    %2392 = vmatprep.subr.bf16.mxu0 0
    %2393 = vmatpush1.bf16.msra.mxu0 %v1447
    %2394 = vmatprep.subr.bf16.mxu0 0
    %2395 = vmatpush1.bf16.msra.mxu0 %v1446
    %2396 = vmatprep.subr.bf16.mxu0 0
    %2397 = vmatpush1.bf16.msra.mxu0 %v1445
    %2398 = vmatprep.subr.bf16.mxu0 0
    %2399 = vmatpush1.bf16.msra.mxu0 %v1444
    %2400 = vmatprep.subr.bf16.mxu0 0
    %2401 = vmatpush2.bf16.msra.mxu0 0
    %2402 = vmatprep.subr.bf16.mxu0 0
    %2403 = vmatpush2.bf16.msra.mxu0 0
    %2404 = vmatprep.subr.bf16.mxu0 0
    %2405 = vmatpush2.bf16.msra.mxu0 0
    %2406 = vmatprep.subr.bf16.mxu0 0
    %2407 = vmatpush2.bf16.msra.mxu0 0
    %2408 = vmatprep.subr.bf16.mxu0 0
    %2409 = vmatpush2.bf16.msra.mxu0 0
    %2410 = vmatprep.subr.bf16.mxu0 0
    %2411 = vmatpush2.bf16.msra.mxu0 0
    %2412 = vmatprep.subr.bf16.mxu0 0
    %2413 = vmatpush2.bf16.msra.mxu0 0
    %2414 = vmatprep.subr.bf16.mxu0 0
    %2415 = vmatpush2.bf16.msra.mxu0 0
    %2416 = vmatprep.mubr.bf16.mxu0 0
    %2417 = vmatmul.mubr.bf16.gmra.mxu0 %v2376
    %v2418 = vpop.f32.mrf.mxu0
    %v2419 = vadd.f32 0.0, %v2418
    %v2420 = vpop.f32.mrf.mxu0
    %v2421 = vpop.f32.mrf.mxu0
    %v2422 = vadd.f32 0.0, %v2421
    %v2423 = vpop.f32.mrf.mxu0
    %2424 = vmatprep.mubr.bf16.mxu0 0
    %2425 = vmatmul.mubr.bf16.gmra.mxu0 %v2377
    %v2426 = vpop.f32.mrf.mxu0
    %v2427 = vadd.f32 0.0, %v2426
    %v2428 = vpop.f32.mrf.mxu0
    %v2429 = vpop.f32.mrf.mxu0
    %v2430 = vadd.f32 0.0, %v2429
    %v2431 = vpop.f32.mrf.mxu0
    %2432 = vmatprep.mubr.bf16.mxu0 0
    %2433 = vmatmul.mubr.bf16.gmra.mxu0 %v2378
    %v2434 = vpop.f32.mrf.mxu0
    %v2435 = vadd.f32 0.0, %v2434
    %v2436 = vpop.f32.mrf.mxu0
    %v2437 = vpop.f32.mrf.mxu0
    %v2438 = vadd.f32 0.0, %v2437
    %v2439 = vpop.f32.mrf.mxu0
    %2440 = vmatprep.mubr.bf16.mxu0 0
    %2441 = vmatmul.mubr.bf16.gmra.mxu0 %v2379
    %v2442 = vpop.f32.mrf.mxu0
    %v2443 = vadd.f32 0.0, %v2442
    %v2444 = vpop.f32.mrf.mxu0
    %v2445 = vpop.f32.mrf.mxu0
    %v2446 = vadd.f32 0.0, %v2445
    %v2447 = vpop.f32.mrf.mxu0
    %2448 = vmatprep.mubr.bf16.mxu0 0
    %2449 = vmatmul.mubr.bf16.gmra.mxu0 %v2380
    %v2450 = vpop.f32.mrf.mxu0
    %v2451 = vadd.f32 0.0, %v2450
    %v2452 = vpop.f32.mrf.mxu0
    %v2453 = vpop.f32.mrf.mxu0
    %v2454 = vadd.f32 0.0, %v2453
    %v2455 = vpop.f32.mrf.mxu0
    %2456 = vmatprep.mubr.bf16.mxu0 0
    %2457 = vmatmul.mubr.bf16.gmra.mxu0 %v2381
    %v2458 = vpop.f32.mrf.mxu0
    %v2459 = vadd.f32 0.0, %v2458
    %v2460 = vpop.f32.mrf.mxu0
    %v2461 = vpop.f32.mrf.mxu0
    %v2462 = vadd.f32 0.0, %v2461
    %v2463 = vpop.f32.mrf.mxu0
    %2464 = vmatprep.mubr.bf16.mxu0 0
    %2465 = vmatmul.mubr.bf16.gmra.mxu0 %v2382
    %v2466 = vpop.f32.mrf.mxu0
    %v2467 = vadd.f32 0.0, %v2466
    %v2468 = vpop.f32.mrf.mxu0
    %v2469 = vpop.f32.mrf.mxu0
    %v2470 = vadd.f32 0.0, %v2469
    %v2471 = vpop.f32.mrf.mxu0
    %2472 = vmatprep.mubr.bf16.mxu0 0
    %2473 = vmatmul.mubr.bf16.gmra.mxu0 %v2383
    %v2474 = vpop.f32.mrf.mxu0
    %v2475 = vadd.f32 0.0, %v2474
    %v2476 = vpop.f32.mrf.mxu0
    %v2477 = vpop.f32.mrf.mxu0
    %v2478 = vadd.f32 0.0, %v2477
    %v2479 = vpop.f32.mrf.mxu0
    %2480 = vdwg.mxu0
    %v2481 = vadd.f32 %v2360, %v2419
    %v2482 = vadd.f32 %v2361, %v2422
    %v2483 = vadd.f32 %v2362, %v2427
    %v2484 = vadd.f32 %v2363, %v2430
    %v2485 = vadd.f32 %v2364, %v2435
    %v2486 = vadd.f32 %v2365, %v2438
    %v2487 = vadd.f32 %v2366, %v2443
    %v2488 = vadd.f32 %v2367, %v2446
    %v2489 = vadd.f32 %v2368, %v2451
    %v2490 = vadd.f32 %v2369, %v2454
    %v2491 = vadd.f32 %v2370, %v2459
    %v2492 = vadd.f32 %v2371, %v2462
    %v2493 = vadd.f32 %v2372, %v2467
    %v2494 = vadd.f32 %v2373, %v2470
    %v2495 = vadd.f32 %v2374, %v2475
    %v2496 = vadd.f32 %v2375, %v2478
    %v2497 = vtanh.pop %v2481
    %v2498 = vtanh.pop %v2482
    %v2499 = vtanh.pop %v2483
    %v2500 = vtanh.pop %v2484
    %v2501 = vtanh.pop %v2485
    %v2502 = vtanh.pop %v2486
    %v2503 = vtanh.pop %v2487
    %v2504 = vtanh.pop %v2488
    %v2505 = vtanh.pop %v2489
    %v2506 = vtanh.pop %v2490
    %v2507 = vtanh.pop %v2491
    %v2508 = vtanh.pop %v2492
    %v2509 = vtanh.pop %v2493
    %v2510 = vtanh.pop %v2494
    %v2511 = vtanh.pop %v2495
    %v2512 = vtanh.pop %v2496
    %s2513 = scalar_lea.vmem [#allocation3], 896
    %v2514 = vld [vmem:[%s2513] sm:$0xff]
    %v2515 = vld [vmem:[%s2513 + $0x8] sm:$0xff]
    %v2516 = vld [vmem:[%s2513 + $0x10] sm:$0xff]
    %v2517 = vld [vmem:[%s2513 + $0x18] sm:$0xff]
    %v2518 = vld [vmem:[%s2513 + $0x20] sm:$0xff]
    %v2519 = vld [vmem:[%s2513 + $0x28] sm:$0xff]
    %v2520 = vld [vmem:[%s2513 + $0x30] sm:$0xff]
    %v2521 = vld [vmem:[%s2513 + $0x38] sm:$0xff]
    %v2522 = vld [vmem:[%s2513 + $0x40] sm:$0xff]
    %v2523 = vld [vmem:[%s2513 + $0x48] sm:$0xff]
    %v2524 = vld [vmem:[%s2513 + $0x50] sm:$0xff]
    %v2525 = vld [vmem:[%s2513 + $0x58] sm:$0xff]
    %v2526 = vld [vmem:[%s2513 + $0x60] sm:$0xff]
    %v2527 = vld [vmem:[%s2513 + $0x68] sm:$0xff]
    %v2528 = vld [vmem:[%s2513 + $0x70] sm:$0xff]
    %v2529 = vld [vmem:[%s2513 + $0x78] sm:$0xff]
    %v2530 = vpack.c.bf16 %v2498, %v2497
    %v2531 = vpack.c.bf16 %v2500, %v2499
    %v2532 = vpack.c.bf16 %v2502, %v2501
    %v2533 = vpack.c.bf16 %v2504, %v2503
    %v2534 = vpack.c.bf16 %v2506, %v2505
    %v2535 = vpack.c.bf16 %v2508, %v2507
    %v2536 = vpack.c.bf16 %v2510, %v2509
    %v2537 = vpack.c.bf16 %v2512, %v2511
    %2538 = vmatprep.subr.bf16.mxu0 0
    %2539 = vmatpush1.bf16.msra.mxu0 %v1451
    %2540 = vmatprep.subr.bf16.mxu0 0
    %2541 = vmatpush1.bf16.msra.mxu0 %v1450
    %2542 = vmatprep.subr.bf16.mxu0 0
    %2543 = vmatpush1.bf16.msra.mxu0 %v1449
    %2544 = vmatprep.subr.bf16.mxu0 0
    %2545 = vmatpush1.bf16.msra.mxu0 %v1448
    %2546 = vmatprep.subr.bf16.mxu0 0
    %2547 = vmatpush1.bf16.msra.mxu0 %v1447
    %2548 = vmatprep.subr.bf16.mxu0 0
    %2549 = vmatpush1.bf16.msra.mxu0 %v1446
    %2550 = vmatprep.subr.bf16.mxu0 0
    %2551 = vmatpush1.bf16.msra.mxu0 %v1445
    %2552 = vmatprep.subr.bf16.mxu0 0
    %2553 = vmatpush1.bf16.msra.mxu0 %v1444
    %2554 = vmatprep.subr.bf16.mxu0 0
    %2555 = vmatpush2.bf16.msra.mxu0 0
    %2556 = vmatprep.subr.bf16.mxu0 0
    %2557 = vmatpush2.bf16.msra.mxu0 0
    %2558 = vmatprep.subr.bf16.mxu0 0
    %2559 = vmatpush2.bf16.msra.mxu0 0
    %2560 = vmatprep.subr.bf16.mxu0 0
    %2561 = vmatpush2.bf16.msra.mxu0 0
    %2562 = vmatprep.subr.bf16.mxu0 0
    %2563 = vmatpush2.bf16.msra.mxu0 0
    %2564 = vmatprep.subr.bf16.mxu0 0
    %2565 = vmatpush2.bf16.msra.mxu0 0
    %2566 = vmatprep.subr.bf16.mxu0 0
    %2567 = vmatpush2.bf16.msra.mxu0 0
    %2568 = vmatprep.subr.bf16.mxu0 0
    %2569 = vmatpush2.bf16.msra.mxu0 0
    %2570 = vmatprep.mubr.bf16.mxu0 0
    %2571 = vmatmul.mubr.bf16.gmra.mxu0 %v2530
    %v2572 = vpop.f32.mrf.mxu0
    %v2573 = vadd.f32 0.0, %v2572
    %v2574 = vpop.f32.mrf.mxu0
    %v2575 = vpop.f32.mrf.mxu0
    %v2576 = vadd.f32 0.0, %v2575
    %v2577 = vpop.f32.mrf.mxu0
    %2578 = vmatprep.mubr.bf16.mxu0 0
    %2579 = vmatmul.mubr.bf16.gmra.mxu0 %v2531
    %v2580 = vpop.f32.mrf.mxu0
    %v2581 = vadd.f32 0.0, %v2580
    %v2582 = vpop.f32.mrf.mxu0
    %v2583 = vpop.f32.mrf.mxu0
    %v2584 = vadd.f32 0.0, %v2583
    %v2585 = vpop.f32.mrf.mxu0
    %2586 = vmatprep.mubr.bf16.mxu0 0
    %2587 = vmatmul.mubr.bf16.gmra.mxu0 %v2532
    %v2588 = vpop.f32.mrf.mxu0
    %v2589 = vadd.f32 0.0, %v2588
    %v2590 = vpop.f32.mrf.mxu0
    %v2591 = vpop.f32.mrf.mxu0
    %v2592 = vadd.f32 0.0, %v2591
    %v2593 = vpop.f32.mrf.mxu0
    %2594 = vmatprep.mubr.bf16.mxu0 0
    %2595 = vmatmul.mubr.bf16.gmra.mxu0 %v2533
    %v2596 = vpop.f32.mrf.mxu0
    %v2597 = vadd.f32 0.0, %v2596
    %v2598 = vpop.f32.mrf.mxu0
    %v2599 = vpop.f32.mrf.mxu0
    %v2600 = vadd.f32 0.0, %v2599
    %v2601 = vpop.f32.mrf.mxu0
    %2602 = vmatprep.mubr.bf16.mxu0 0
    %2603 = vmatmul.mubr.bf16.gmra.mxu0 %v2534
    %v2604 = vpop.f32.mrf.mxu0
    %v2605 = vadd.f32 0.0, %v2604
    %v2606 = vpop.f32.mrf.mxu0
    %v2607 = vpop.f32.mrf.mxu0
    %v2608 = vadd.f32 0.0, %v2607
    %v2609 = vpop.f32.mrf.mxu0
    %2610 = vmatprep.mubr.bf16.mxu0 0
    %2611 = vmatmul.mubr.bf16.gmra.mxu0 %v2535
    %v2612 = vpop.f32.mrf.mxu0
    %v2613 = vadd.f32 0.0, %v2612
    %v2614 = vpop.f32.mrf.mxu0
    %v2615 = vpop.f32.mrf.mxu0
    %v2616 = vadd.f32 0.0, %v2615
    %v2617 = vpop.f32.mrf.mxu0
    %2618 = vmatprep.mubr.bf16.mxu0 0
    %2619 = vmatmul.mubr.bf16.gmra.mxu0 %v2536
    %v2620 = vpop.f32.mrf.mxu0
    %v2621 = vadd.f32 0.0, %v2620
    %v2622 = vpop.f32.mrf.mxu0
    %v2623 = vpop.f32.mrf.mxu0
    %v2624 = vadd.f32 0.0, %v2623
    %v2625 = vpop.f32.mrf.mxu0
    %2626 = vmatprep.mubr.bf16.mxu0 0
    %2627 = vmatmul.mubr.bf16.gmra.mxu0 %v2537
    %v2628 = vpop.f32.mrf.mxu0
    %v2629 = vadd.f32 0.0, %v2628
    %v2630 = vpop.f32.mrf.mxu0
    %v2631 = vpop.f32.mrf.mxu0
    %v2632 = vadd.f32 0.0, %v2631
    %v2633 = vpop.f32.mrf.mxu0
    %2634 = vdwg.mxu0
    %v2635 = vadd.f32 %v2514, %v2573
    %v2636 = vadd.f32 %v2515, %v2576
    %v2637 = vadd.f32 %v2516, %v2581
    %v2638 = vadd.f32 %v2517, %v2584
    %v2639 = vadd.f32 %v2518, %v2589
    %v2640 = vadd.f32 %v2519, %v2592
    %v2641 = vadd.f32 %v2520, %v2597
    %v2642 = vadd.f32 %v2521, %v2600
    %v2643 = vadd.f32 %v2522, %v2605
    %v2644 = vadd.f32 %v2523, %v2608
    %v2645 = vadd.f32 %v2524, %v2613
    %v2646 = vadd.f32 %v2525, %v2616
    %v2647 = vadd.f32 %v2526, %v2621
    %v2648 = vadd.f32 %v2527, %v2624
    %v2649 = vadd.f32 %v2528, %v2629
    %v2650 = vadd.f32 %v2529, %v2632
    %v2651 = vtanh.pop %v2635
    %v2652 = vtanh.pop %v2636
    %v2653 = vtanh.pop %v2637
    %v2654 = vtanh.pop %v2638
    %v2655 = vtanh.pop %v2639
    %v2656 = vtanh.pop %v2640
    %v2657 = vtanh.pop %v2641
    %v2658 = vtanh.pop %v2642
    %v2659 = vtanh.pop %v2643
    %v2660 = vtanh.pop %v2644
    %v2661 = vtanh.pop %v2645
    %v2662 = vtanh.pop %v2646
    %v2663 = vtanh.pop %v2647
    %v2664 = vtanh.pop %v2648
    %v2665 = vtanh.pop %v2649
    %v2666 = vtanh.pop %v2650
    %2667 = vst [vmem:[#allocation2] sm:$0xff] %v2651
    %2668 = vst [vmem:[#allocation2 + $0x8] sm:$0xff] %v2652
    %2669 = vst [vmem:[#allocation2 + $0x10] sm:$0xff] %v2653
    %2670 = vst [vmem:[#allocation2 + $0x18] sm:$0xff] %v2654
    %2671 = vst [vmem:[#allocation2 + $0x20] sm:$0xff] %v2655
    %2672 = vst [vmem:[#allocation2 + $0x28] sm:$0xff] %v2656
    %2673 = vst [vmem:[#allocation2 + $0x30] sm:$0xff] %v2657
    %2674 = vst [vmem:[#allocation2 + $0x38] sm:$0xff] %v2658
    %2675 = vst [vmem:[#allocation2 + $0x40] sm:$0xff] %v2659
    %2676 = vst [vmem:[#allocation2 + $0x48] sm:$0xff] %v2660
    %2677 = vst [vmem:[#allocation2 + $0x50] sm:$0xff] %v2661
    %2678 = vst [vmem:[#allocation2 + $0x58] sm:$0xff] %v2662
    %2679 = vst [vmem:[#allocation2 + $0x60] sm:$0xff] %v2663
    %2680 = vst [vmem:[#allocation2 + $0x68] sm:$0xff] %v2664
    %2681 = vst [vmem:[#allocation2 + $0x70] sm:$0xff] %v2665
    %2682 = vst [vmem:[#allocation2 + $0x78] sm:$0xff] %v2666
    // Predicated region
    $region46: #{tpu_custom_call.1} parent=1 // pred_check
      %p2683 = pneg %p80
    $region47: #{tpu_custom_call.1} parent=1 // pred_check_branch
      %2685 = sbr.rel (%p2683) target = $region49
    $region48: #{tpu_custom_call.1} parent=1 // pred_region
      %v2686 = vpack.c.bf16 %v2652, %v2651
      %v2687 = vpack.c.bf16 %v2654, %v2653
      %v2688 = vpack.c.bf16 %v2656, %v2655
      %v2689 = vpack.c.bf16 %v2658, %v2657
      %v2690 = vpack.c.bf16 %v2660, %v2659
      %v2691 = vpack.c.bf16 %v2662, %v2661
      %v2692 = vpack.c.bf16 %v2664, %v2663
      %v2693 = vpack.c.bf16 %v2666, %v2665
      %v2694 = vld [vmem:[#allocation10] sm:$0xf]
      %v2695 = vld [vmem:[#allocation10 + $0x4] sm:$0xf]
      %v2696 = vld [vmem:[#allocation10 + $0x8] sm:$0xf]
      %v2697 = vld [vmem:[#allocation10 + $0xc] sm:$0xf]
      %v2698 = vld [vmem:[#allocation10 + $0x10] sm:$0xf]
      %v2699 = vld [vmem:[#allocation10 + $0x14] sm:$0xf]
      %v2700 = vld [vmem:[#allocation10 + $0x18] sm:$0xf]
      %v2701 = vld [vmem:[#allocation10 + $0x1c] sm:$0xf]
      %v2702 = vld [vmem:[#allocation10 + $0x20] sm:$0xf]
      %v2703 = vld [vmem:[#allocation10 + $0x24] sm:$0xf]
      %v2704 = vld [vmem:[#allocation10 + $0x28] sm:$0xf]
      %v2705 = vld [vmem:[#allocation10 + $0x2c] sm:$0xf]
      %v2706 = vld [vmem:[#allocation10 + $0x30] sm:$0xf]
      %v2707 = vld [vmem:[#allocation10 + $0x34] sm:$0xf]
      %v2708 = vld [vmem:[#allocation10 + $0x38] sm:$0xf]
      %v2709 = vld [vmem:[#allocation10 + $0x3c] sm:$0xf]
      %v2710 = vld [vmem:[%s5] sm:$0x1]
      %v2712 = vlaneseq
      %v2713 = vshrl.u32 %v2712, 7
      %v2714 = vsub.s32 0, %v2713
      %v2715 = vrot.slane %v2710, %v2714
      %v2733 = vunpack.c.l.b16 %v2694
      %v2734 = vunpack.c.l.b16 %v2695
      %v2735 = vunpack.c.l.b16 %v2696
      %v2736 = vunpack.c.l.b16 %v2697
      %v2737 = vunpack.c.l.b16 %v2698
      %v2738 = vunpack.c.l.b16 %v2699
      %v2739 = vunpack.c.l.b16 %v2700
      %v2740 = vunpack.c.l.b16 %v2701
      %v2741 = vunpack.c.l.b16 %v2702
      %v2742 = vunpack.c.l.b16 %v2703
      %v2743 = vunpack.c.l.b16 %v2704
      %v2744 = vunpack.c.l.b16 %v2705
      %v2745 = vunpack.c.l.b16 %v2706
      %v2746 = vunpack.c.l.b16 %v2707
      %v2747 = vunpack.c.l.b16 %v2708
      %v2748 = vunpack.c.l.b16 %v2709
      %v2749 = vpack.c.b16 %v2734, %v2733
      %v2750 = vpack.c.b16 %v2736, %v2735
      %v2751 = vpack.c.b16 %v2738, %v2737
      %v2752 = vpack.c.b16 %v2740, %v2739
      %v2753 = vpack.c.b16 %v2742, %v2741
      %v2754 = vpack.c.b16 %v2744, %v2743
      %v2755 = vpack.c.b16 %v2746, %v2745
      %v2756 = vpack.c.b16 %v2748, %v2747
      %2765 = vmatprep.subr.bf16.mxu0 0
      %2766 = vmatpush1.bf16.msra.mxu0 %v2756
      %2767 = vmatprep.subr.bf16.mxu0 0
      %2768 = vmatpush1.bf16.msra.mxu0 %v2755
      %2769 = vmatprep.subr.bf16.mxu0 0
      %2770 = vmatpush1.bf16.msra.mxu0 %v2754
      %2771 = vmatprep.subr.bf16.mxu0 0
      %2772 = vmatpush1.bf16.msra.mxu0 %v2753
      %2773 = vmatprep.subr.bf16.mxu0 0
      %2774 = vmatpush1.bf16.msra.mxu0 %v2752
      %2775 = vmatprep.subr.bf16.mxu0 0
      %2776 = vmatpush1.bf16.msra.mxu0 %v2751
      %2777 = vmatprep.subr.bf16.mxu0 0
      %2778 = vmatpush1.bf16.msra.mxu0 %v2750
      %2779 = vmatprep.subr.bf16.mxu0 0
      %2780 = vmatpush1.bf16.msra.mxu0 %v2749
      %2781 = vmatprep.subr.bf16.mxu0 0
      %2782 = vmatpush2.bf16.msra.mxu0 0
      %2783 = vmatprep.subr.bf16.mxu0 0
      %2784 = vmatpush2.bf16.msra.mxu0 0
      %2785 = vmatprep.subr.bf16.mxu0 0
      %2786 = vmatpush2.bf16.msra.mxu0 0
      %2787 = vmatprep.subr.bf16.mxu0 0
      %2788 = vmatpush2.bf16.msra.mxu0 0
      %2789 = vmatprep.subr.bf16.mxu0 0
      %2790 = vmatpush2.bf16.msra.mxu0 0
      %2791 = vmatprep.subr.bf16.mxu0 0
      %2792 = vmatpush2.bf16.msra.mxu0 0
      %2793 = vmatprep.subr.bf16.mxu0 0
      %2794 = vmatpush2.bf16.msra.mxu0 0
      %2795 = vmatprep.subr.bf16.mxu0 0
      %2796 = vmatpush2.bf16.msra.mxu0 0
      %2797 = vmatprep.mubr.bf16.mxu0 0
      %2798 = vmatmul.mubr.bf16.gmra.mxu0 %v2686
      %v2799 = vpop.f32.mrf.mxu0
      %v2800 = vadd.f32 %v2715, %v2799
      %v2801 = vpop.f32.mrf.mxu0
      %v2802 = vpop.f32.mrf.mxu0
      %v2803 = vadd.f32 %v2715, %v2802
      %v2804 = vpop.f32.mrf.mxu0
      %2805 = vmatprep.mubr.bf16.mxu0 0
      %2806 = vmatmul.mubr.bf16.gmra.mxu0 %v2687
      %v2807 = vpop.f32.mrf.mxu0
      %v2808 = vadd.f32 %v2715, %v2807
      %v2809 = vpop.f32.mrf.mxu0
      %v2810 = vpop.f32.mrf.mxu0
      %v2811 = vadd.f32 %v2715, %v2810
      %v2812 = vpop.f32.mrf.mxu0
      %2813 = vmatprep.mubr.bf16.mxu0 0
      %2814 = vmatmul.mubr.bf16.gmra.mxu0 %v2688
      %v2815 = vpop.f32.mrf.mxu0
      %v2816 = vadd.f32 %v2715, %v2815
      %v2817 = vpop.f32.mrf.mxu0
      %v2818 = vpop.f32.mrf.mxu0
      %v2819 = vadd.f32 %v2715, %v2818
      %v2820 = vpop.f32.mrf.mxu0
      %2821 = vmatprep.mubr.bf16.mxu0 0
      %2822 = vmatmul.mubr.bf16.gmra.mxu0 %v2689
      %v2823 = vpop.f32.mrf.mxu0
      %v2824 = vadd.f32 %v2715, %v2823
      %v2825 = vpop.f32.mrf.mxu0
      %v2826 = vpop.f32.mrf.mxu0
      %v2827 = vadd.f32 %v2715, %v2826
      %v2828 = vpop.f32.mrf.mxu0
      %2829 = vmatprep.mubr.bf16.mxu0 0
      %2830 = vmatmul.mubr.bf16.gmra.mxu0 %v2690
      %v2831 = vpop.f32.mrf.mxu0
      %v2832 = vadd.f32 %v2715, %v2831
      %v2833 = vpop.f32.mrf.mxu0
      %v2834 = vpop.f32.mrf.mxu0
      %v2835 = vadd.f32 %v2715, %v2834
      %v2836 = vpop.f32.mrf.mxu0
      %2837 = vmatprep.mubr.bf16.mxu0 0
      %2838 = vmatmul.mubr.bf16.gmra.mxu0 %v2691
      %v2839 = vpop.f32.mrf.mxu0
      %v2840 = vadd.f32 %v2715, %v2839
      %v2841 = vpop.f32.mrf.mxu0
      %v2842 = vpop.f32.mrf.mxu0
      %v2843 = vadd.f32 %v2715, %v2842
      %v2844 = vpop.f32.mrf.mxu0
      %2845 = vmatprep.mubr.bf16.mxu0 0
      %2846 = vmatmul.mubr.bf16.gmra.mxu0 %v2692
      %v2847 = vpop.f32.mrf.mxu0
      %v2848 = vadd.f32 %v2715, %v2847
      %v2849 = vpop.f32.mrf.mxu0
      %v2850 = vpop.f32.mrf.mxu0
      %v2851 = vadd.f32 %v2715, %v2850
      %v2852 = vpop.f32.mrf.mxu0
      %2853 = vmatprep.mubr.bf16.mxu0 0
      %2854 = vmatmul.mubr.bf16.gmra.mxu0 %v2693
      %v2855 = vpop.f32.mrf.mxu0
      %v2856 = vadd.f32 %v2715, %v2855
      %v2857 = vpop.f32.mrf.mxu0
      %v2858 = vpop.f32.mrf.mxu0
      %v2859 = vadd.f32 %v2715, %v2858
      %v2860 = vpop.f32.mrf.mxu0
      %2861 = vdwg.mxu0
      %2862 = vst [vmem:[#allocation12] sm:$0xff] %v2800
      %2863 = vst [vmem:[#allocation12 + $0x8] sm:$0xff] %v2803
      %2864 = vst [vmem:[#allocation12 + $0x10] sm:$0xff] %v2808
      %2865 = vst [vmem:[#allocation12 + $0x18] sm:$0xff] %v2811
      %2866 = vst [vmem:[#allocation12 + $0x20] sm:$0xff] %v2816
      %2867 = vst [vmem:[#allocation12 + $0x28] sm:$0xff] %v2819
      %2868 = vst [vmem:[#allocation12 + $0x30] sm:$0xff] %v2824
      %2869 = vst [vmem:[#allocation12 + $0x38] sm:$0xff] %v2827
      %2870 = vst [vmem:[#allocation12 + $0x40] sm:$0xff] %v2832
      %2871 = vst [vmem:[#allocation12 + $0x48] sm:$0xff] %v2835
      %2872 = vst [vmem:[#allocation12 + $0x50] sm:$0xff] %v2840
      %2873 = vst [vmem:[#allocation12 + $0x58] sm:$0xff] %v2843
      %2874 = vst [vmem:[#allocation12 + $0x60] sm:$0xff] %v2848
      %2875 = vst [vmem:[#allocation12 + $0x68] sm:$0xff] %v2851
      %2876 = vst [vmem:[#allocation12 + $0x70] sm:$0xff] %v2856
      %2877 = vst [vmem:[#allocation12 + $0x78] sm:$0xff] %v2859
    $region49: #{tpu_custom_call.1} parent=1 // pred_fallthru
      _
    // Predicated region
    $region50: #{tpu_custom_call.1} parent=1 // pred_check
      _
    $region51: #{tpu_custom_call.1} parent=1 // pred_check_branch
      %2879 = sbr.rel (0) target = $region53
    $region52: #{tpu_custom_call.1} parent=1 // pred_region
      %s2881 = ssub.s32 2048, 2048
      %2882 = vsyncadd [#allocation6], %s2881
      %s2883 = sshll.u32 [#allocation12], 4
      %s2884 = int_to_ptr.vmem [resolvable:$true] %s2883
      %2889 = dma.vmem_to_hbm [thread:$0]  %s2884, 2048, %s6, [#allocation6], 128, 128, 8
    $region53: #{tpu_custom_call.1} parent=1 // pred_fallthru
      _
    // Predicated region
    $region54: #{tpu_custom_call.1} parent=1 // pred_check
      _
    $region55: #{tpu_custom_call.1} parent=1 // pred_check_branch
      %2891 = sbr.rel (0) target = $region57
    $region56: #{tpu_custom_call.1} parent=1 // pred_region
      %2892 = dma.done [#allocation6], 2048
    $region57: #{tpu_custom_call.1} parent=1 // pred_fallthru
      _
    %2893 = vsyncpa [#allocation5], 1
    %2894 = vsyncpa [#allocation8], 1
    %2895 = vsyncpa [#allocation11], 1
    %2896 = vsyncpa [#allocation6], 1

</llo_original>
